<compile_context>
chip_gen: v6e
topology: v6e:2x2x1
jax: 0.10.0
libtpu: 0.0.40
codegen_flags: <defaults>
</compile_context>

<pallas_src>
import functools

import jax
import jax.numpy as jnp
from jax import lax
from jax.experimental import pallas as pl
from jax.experimental.pallas import tpu as pltpu

EPS = 1e-5
LANE = 128          # lane width: pad Cout to this for lane-dense stores


def _round_up(x, m):
    return (x + m - 1) // m * m


def _pad_vec(v, n):
    return jnp.pad(v, (0, n - v.shape[0]))


def _choose_tile_m(m, target=512):
    """Largest row tile <= target that divides m (multiple of 8), else full."""
    if m <= target:
        return m
    t = target - (target % 8)
    while t >= 8:
        if m % t == 0:
            return t
        t -= 8
    return m


# ----------------------------------------------------------------------------
# JAX-side layout plumbing (no data blow-up): phase decomposition of the padded
# NHWC input.  phases[n, p*s+q] == xpad[n, p::s, q::s]; every conv tap is then a
# contiguous slice of one phase, so no strided access is needed in-kernel.
# ----------------------------------------------------------------------------
def _make_phases(xpad_nhwc, s):
    n, hp, wp, c = xpad_nhwc.shape
    ph = -(-hp // s)
    pw = -(-wp // s)
    if ph * s != hp or pw * s != wp:
        xpad_nhwc = jnp.pad(
            xpad_nhwc, ((0, 0), (0, ph * s - hp), (0, pw * s - wp), (0, 0)))
    x6 = xpad_nhwc.reshape(n, ph, s, pw, s, c)
    return jnp.transpose(x6, (0, 2, 4, 1, 3, 5)).reshape(n, s * s, ph, pw, c)


def _conv_w_to_tap_mat(w_oihw, cin_pad, cout_pad):
    """(Cout, Cin, KH, KW) -> (KH*KW, cin_pad, cout_pad); tap t = di*KW + dj."""
    cout, cin, kh, kw = w_oihw.shape
    w = jnp.transpose(w_oihw, (2, 3, 1, 0)).reshape(kh * kw, cin, cout)
    return jnp.pad(w, ((0, 0), (0, cin_pad - cin), (0, cout_pad - cout)))


# ----------------------------------------------------------------------------
# Kernel 1: 3x3 conv (as 9 accumulated MXU matmuls over phase slabs)
#           + per-channel sum / sumsq accumulation across the grid.
# Grid: (N,) images; "arbitrary" (stats accumulators are grid-resident).
# ----------------------------------------------------------------------------
def _make_conv_tap_kernel(k, stride, oh, ow, cin, cp):
    taps = [(di, dj) for di in range(k) for dj in range(k)]

    def kernel(ph_ref, w_ref, y_ref, sum_ref, sumsq_ref):
        n = pl.program_id(0)

        @pl.when(n == 0)
        def _init():
            sum_ref[...] = jnp.zeros_like(sum_ref)
            sumsq_ref[...] = jnp.zeros_like(sumsq_ref)

        acc = jnp.zeros((oh * ow, cp), jnp.float32)
        for t, (di, dj) in enumerate(taps):
            p, q = di % stride, dj % stride
            oi, oj = di // stride, dj // stride
            tap = ph_ref[0, p * stride + q, oi:oi + oh, oj:oj + ow, :]
            tap2d = tap.reshape(oh * ow, cin)   # layout-preserving (minor dim kept)
            acc = acc + jnp.dot(tap2d, w_ref[t],
                                preferred_element_type=jnp.float32)

        y_ref[0] = acc
        sum_ref[...] += jnp.sum(acc, axis=0, keepdims=True)
        sumsq_ref[...] += jnp.sum(acc * acc, axis=0, keepdims=True)

    return kernel


def conv_tap_stats(phases, w_mat, *, k, stride, oh, ow):
    n, ss, ph, pw, cin = phases.shape
    cp = w_mat.shape[-1]
    assert (k - 1) // stride + oh <= ph and (k - 1) // stride + ow <= pw

    kernel = _make_conv_tap_kernel(k, stride, oh, ow, cin, cp)
    out_shape = (
        jax.ShapeDtypeStruct((n, oh * ow, cp), jnp.float32),   # raw conv output
        jax.ShapeDtypeStruct((1, cp), jnp.float32),            # sum
        jax.ShapeDtypeStruct((1, cp), jnp.float32),            # sumsq
    )
    return pl.pallas_call(
        kernel,
        out_shape=out_shape,
        grid=(n,),
        in_specs=[
            pl.BlockSpec((1, ss, ph, pw, cin), lambda i: (i, 0, 0, 0, 0)),
            pl.BlockSpec((k * k, cin, cp), lambda i: (0, 0, 0)),
        ],
        out_specs=(
            pl.BlockSpec((1, oh * ow, cp), lambda i: (i, 0, 0)),
            pl.BlockSpec((1, cp), lambda i: (0, 0)),
            pl.BlockSpec((1, cp), lambda i: (0, 0)),
        ),
        compiler_params=pltpu.CompilerParams(
            dimension_semantics=("arbitrary",)),
    )(phases, w_mat)


# ----------------------------------------------------------------------------
# Kernel 2: plain matmul + stats accumulation (1x1 shortcut conv), M-tiled.
# ----------------------------------------------------------------------------
def _matmul_stats_kernel(x_ref, w_ref, y_ref, sum_ref, sumsq_ref):
    i = pl.program_id(0)

    @pl.when(i == 0)
    def _init():
        sum_ref[...] = jnp.zeros_like(sum_ref)
        sumsq_ref[...] = jnp.zeros_like(sumsq_ref)

    y = jnp.dot(x_ref[...], w_ref[...], preferred_element_type=jnp.float32)
    y_ref[...] = y
    sum_ref[...] += jnp.sum(y, axis=0, keepdims=True)
    sumsq_ref[...] += jnp.sum(y * y, axis=0, keepdims=True)


def matmul_stats(x2d, w_mat):
    m, kdim = x2d.shape
    cp = w_mat.shape[1]
    tm = _choose_tile_m(m)
    out_shape = (
        jax.ShapeDtypeStruct((m, cp), jnp.float32),
        jax.ShapeDtypeStruct((1, cp), jnp.float32),
        jax.ShapeDtypeStruct((1, cp), jnp.float32),
    )
    return pl.pallas_call(
        _matmul_stats_kernel,
        out_shape=out_shape,
        grid=(m // tm,),
        in_specs=[
            pl.BlockSpec((tm, kdim), lambda i: (i, 0)),
            pl.BlockSpec((kdim, cp), lambda i: (0, 0)),
        ],
        out_specs=(
            pl.BlockSpec((tm, cp), lambda i: (i, 0)),
            pl.BlockSpec((1, cp), lambda i: (0, 0)),
            pl.BlockSpec((1, cp), lambda i: (0, 0)),
        ),
        compiler_params=pltpu.CompilerParams(
            dimension_semantics=("arbitrary",)),
    )(x2d, w_mat)


# ----------------------------------------------------------------------------
# Kernel 3: BN (precomputed scale/shift) + ReLU, M-tiled, parallel.
# ----------------------------------------------------------------------------
def _bn_relu_kernel(y_ref, scale_ref, shift_ref, o_ref):
    y = y_ref[...] * scale_ref[...] + shift_ref[...]
    o_ref[...] = jnp.maximum(y, 0.0)


def bn_relu(y2d, scale, shift):
    m, cp = y2d.shape
    tm = _choose_tile_m(m)
    row = pl.BlockSpec((tm, cp), lambda i: (i, 0))
    vec = pl.BlockSpec((1, cp), lambda i: (0, 0))
    return pl.pallas_call(
        _bn_relu_kernel,
        out_shape=jax.ShapeDtypeStruct((m, cp), jnp.float32),
        grid=(m // tm,),
        in_specs=[row, vec, vec],
        out_specs=row,
        compiler_params=pltpu.CompilerParams(
            dimension_semantics=("parallel",)),
    )(y2d, scale, shift)


# ----------------------------------------------------------------------------
# Kernel 4: BN(main) + BN(shortcut) + add + ReLU (fused epilogue), M-tiled.
# ----------------------------------------------------------------------------
def _bn_add_relu_kernel(y_ref, sc_ref, s2_ref, b2_ref, ssc_ref, bsc_ref, o_ref):
    y = y_ref[...] * s2_ref[...] + b2_ref[...]
    sc = sc_ref[...] * ssc_ref[...] + bsc_ref[...]
    o_ref[...] = jnp.maximum(y + sc, 0.0)


def bn_add_relu(y2d, sc2d, scale2, shift2, scale_sc, shift_sc):
    m, cp = y2d.shape
    tm = _choose_tile_m(m)
    row = pl.BlockSpec((tm, cp), lambda i: (i, 0))
    vec = pl.BlockSpec((1, cp), lambda i: (0, 0))
    return pl.pallas_call(
        _bn_add_relu_kernel,
        out_shape=jax.ShapeDtypeStruct((m, cp), jnp.float32),
        grid=(m // tm,),
        in_specs=[row, row, vec, vec, vec, vec],
        out_specs=row,
        compiler_params=pltpu.CompilerParams(
            dimension_semantics=("parallel",)),
    )(y2d, sc2d, scale2, shift2, scale_sc, shift_sc)


def _bn_scale_shift(sum_, sumsq, count, gamma_p, beta_p):
    mean = sum_[0] / count
    var = jnp.maximum(sumsq[0] / count - mean * mean, 0.0)
    scale = gamma_p * lax.rsqrt(var + EPS)
    shift = beta_p - mean * scale
    return scale.reshape(1, -1), shift.reshape(1, -1)


# ----------------------------------------------------------------------------
# ResidualBlock forward
# ----------------------------------------------------------------------------
def residual_block_forward(x_nchw, params, *, stride):
    in_channels = x_nchw.shape[1]
    out_channels = params["w1"].shape[0]
    cp = _round_up(out_channels, LANE)

    x = jnp.transpose(x_nchw, (0, 2, 3, 1)).astype(jnp.float32)      # NHWC
    n, h, w = x.shape[0], x.shape[1], x.shape[2]

    # --- cnn1: conv3x3 stride s (pad 1) + batch stats ----------------------
    xpad = jnp.pad(x, ((0, 0), (1, 1), (1, 1), (0, 0)))
    oh = (h + 2 - 3) // stride + 1
    ow = (w + 2 - 3) // stride + 1
    phases1 = _make_phases(xpad, stride)
    w1m = _conv_w_to_tap_mat(params["w1"], in_channels, cp)
    y1_raw, s1, sq1 = conv_tap_stats(phases1, w1m, k=3, stride=stride, oh=oh, ow=ow)
    scale1, shift1 = _bn_scale_shift(
        s1, sq1, n * oh * ow, _pad_vec(params["g1"], cp), _pad_vec(params["b1"], cp))

    # --- BN1 + ReLU (tiled elementwise pass) -------------------------------
    y1n = bn_relu(y1_raw.reshape(n * oh * ow, cp), scale1, shift1)
    y1n_nhwc = y1n.reshape(n, oh, ow, cp)

    # --- cnn2: conv3x3 stride 1 (pad 1) + batch stats ----------------------
    y1pad = jnp.pad(y1n_nhwc, ((0, 0), (1, 1), (1, 1), (0, 0)))
    phases2 = _make_phases(y1pad, 1)
    w2m = _conv_w_to_tap_mat(params["w2"], cp, cp)
    y2_raw, s2, sq2 = conv_tap_stats(phases2, w2m, k=3, stride=1, oh=oh, ow=ow)
    scale2, shift2 = _bn_scale_shift(
        s2, sq2, n * oh * ow, _pad_vec(params["g2"], cp), _pad_vec(params["b2"], cp))

    # --- shortcut -----------------------------------------------------------
    if stride != 1 or in_channels != out_channels:
        xs = x[:, ::stride, ::stride, :]
        msc = n * xs.shape[1] * xs.shape[2]
        xs2d = xs.reshape(msc, in_channels)
        wscm = jnp.pad(params["wsc"].reshape(out_channels, in_channels).T,
                       ((0, 0), (0, cp - out_channels)))
        sc_raw, ss, ssq = matmul_stats(xs2d, wscm)
        scale_sc, shift_sc = _bn_scale_shift(
            ss, ssq, msc, _pad_vec(params["gsc"], cp), _pad_vec(params["bsc"], cp))
    else:
        sc_raw = jnp.pad(x.reshape(n * h * w, in_channels),
                         ((0, 0), (0, cp - in_channels)))
        scale_sc = jnp.ones((1, cp), jnp.float32)
        shift_sc = jnp.zeros((1, cp), jnp.float32)

    # --- BN2 + BN(shortcut) + add + ReLU (fused epilogue) -------------------
    out2d = bn_add_relu(y2_raw.reshape(n * oh * ow, cp), sc_raw,
                        scale2, shift2, scale_sc, shift_sc)
    out = out2d.reshape(n, oh, ow, cp)[..., :out_channels]
    return jnp.transpose(out, (0, 3, 1, 2))                          # NCHW


# ----------------------------------------------------------------------------
# Pure-JAX reference (for sanity check)
# ----------------------------------------------------------------------------
def _bn_train(y_nhwc, gamma, beta):
    mean = jnp.mean(y_nhwc, axis=(0, 1, 2), keepdims=True)
    var = jnp.mean(jnp.square(y_nhwc - mean), axis=(0, 1, 2), keepdims=True)
    return (y_nhwc - mean) * lax.rsqrt(var + EPS) * gamma + beta


def _conv_nhwc(x, w_oihw, stride, pad):
    w_hwio = jnp.transpose(w_oihw, (2, 3, 1, 0))
    return lax.conv_general_dilated(
        x, w_hwio, window_strides=(stride, stride),
        padding=[(pad, pad), (pad, pad)],
        dimension_numbers=("NHWC", "HWIO", "NHWC"))


def residual_block_reference(x_nchw, params, *, stride):
    in_channels = x_nchw.shape[1]
    out_channels = params["w1"].shape[0]
    x = jnp.transpose(x_nchw, (0, 2, 3, 1)).astype(jnp.float32)

    if stride != 1 or in_channels != out_channels:
        sc = _conv_nhwc(x, params["wsc"], stride, 0)
        sc = _bn_train(sc, params["gsc"], params["bsc"])
    else:
        sc = x

    y = _conv_nhwc(x, params["w1"], stride, 1)
    y = jnp.maximum(_bn_train(y, params["g1"], params["b1"]), 0.0)
    y = _conv_nhwc(y, params["w2"], 1, 1)
    y = _bn_train(y, params["g2"], params["b2"])
    y = jnp.maximum(y + sc, 0.0)
    return jnp.transpose(y, (0, 3, 1, 2))


# ----------------------------------------------------------------------------
def init_params(key, in_channels, out_channels, stride):
    k1, k2, k3 = jax.random.split(key, 3)

    def kaiming(k, shape):
        fan_in = shape[1] * shape[2] * shape[3]
        bound = jnp.sqrt(1.0 / fan_in)
        return jax.random.uniform(k, shape, jnp.float32, -bound, bound)

    params = {
        "w1": kaiming(k1, (out_channels, in_channels, 3, 3)),
        "g1": jnp.ones((out_channels,), jnp.float32),
        "b1": jnp.zeros((out_channels,), jnp.float32),
        "w2": kaiming(k2, (out_channels, out_channels, 3, 3)),
        "g2": jnp.ones((out_channels,), jnp.float32),
        "b2": jnp.zeros((out_channels,), jnp.float32),
    }
    if stride != 1 or in_channels != out_channels:
        params["wsc"] = kaiming(k3, (out_channels, in_channels, 1, 1))
        params["gsc"] = jnp.ones((out_channels,), jnp.float32)
        params["bsc"] = jnp.zeros((out_channels,), jnp.float32)
    return params


if __name__ == "__main__":
    key = jax.random.PRNGKey(0)
    kx, kp = jax.random.split(key)

    N, Cin, Cout, H, W, stride = 2, 4, 8, 16, 16, 2
    x = jax.random.normal(kx, (N, Cin, H, W), jnp.float32)   # NCHW input
    params = init_params(kp, Cin, Cout, stride)

    fwd = jax.jit(functools.partial(residual_block_forward, stride=stride))
    out = fwd(x, params)
    out = jax.block_until_ready(out)

    ref = residual_block_reference(x, params, stride=stride)
    assert out.shape == (N, Cout, H // stride, W // stride)
    assert jnp.allclose(out, ref, atol=1e-3, rtol=1e-3), "mismatch vs reference"

    print("KERNEL_OK")
</pallas_src>

<mosaic_0001>
module attributes {stable_mosaic.version = 11 : i64} {
  func.func @_bn_relu_kernel(%arg0: i32, %arg1: memref<128x128xf32, #tpu.memory_space<vmem>>, %arg2: memref<1x128xf32, #tpu.memory_space<vmem>>, %arg3: memref<1x128xf32, #tpu.memory_space<vmem>>, %arg4: memref<128x128xf32, #tpu.memory_space<vmem>>) attributes {dimension_semantics = [#tpu.dimension_semantics<parallel>], iteration_bounds = array<i64: 1>, scalar_prefetch = 0 : i64, scratch_operands = 0 : i64, tpu.core_type = #tpu.core_type<tc>, window_params = [{transform_indices = @transform_0, window_bounds = array<i64: 128, 128>}, {pipeline_mode = #tpu.pipeline_mode<synchronous>, transform_indices = @transform_1, window_bounds = array<i64: 1, 128>}, {pipeline_mode = #tpu.pipeline_mode<synchronous>, transform_indices = @transform_2, window_bounds = array<i64: 1, 128>}, {transform_indices = @transform_3, window_bounds = array<i64: 128, 128>}]} {
    %c0 = arith.constant 0 : index
    %c0_0 = arith.constant 0 : index
    %0 = vector.load %arg1[%c0, %c0_0] : memref<128x128xf32, #tpu.memory_space<vmem>>, vector<128x128xf32>
    %c0_1 = arith.constant 0 : index
    %c0_2 = arith.constant 0 : index
    %1 = vector.load %arg2[%c0_1, %c0_2] : memref<1x128xf32, #tpu.memory_space<vmem>>, vector<1x128xf32>
    %2 = vector.broadcast %1 : vector<1x128xf32> to vector<128x128xf32>
    %3 = arith.mulf %0, %2 : vector<128x128xf32>
    %c0_3 = arith.constant 0 : index
    %c0_4 = arith.constant 0 : index
    %4 = vector.load %arg3[%c0_3, %c0_4] : memref<1x128xf32, #tpu.memory_space<vmem>>, vector<1x128xf32>
    %5 = vector.broadcast %4 : vector<1x128xf32> to vector<128x128xf32>
    %6 = arith.addf %3, %5 : vector<128x128xf32>
    %cst = arith.constant 0.000000e+00 : f32
    %7 = vector.broadcast %cst : f32 to vector<128x128xf32>
    %8 = arith.maximumf %6, %7 : vector<128x128xf32>
    %c0_5 = arith.constant 0 : index
    %c0_6 = arith.constant 0 : index
    %9 = vector.load %arg4[%c0_5, %c0_6] : memref<128x128xf32, #tpu.memory_space<vmem>>, vector<128x128xf32>
    tpu.vector_store %arg4[%c0_5, %c0_6], %8 {strides = array<i32>} : memref<128x128xf32, #tpu.memory_space<vmem>>, vector<128x128xf32>,
    return
  }
  func.func @transform_0(%arg0: i32) -> (i32, i32) {
    %c0_i32 = arith.constant 0 : i32
    %c0_i32_0 = arith.constant 0 : i32
    return %arg0, %c0_i32 : i32, i32
  }
  func.func @transform_1(%arg0: i32) -> (i32, i32) {
    %c0_i32 = arith.constant 0 : i32
    %c0_i32_0 = arith.constant 0 : i32
    %c0_i32_1 = arith.constant 0 : i32
    return %c0_i32, %c0_i32_0 : i32, i32
  }
  func.func @transform_2(%arg0: i32) -> (i32, i32) {
    %c0_i32 = arith.constant 0 : i32
    %c0_i32_0 = arith.constant 0 : i32
    %c0_i32_1 = arith.constant 0 : i32
    return %c0_i32, %c0_i32_0 : i32, i32
  }
  func.func @transform_3(%arg0: i32) -> (i32, i32) {
    %c0_i32 = arith.constant 0 : i32
    %c0_i32_0 = arith.constant 0 : i32
    return %arg0, %c0_i32 : i32, i32
  }
}

module attributes {stable_mosaic.version = 11 : i64} {
  func.func @kernel(%arg0: i32, %arg1: memref<1x4x9x9x4xf32, #tpu.memory_space<vmem>>, %arg2: memref<9x4x128xf32, #tpu.memory_space<vmem>>, %arg3: memref<1x64x128xf32, #tpu.memory_space<vmem>>, %arg4: memref<1x128xf32, #tpu.memory_space<vmem>>, %arg5: memref<1x128xf32, #tpu.memory_space<vmem>>) attributes {dimension_semantics = [#tpu.dimension_semantics<arbitrary>], iteration_bounds = array<i64: 2>, scalar_prefetch = 0 : i64, scratch_operands = 0 : i64, tpu.core_type = #tpu.core_type<tc>, window_params = [{transform_indices = @transform_0, window_bounds = array<i64: 1, 4, 9, 9, 4>}, {pipeline_mode = #tpu.pipeline_mode<synchronous>, transform_indices = @transform_1, window_bounds = array<i64: 9, 4, 128>}, {transform_indices = @transform_2, window_bounds = array<i64: 1, 64, 128>}, {pipeline_mode = #tpu.pipeline_mode<synchronous>, transform_indices = @transform_3, window_bounds = array<i64: 1, 128>}, {pipeline_mode = #tpu.pipeline_mode<synchronous>, transform_indices = @transform_4, window_bounds = array<i64: 1, 128>}]} {
    %c0_i32 = arith.constant 0 : i32
    %0 = arith.cmpi eq, %arg0, %c0_i32 : i32
    %1 = arith.extui %0 : i1 to i32
    %c0_i32_0 = arith.constant 0 : i32
    %2 = arith.cmpi ne, %1, %c0_i32_0 : i32
    scf.if %2 {
      %cst_86 = arith.constant 0.000000e+00 : f32
      %81 = vector.broadcast %cst_86 : f32 to vector<1x128xf32>
      %c0_87 = arith.constant 0 : index
      %c0_88 = arith.constant 0 : index
      %82 = vector.load %arg4[%c0_87, %c0_88] : memref<1x128xf32, #tpu.memory_space<vmem>>, vector<1x128xf32>
      tpu.vector_store %arg4[%c0_87, %c0_88], %81 {strides = array<i32>} : memref<1x128xf32, #tpu.memory_space<vmem>>, vector<1x128xf32>,
      %cst_89 = arith.constant 0.000000e+00 : f32
      %83 = vector.broadcast %cst_89 : f32 to vector<1x128xf32>
      %c0_90 = arith.constant 0 : index
      %c0_91 = arith.constant 0 : index
      %84 = vector.load %arg5[%c0_90, %c0_91] : memref<1x128xf32, #tpu.memory_space<vmem>>, vector<1x128xf32>
      tpu.vector_store %arg5[%c0_90, %c0_91], %83 {strides = array<i32>} : memref<1x128xf32, #tpu.memory_space<vmem>>, vector<1x128xf32>,
    } else {
    }
    %cst = arith.constant 0.000000e+00 : f32
    %3 = vector.broadcast %cst : f32 to vector<64x128xf32>
    %c0 = arith.constant 0 : index
    %c0_1 = arith.constant 0 : index
    %c0_2 = arith.constant 0 : index
    %c0_3 = arith.constant 0 : index
    %c0_4 = arith.constant 0 : index
    %4 = vector.load %arg1[%c0, %c0_1, %c0_2, %c0_3, %c0_4] : memref<1x4x9x9x4xf32, #tpu.memory_space<vmem>>, vector<1x1x8x8x4xf32>
    %5 = vector.shape_cast %4 : vector<1x1x8x8x4xf32> to vector<8x8x4xf32>
    %6 = vector.shape_cast %5 : vector<8x8x4xf32> to vector<64x4xf32>
    %c0_5 = arith.constant 0 : index
    %c0_6 = arith.constant 0 : index
    %c0_7 = arith.constant 0 : index
    %7 = vector.load %arg2[%c0_5, %c0_6, %c0_7] : memref<9x4x128xf32, #tpu.memory_space<vmem>>, vector<1x4x128xf32>
    %8 = vector.shape_cast %7 : vector<1x4x128xf32> to vector<4x128xf32>
    %cst_8 = arith.constant dense<0.000000e+00> : vector<64x128xf32>
    %9 = tpu.matmul %6, %8, %cst_8 {dimension_numbers = #tpu.dot_dimension_numbers<[1], [0], [0], [1], [0, 0, 1, 1], [], []>} : vector<64x4xf32>, vector<4x128xf32>, vector<64x128xf32> -> vector<64x128xf32>
    %10 = arith.addf %3, %9 : vector<64x128xf32>
    %c0_9 = arith.constant 0 : index
    %c1 = arith.constant 1 : index
    %c0_10 = arith.constant 0 : index
    %c0_11 = arith.constant 0 : index
    %c0_12 = arith.constant 0 : index
    %11 = vector.load %arg1[%c0_9, %c1, %c0_10, %c0_11, %c0_12] : memref<1x4x9x9x4xf32, #tpu.memory_space<vmem>>, vector<1x1x8x8x4xf32>
    %12 = vector.shape_cast %11 : vector<1x1x8x8x4xf32> to vector<8x8x4xf32>
    %13 = vector.shape_cast %12 : vector<8x8x4xf32> to vector<64x4xf32>
    %c1_13 = arith.constant 1 : index
    %c0_14 = arith.constant 0 : index
    %c0_15 = arith.constant 0 : index
    %14 = vector.load %arg2[%c1_13, %c0_14, %c0_15] : memref<9x4x128xf32, #tpu.memory_space<vmem>>, vector<1x4x128xf32>
    %15 = vector.shape_cast %14 : vector<1x4x128xf32> to vector<4x128xf32>
    %cst_16 = arith.constant dense<0.000000e+00> : vector<64x128xf32>
    %16 = tpu.matmul %13, %15, %cst_16 {dimension_numbers = #tpu.dot_dimension_numbers<[1], [0], [0], [1], [0, 0, 1, 1], [], []>} : vector<64x4xf32>, vector<4x128xf32>, vector<64x128xf32> -> vector<64x128xf32>
    %17 = arith.addf %10, %16 : vector<64x128xf32>
    %c0_17 = arith.constant 0 : index
    %c0_18 = arith.constant 0 : index
    %c0_19 = arith.constant 0 : index
    %c1_20 = arith.constant 1 : index
    %c0_21 = arith.constant 0 : index
    %18 = vector.load %arg1[%c0_17, %c0_18, %c0_19, %c1_20, %c0_21] : memref<1x4x9x9x4xf32, #tpu.memory_space<vmem>>, vector<1x1x8x8x4xf32>
    %19 = vector.shape_cast %18 : vector<1x1x8x8x4xf32> to vector<8x8x4xf32>
    %20 = vector.shape_cast %19 : vector<8x8x4xf32> to vector<64x4xf32>
    %c2 = arith.constant 2 : index
    %c0_22 = arith.constant 0 : index
    %c0_23 = arith.constant 0 : index
    %21 = vector.load %arg2[%c2, %c0_22, %c0_23] : memref<9x4x128xf32, #tpu.memory_space<vmem>>, vector<1x4x128xf32>
    %22 = vector.shape_cast %21 : vector<1x4x128xf32> to vector<4x128xf32>
    %cst_24 = arith.constant dense<0.000000e+00> : vector<64x128xf32>
    %23 = tpu.matmul %20, %22, %cst_24 {dimension_numbers = #tpu.dot_dimension_numbers<[1], [0], [0], [1], [0, 0, 1, 1], [], []>} : vector<64x4xf32>, vector<4x128xf32>, vector<64x128xf32> -> vector<64x128xf32>
    %24 = arith.addf %17, %23 : vector<64x128xf32>
    %c0_25 = arith.constant 0 : index
    %c2_26 = arith.constant 2 : index
    %c0_27 = arith.constant 0 : index
    %c0_28 = arith.constant 0 : index
    %c0_29 = arith.constant 0 : index
    %25 = vector.load %arg1[%c0_25, %c2_26, %c0_27, %c0_28, %c0_29] : memref<1x4x9x9x4xf32, #tpu.memory_space<vmem>>, vector<1x1x8x8x4xf32>
    %26 = vector.shape_cast %25 : vector<1x1x8x8x4xf32> to vector<8x8x4xf32>
    %27 = vector.shape_cast %26 : vector<8x8x4xf32> to vector<64x4xf32>
    %c3 = arith.constant 3 : index
    %c0_30 = arith.constant 0 : index
    %c0_31 = arith.constant 0 : index
    %28 = vector.load %arg2[%c3, %c0_30, %c0_31] : memref<9x4x128xf32, #tpu.memory_space<vmem>>, vector<1x4x128xf32>
    %29 = vector.shape_cast %28 : vector<1x4x128xf32> to vector<4x128xf32>
    %cst_32 = arith.constant dense<0.000000e+00> : vector<64x128xf32>
    %30 = tpu.matmul %27, %29, %cst_32 {dimension_numbers = #tpu.dot_dimension_numbers<[1], [0], [0], [1], [0, 0, 1, 1], [], []>} : vector<64x4xf32>, vector<4x128xf32>, vector<64x128xf32> -> vector<64x128xf32>
    %31 = arith.addf %24, %30 : vector<64x128xf32>
    %c0_33 = arith.constant 0 : index
    %c3_34 = arith.constant 3 : index
    %c0_35 = arith.constant 0 : index
    %c0_36 = arith.constant 0 : index
    %c0_37 = arith.constant 0 : index
    %32 = vector.load %arg1[%c0_33, %c3_34, %c0_35, %c0_36, %c0_37] : memref<1x4x9x9x4xf32, #tpu.memory_space<vmem>>, vector<1x1x8x8x4xf32>
    %33 = vector.shape_cast %32 : vector<1x1x8x8x4xf32> to vector<8x8x4xf32>
    %34 = vector.shape_cast %33 : vector<8x8x4xf32> to vector<64x4xf32>
    %c4 = arith.constant 4 : index
    %c0_38 = arith.constant 0 : index
    %c0_39 = arith.constant 0 : index
    %35 = vector.load %arg2[%c4, %c0_38, %c0_39] : memref<9x4x128xf32, #tpu.memory_space<vmem>>, vector<1x4x128xf32>
    %36 = vector.shape_cast %35 : vector<1x4x128xf32> to vector<4x128xf32>
    %cst_40 = arith.constant dense<0.000000e+00> : vector<64x128xf32>
    %37 = tpu.matmul %34, %36, %cst_40 {dimension_numbers = #tpu.dot_dimension_numbers<[1], [0], [0], [1], [0, 0, 1, 1], [], []>} : vector<64x4xf32>, vector<4x128xf32>, vector<64x128xf32> -> vector<64x128xf32>
    %38 = arith.addf %31, %37 : vector<64x128xf32>
    %c0_41 = arith.constant 0 : index
    %c2_42 = arith.constant 2 : index
    %c0_43 = arith.constant 0 : index
    %c1_44 = arith.constant 1 : index
    %c0_45 = arith.constant 0 : index
    %39 = vector.load %arg1[%c0_41, %c2_42, %c0_43, %c1_44, %c0_45] : memref<1x4x9x9x4xf32, #tpu.memory_space<vmem>>, vector<1x1x8x8x4xf32>
    %40 = vector.shape_cast %39 : vector<1x1x8x8x4xf32> to vector<8x8x4xf32>
    %41 = vector.shape_cast %40 : vector<8x8x4xf32> to vector<64x4xf32>
    %c5 = arith.constant 5 : index
    %c0_46 = arith.constant 0 : index
    %c0_47 = arith.constant 0 : index
    %42 = vector.load %arg2[%c5, %c0_46, %c0_47] : memref<9x4x128xf32, #tpu.memory_space<vmem>>, vector<1x4x128xf32>
    %43 = vector.shape_cast %42 : vector<1x4x128xf32> to vector<4x128xf32>
    %cst_48 = arith.constant dense<0.000000e+00> : vector<64x128xf32>
    %44 = tpu.matmul %41, %43, %cst_48 {dimension_numbers = #tpu.dot_dimension_numbers<[1], [0], [0], [1], [0, 0, 1, 1], [], []>} : vector<64x4xf32>, vector<4x128xf32>, vector<64x128xf32> -> vector<64x128xf32>
    %45 = arith.addf %38, %44 : vector<64x128xf32>
    %c0_49 = arith.constant 0 : index
    %c0_50 = arith.constant 0 : index
    %c1_51 = arith.constant 1 : index
    %c0_52 = arith.constant 0 : index
    %c0_53 = arith.constant 0 : index
    %46 = vector.load %arg1[%c0_49, %c0_50, %c1_51, %c0_52, %c0_53] : memref<1x4x9x9x4xf32, #tpu.memory_space<vmem>>, vector<1x1x8x8x4xf32>
    %47 = vector.shape_cast %46 : vector<1x1x8x8x4xf32> to vector<8x8x4xf32>
    %48 = vector.shape_cast %47 : vector<8x8x4xf32> to vector<64x4xf32>
    %c6 = arith.constant 6 : index
    %c0_54 = arith.constant 0 : index
    %c0_55 = arith.constant 0 : index
    %49 = vector.load %arg2[%c6, %c0_54, %c0_55] : memref<9x4x128xf32, #tpu.memory_space<vmem>>, vector<1x4x128xf32>
    %50 = vector.shape_cast %49 : vector<1x4x128xf32> to vector<4x128xf32>
    %cst_56 = arith.constant dense<0.000000e+00> : vector<64x128xf32>
    %51 = tpu.matmul %48, %50, %cst_56 {dimension_numbers = #tpu.dot_dimension_numbers<[1], [0], [0], [1], [0, 0, 1, 1], [], []>} : vector<64x4xf32>, vector<4x128xf32>, vector<64x128xf32> -> vector<64x128xf32>
    %52 = arith.addf %45, %51 : vector<64x128xf32>
    %c0_57 = arith.constant 0 : index
    %c1_58 = arith.constant 1 : index
    %c1_59 = arith.constant 1 : index
    %c0_60 = arith.constant 0 : index
    %c0_61 = arith.constant 0 : index
    %53 = vector.load %arg1[%c0_57, %c1_58, %c1_59, %c0_60, %c0_61] : memref<1x4x9x9x4xf32, #tpu.memory_space<vmem>>, vector<1x1x8x8x4xf32>
    %54 = vector.shape_cast %53 : vector<1x1x8x8x4xf32> to vector<8x8x4xf32>
    %55 = vector.shape_cast %54 : vector<8x8x4xf32> to vector<64x4xf32>
    %c7 = arith.constant 7 : index
    %c0_62 = arith.constant 0 : index
    %c0_63 = arith.constant 0 : index
    %56 = vector.load %arg2[%c7, %c0_62, %c0_63] : memref<9x4x128xf32, #tpu.memory_space<vmem>>, vector<1x4x128xf32>
    %57 = vector.shape_cast %56 : vector<1x4x128xf32> to vector<4x128xf32>
    %cst_64 = arith.constant dense<0.000000e+00> : vector<64x128xf32>
    %58 = tpu.matmul %55, %57, %cst_64 {dimension_numbers = #tpu.dot_dimension_numbers<[1], [0], [0], [1], [0, 0, 1, 1], [], []>} : vector<64x4xf32>, vector<4x128xf32>, vector<64x128xf32> -> vector<64x128xf32>
    %59 = arith.addf %52, %58 : vector<64x128xf32>
    %c0_65 = arith.constant 0 : index
    %c0_66 = arith.constant 0 : index
    %c1_67 = arith.constant 1 : index
    %c1_68 = arith.constant 1 : index
    %c0_69 = arith.constant 0 : index
    %60 = vector.load %arg1[%c0_65, %c0_66, %c1_67, %c1_68, %c0_69] : memref<1x4x9x9x4xf32, #tpu.memory_space<vmem>>, vector<1x1x8x8x4xf32>
    %61 = vector.shape_cast %60 : vector<1x1x8x8x4xf32> to vector<8x8x4xf32>
    %62 = vector.shape_cast %61 : vector<8x8x4xf32> to vector<64x4xf32>
    %c8 = arith.constant 8 : index
    %c0_70 = arith.constant 0 : index
    %c0_71 = arith.constant 0 : index
    %63 = vector.load %arg2[%c8, %c0_70, %c0_71] : memref<9x4x128xf32, #tpu.memory_space<vmem>>, vector<1x4x128xf32>
    %64 = vector.shape_cast %63 : vector<1x4x128xf32> to vector<4x128xf32>
    %cst_72 = arith.constant dense<0.000000e+00> : vector<64x128xf32>
    %65 = tpu.matmul %62, %64, %cst_72 {dimension_numbers = #tpu.dot_dimension_numbers<[1], [0], [0], [1], [0, 0, 1, 1], [], []>} : vector<64x4xf32>, vector<4x128xf32>, vector<64x128xf32> -> vector<64x128xf32>
    %66 = arith.addf %59, %65 : vector<64x128xf32>
    %c0_73 = arith.constant 0 : index
    %c0_74 = arith.constant 0 : index
    %c0_75 = arith.constant 0 : index
    %67 = vector.load %arg3[%c0_73, %c0_74, %c0_75] : memref<1x64x128xf32, #tpu.memory_space<vmem>>, vector<1x64x128xf32>
    %68 = vector.shape_cast %67 : vector<1x64x128xf32> to vector<64x128xf32>
    %69 = vector.shape_cast %66 : vector<64x128xf32> to vector<1x64x128xf32>
    tpu.vector_store %arg3[%c0_73, %c0_74, %c0_75], %69 {strides = array<i32>} : memref<1x64x128xf32, #tpu.memory_space<vmem>>, vector<1x64x128xf32>,
    %c0_76 = arith.constant 0 : index
    %c0_77 = arith.constant 0 : index
    %70 = vector.load %arg4[%c0_76, %c0_77] : memref<1x128xf32, #tpu.memory_space<vmem>>, vector<1x128xf32>
    %cst_78 = arith.constant dense<0.000000e+00> : vector<128xf32>
    %71 = vector.multi_reduction <add>, %66, %cst_78 [0] : vector<64x128xf32> to vector<128xf32>
    %72 = vector.shape_cast %71 : vector<128xf32> to vector<1x128xf32>
    %73 = arith.addf %70, %72 : vector<1x128xf32>
    %c0_79 = arith.constant 0 : index
    %c0_80 = arith.constant 0 : index
    %74 = vector.load %arg4[%c0_79, %c0_80] : memref<1x128xf32, #tpu.memory_space<vmem>>, vector<1x128xf32>
    tpu.vector_store %arg4[%c0_79, %c0_80], %73 {strides = array<i32>} : memref<1x128xf32, #tpu.memory_space<vmem>>, vector<1x128xf32>,
    %c0_81 = arith.constant 0 : index
    %c0_82 = arith.constant 0 : index
    %75 = vector.load %arg5[%c0_81, %c0_82] : memref<1x128xf32, #tpu.memory_space<vmem>>, vector<1x128xf32>
    %76 = arith.mulf %66, %66 : vector<64x128xf32>
    %cst_83 = arith.constant dense<0.000000e+00> : vector<128xf32>
    %77 = vector.multi_reduction <add>, %76, %cst_83 [0] : vector<64x128xf32> to vector<128xf32>
    %78 = vector.shape_cast %77 : vector<128xf32> to vector<1x128xf32>
    %79 = arith.addf %75, %78 : vector<1x128xf32>
    %c0_84 = arith.constant 0 : index
    %c0_85 = arith.constant 0 : index
    %80 = vector.load %arg5[%c0_84, %c0_85] : memref<1x128xf32, #tpu.memory_space<vmem>>, vector<1x128xf32>
    tpu.vector_store %arg5[%c0_84, %c0_85], %79 {strides = array<i32>} : memref<1x128xf32, #tpu.memory_space<vmem>>, vector<1x128xf32>,
    return
  }
  func.func @transform_0(%arg0: i32) -> (i32, i32, i32, i32, i32) {
    %c0_i32 = arith.constant 0 : i32
    %c0_i32_0 = arith.constant 0 : i32
    %c0_i32_1 = arith.constant 0 : i32
    %c0_i32_2 = arith.constant 0 : i32
    %c0_i32_3 = arith.constant 0 : i32
    return %arg0, %c0_i32, %c0_i32_0, %c0_i32_1, %c0_i32_2 : i32, i32, i32, i32, i32
  }
  func.func @transform_1(%arg0: i32) -> (i32, i32, i32) {
    %c0_i32 = arith.constant 0 : i32
    %c0_i32_0 = arith.constant 0 : i32
    %c0_i32_1 = arith.constant 0 : i32
    %c0_i32_2 = arith.constant 0 : i32
    return %c0_i32, %c0_i32_0, %c0_i32_1 : i32, i32, i32
  }
  func.func @transform_2(%arg0: i32) -> (i32, i32, i32) {
    %c0_i32 = arith.constant 0 : i32
    %c0_i32_0 = arith.constant 0 : i32
    %c0_i32_1 = arith.constant 0 : i32
    return %arg0, %c0_i32, %c0_i32_0 : i32, i32, i32
  }
  func.func @transform_3(%arg0: i32) -> (i32, i32) {
    %c0_i32 = arith.constant 0 : i32
    %c0_i32_0 = arith.constant 0 : i32
    %c0_i32_1 = arith.constant 0 : i32
    return %c0_i32, %c0_i32_0 : i32, i32
  }
  func.func @transform_4(%arg0: i32) -> (i32, i32) {
    %c0_i32 = arith.constant 0 : i32
    %c0_i32_0 = arith.constant 0 : i32
    %c0_i32_1 = arith.constant 0 : i32
    return %c0_i32, %c0_i32_0 : i32, i32
  }
}

module attributes {stable_mosaic.version = 11 : i64} {
  func.func @kernel(%arg0: i32, %arg1: memref<1x1x10x10x128xf32, #tpu.memory_space<vmem>>, %arg2: memref<9x128x128xf32, #tpu.memory_space<vmem>>, %arg3: memref<1x64x128xf32, #tpu.memory_space<vmem>>, %arg4: memref<1x128xf32, #tpu.memory_space<vmem>>, %arg5: memref<1x128xf32, #tpu.memory_space<vmem>>) attributes {dimension_semantics = [#tpu.dimension_semantics<arbitrary>], iteration_bounds = array<i64: 2>, scalar_prefetch = 0 : i64, scratch_operands = 0 : i64, tpu.core_type = #tpu.core_type<tc>, window_params = [{transform_indices = @transform_0, window_bounds = array<i64: 1, 1, 10, 10, 128>}, {pipeline_mode = #tpu.pipeline_mode<synchronous>, transform_indices = @transform_1, window_bounds = array<i64: 9, 128, 128>}, {transform_indices = @transform_2, window_bounds = array<i64: 1, 64, 128>}, {pipeline_mode = #tpu.pipeline_mode<synchronous>, transform_indices = @transform_3, window_bounds = array<i64: 1, 128>}, {pipeline_mode = #tpu.pipeline_mode<synchronous>, transform_indices = @transform_4, window_bounds = array<i64: 1, 128>}]} {
    %c0_i32 = arith.constant 0 : i32
    %0 = arith.cmpi eq, %arg0, %c0_i32 : i32
    %1 = arith.extui %0 : i1 to i32
    %c0_i32_0 = arith.constant 0 : i32
    %2 = arith.cmpi ne, %1, %c0_i32_0 : i32
    scf.if %2 {
      %cst_86 = arith.constant 0.000000e+00 : f32
      %81 = vector.broadcast %cst_86 : f32 to vector<1x128xf32>
      %c0_87 = arith.constant 0 : index
      %c0_88 = arith.constant 0 : index
      %82 = vector.load %arg4[%c0_87, %c0_88] : memref<1x128xf32, #tpu.memory_space<vmem>>, vector<1x128xf32>
      tpu.vector_store %arg4[%c0_87, %c0_88], %81 {strides = array<i32>} : memref<1x128xf32, #tpu.memory_space<vmem>>, vector<1x128xf32>,
      %cst_89 = arith.constant 0.000000e+00 : f32
      %83 = vector.broadcast %cst_89 : f32 to vector<1x128xf32>
      %c0_90 = arith.constant 0 : index
      %c0_91 = arith.constant 0 : index
      %84 = vector.load %arg5[%c0_90, %c0_91] : memref<1x128xf32, #tpu.memory_space<vmem>>, vector<1x128xf32>
      tpu.vector_store %arg5[%c0_90, %c0_91], %83 {strides = array<i32>} : memref<1x128xf32, #tpu.memory_space<vmem>>, vector<1x128xf32>,
    } else {
    }
    %cst = arith.constant 0.000000e+00 : f32
    %3 = vector.broadcast %cst : f32 to vector<64x128xf32>
    %c0 = arith.constant 0 : index
    %c0_1 = arith.constant 0 : index
    %c0_2 = arith.constant 0 : index
    %c0_3 = arith.constant 0 : index
    %c0_4 = arith.constant 0 : index
    %4 = vector.load %arg1[%c0, %c0_1, %c0_2, %c0_3, %c0_4] : memref<1x1x10x10x128xf32, #tpu.memory_space<vmem>>, vector<1x1x8x8x128xf32>
    %5 = vector.shape_cast %4 : vector<1x1x8x8x128xf32> to vector<8x8x128xf32>
    %6 = vector.shape_cast %5 : vector<8x8x128xf32> to vector<64x128xf32>
    %c0_5 = arith.constant 0 : index
    %c0_6 = arith.constant 0 : index
    %c0_7 = arith.constant 0 : index
    %7 = vector.load %arg2[%c0_5, %c0_6, %c0_7] : memref<9x128x128xf32, #tpu.memory_space<vmem>>, vector<1x128x128xf32>
    %8 = vector.shape_cast %7 : vector<1x128x128xf32> to vector<128x128xf32>
    %cst_8 = arith.constant dense<0.000000e+00> : vector<64x128xf32>
    %9 = tpu.matmul %6, %8, %cst_8 {dimension_numbers = #tpu.dot_dimension_numbers<[1], [0], [0], [1], [0, 0, 1, 1], [], []>} : vector<64x128xf32>, vector<128x128xf32>, vector<64x128xf32> -> vector<64x128xf32>
    %10 = arith.addf %3, %9 : vector<64x128xf32>
    %c0_9 = arith.constant 0 : index
    %c0_10 = arith.constant 0 : index
    %c0_11 = arith.constant 0 : index
    %c1 = arith.constant 1 : index
    %c0_12 = arith.constant 0 : index
    %11 = vector.load %arg1[%c0_9, %c0_10, %c0_11, %c1, %c0_12] : memref<1x1x10x10x128xf32, #tpu.memory_space<vmem>>, vector<1x1x8x8x128xf32>
    %12 = vector.shape_cast %11 : vector<1x1x8x8x128xf32> to vector<8x8x128xf32>
    %13 = vector.shape_cast %12 : vector<8x8x128xf32> to vector<64x128xf32>
    %c1_13 = arith.constant 1 : index
    %c0_14 = arith.constant 0 : index
    %c0_15 = arith.constant 0 : index
    %14 = vector.load %arg2[%c1_13, %c0_14, %c0_15] : memref<9x128x128xf32, #tpu.memory_space<vmem>>, vector<1x128x128xf32>
    %15 = vector.shape_cast %14 : vector<1x128x128xf32> to vector<128x128xf32>
    %cst_16 = arith.constant dense<0.000000e+00> : vector<64x128xf32>
    %16 = tpu.matmul %13, %15, %cst_16 {dimension_numbers = #tpu.dot_dimension_numbers<[1], [0], [0], [1], [0, 0, 1, 1], [], []>} : vector<64x128xf32>, vector<128x128xf32>, vector<64x128xf32> -> vector<64x128xf32>
    %17 = arith.addf %10, %16 : vector<64x128xf32>
    %c0_17 = arith.constant 0 : index
    %c0_18 = arith.constant 0 : index
    %c0_19 = arith.constant 0 : index
    %c2 = arith.constant 2 : index
    %c0_20 = arith.constant 0 : index
    %18 = vector.load %arg1[%c0_17, %c0_18, %c0_19, %c2, %c0_20] : memref<1x1x10x10x128xf32, #tpu.memory_space<vmem>>, vector<1x1x8x8x128xf32>
    %19 = vector.shape_cast %18 : vector<1x1x8x8x128xf32> to vector<8x8x128xf32>
    %20 = vector.shape_cast %19 : vector<8x8x128xf32> to vector<64x128xf32>
    %c2_21 = arith.constant 2 : index
    %c0_22 = arith.constant 0 : index
    %c0_23 = arith.constant 0 : index
    %21 = vector.load %arg2[%c2_21, %c0_22, %c0_23] : memref<9x128x128xf32, #tpu.memory_space<vmem>>, vector<1x128x128xf32>
    %22 = vector.shape_cast %21 : vector<1x128x128xf32> to vector<128x128xf32>
    %cst_24 = arith.constant dense<0.000000e+00> : vector<64x128xf32>
    %23 = tpu.matmul %20, %22, %cst_24 {dimension_numbers = #tpu.dot_dimension_numbers<[1], [0], [0], [1], [0, 0, 1, 1], [], []>} : vector<64x128xf32>, vector<128x128xf32>, vector<64x128xf32> -> vector<64x128xf32>
    %24 = arith.addf %17, %23 : vector<64x128xf32>
    %c0_25 = arith.constant 0 : index
    %c0_26 = arith.constant 0 : index
    %c1_27 = arith.constant 1 : index
    %c0_28 = arith.constant 0 : index
    %c0_29 = arith.constant 0 : index
    %25 = vector.load %arg1[%c0_25, %c0_26, %c1_27, %c0_28, %c0_29] : memref<1x1x10x10x128xf32, #tpu.memory_space<vmem>>, vector<1x1x8x8x128xf32>
    %26 = vector.shape_cast %25 : vector<1x1x8x8x128xf32> to vector<8x8x128xf32>
    %27 = vector.shape_cast %26 : vector<8x8x128xf32> to vector<64x128xf32>
    %c3 = arith.constant 3 : index
    %c0_30 = arith.constant 0 : index
    %c0_31 = arith.constant 0 : index
    %28 = vector.load %arg2[%c3, %c0_30, %c0_31] : memref<9x128x128xf32, #tpu.memory_space<vmem>>, vector<1x128x128xf32>
    %29 = vector.shape_cast %28 : vector<1x128x128xf32> to vector<128x128xf32>
    %cst_32 = arith.constant dense<0.000000e+00> : vector<64x128xf32>
    %30 = tpu.matmul %27, %29, %cst_32 {dimension_numbers = #tpu.dot_dimension_numbers<[1], [0], [0], [1], [0, 0, 1, 1], [], []>} : vector<64x128xf32>, vector<128x128xf32>, vector<64x128xf32> -> vector<64x128xf32>
    %31 = arith.addf %24, %30 : vector<64x128xf32>
    %c0_33 = arith.constant 0 : index
    %c0_34 = arith.constant 0 : index
    %c1_35 = arith.constant 1 : index
    %c1_36 = arith.constant 1 : index
    %c0_37 = arith.constant 0 : index
    %32 = vector.load %arg1[%c0_33, %c0_34, %c1_35, %c1_36, %c0_37] : memref<1x1x10x10x128xf32, #tpu.memory_space<vmem>>, vector<1x1x8x8x128xf32>
    %33 = vector.shape_cast %32 : vector<1x1x8x8x128xf32> to vector<8x8x128xf32>
    %34 = vector.shape_cast %33 : vector<8x8x128xf32> to vector<64x128xf32>
    %c4 = arith.constant 4 : index
    %c0_38 = arith.constant 0 : index
    %c0_39 = arith.constant 0 : index
    %35 = vector.load %arg2[%c4, %c0_38, %c0_39] : memref<9x128x128xf32, #tpu.memory_space<vmem>>, vector<1x128x128xf32>
    %36 = vector.shape_cast %35 : vector<1x128x128xf32> to vector<128x128xf32>
    %cst_40 = arith.constant dense<0.000000e+00> : vector<64x128xf32>
    %37 = tpu.matmul %34, %36, %cst_40 {dimension_numbers = #tpu.dot_dimension_numbers<[1], [0], [0], [1], [0, 0, 1, 1], [], []>} : vector<64x128xf32>, vector<128x128xf32>, vector<64x128xf32> -> vector<64x128xf32>
    %38 = arith.addf %31, %37 : vector<64x128xf32>
    %c0_41 = arith.constant 0 : index
    %c0_42 = arith.constant 0 : index
    %c1_43 = arith.constant 1 : index
    %c2_44 = arith.constant 2 : index
    %c0_45 = arith.constant 0 : index
    %39 = vector.load %arg1[%c0_41, %c0_42, %c1_43, %c2_44, %c0_45] : memref<1x1x10x10x128xf32, #tpu.memory_space<vmem>>, vector<1x1x8x8x128xf32>
    %40 = vector.shape_cast %39 : vector<1x1x8x8x128xf32> to vector<8x8x128xf32>
    %41 = vector.shape_cast %40 : vector<8x8x128xf32> to vector<64x128xf32>
    %c5 = arith.constant 5 : index
    %c0_46 = arith.constant 0 : index
    %c0_47 = arith.constant 0 : index
    %42 = vector.load %arg2[%c5, %c0_46, %c0_47] : memref<9x128x128xf32, #tpu.memory_space<vmem>>, vector<1x128x128xf32>
    %43 = vector.shape_cast %42 : vector<1x128x128xf32> to vector<128x128xf32>
    %cst_48 = arith.constant dense<0.000000e+00> : vector<64x128xf32>
    %44 = tpu.matmul %41, %43, %cst_48 {dimension_numbers = #tpu.dot_dimension_numbers<[1], [0], [0], [1], [0, 0, 1, 1], [], []>} : vector<64x128xf32>, vector<128x128xf32>, vector<64x128xf32> -> vector<64x128xf32>
    %45 = arith.addf %38, %44 : vector<64x128xf32>
    %c0_49 = arith.constant 0 : index
    %c0_50 = arith.constant 0 : index
    %c2_51 = arith.constant 2 : index
    %c0_52 = arith.constant 0 : index
    %c0_53 = arith.constant 0 : index
    %46 = vector.load %arg1[%c0_49, %c0_50, %c2_51, %c0_52, %c0_53] : memref<1x1x10x10x128xf32, #tpu.memory_space<vmem>>, vector<1x1x8x8x128xf32>
    %47 = vector.shape_cast %46 : vector<1x1x8x8x128xf32> to vector<8x8x128xf32>
    %48 = vector.shape_cast %47 : vector<8x8x128xf32> to vector<64x128xf32>
    %c6 = arith.constant 6 : index
    %c0_54 = arith.constant 0 : index
    %c0_55 = arith.constant 0 : index
    %49 = vector.load %arg2[%c6, %c0_54, %c0_55] : memref<9x128x128xf32, #tpu.memory_space<vmem>>, vector<1x128x128xf32>
    %50 = vector.shape_cast %49 : vector<1x128x128xf32> to vector<128x128xf32>
    %cst_56 = arith.constant dense<0.000000e+00> : vector<64x128xf32>
    %51 = tpu.matmul %48, %50, %cst_56 {dimension_numbers = #tpu.dot_dimension_numbers<[1], [0], [0], [1], [0, 0, 1, 1], [], []>} : vector<64x128xf32>, vector<128x128xf32>, vector<64x128xf32> -> vector<64x128xf32>
    %52 = arith.addf %45, %51 : vector<64x128xf32>
    %c0_57 = arith.constant 0 : index
    %c0_58 = arith.constant 0 : index
    %c2_59 = arith.constant 2 : index
    %c1_60 = arith.constant 1 : index
    %c0_61 = arith.constant 0 : index
    %53 = vector.load %arg1[%c0_57, %c0_58, %c2_59, %c1_60, %c0_61] : memref<1x1x10x10x128xf32, #tpu.memory_space<vmem>>, vector<1x1x8x8x128xf32>
    %54 = vector.shape_cast %53 : vector<1x1x8x8x128xf32> to vector<8x8x128xf32>
    %55 = vector.shape_cast %54 : vector<8x8x128xf32> to vector<64x128xf32>
    %c7 = arith.constant 7 : index
    %c0_62 = arith.constant 0 : index
    %c0_63 = arith.constant 0 : index
    %56 = vector.load %arg2[%c7, %c0_62, %c0_63] : memref<9x128x128xf32, #tpu.memory_space<vmem>>, vector<1x128x128xf32>
    %57 = vector.shape_cast %56 : vector<1x128x128xf32> to vector<128x128xf32>
    %cst_64 = arith.constant dense<0.000000e+00> : vector<64x128xf32>
    %58 = tpu.matmul %55, %57, %cst_64 {dimension_numbers = #tpu.dot_dimension_numbers<[1], [0], [0], [1], [0, 0, 1, 1], [], []>} : vector<64x128xf32>, vector<128x128xf32>, vector<64x128xf32> -> vector<64x128xf32>
    %59 = arith.addf %52, %58 : vector<64x128xf32>
    %c0_65 = arith.constant 0 : index
    %c0_66 = arith.constant 0 : index
    %c2_67 = arith.constant 2 : index
    %c2_68 = arith.constant 2 : index
    %c0_69 = arith.constant 0 : index
    %60 = vector.load %arg1[%c0_65, %c0_66, %c2_67, %c2_68, %c0_69] : memref<1x1x10x10x128xf32, #tpu.memory_space<vmem>>, vector<1x1x8x8x128xf32>
    %61 = vector.shape_cast %60 : vector<1x1x8x8x128xf32> to vector<8x8x128xf32>
    %62 = vector.shape_cast %61 : vector<8x8x128xf32> to vector<64x128xf32>
    %c8 = arith.constant 8 : index
    %c0_70 = arith.constant 0 : index
    %c0_71 = arith.constant 0 : index
    %63 = vector.load %arg2[%c8, %c0_70, %c0_71] : memref<9x128x128xf32, #tpu.memory_space<vmem>>, vector<1x128x128xf32>
    %64 = vector.shape_cast %63 : vector<1x128x128xf32> to vector<128x128xf32>
    %cst_72 = arith.constant dense<0.000000e+00> : vector<64x128xf32>
    %65 = tpu.matmul %62, %64, %cst_72 {dimension_numbers = #tpu.dot_dimension_numbers<[1], [0], [0], [1], [0, 0, 1, 1], [], []>} : vector<64x128xf32>, vector<128x128xf32>, vector<64x128xf32> -> vector<64x128xf32>
    %66 = arith.addf %59, %65 : vector<64x128xf32>
    %c0_73 = arith.constant 0 : index
    %c0_74 = arith.constant 0 : index
    %c0_75 = arith.constant 0 : index
    %67 = vector.load %arg3[%c0_73, %c0_74, %c0_75] : memref<1x64x128xf32, #tpu.memory_space<vmem>>, vector<1x64x128xf32>
    %68 = vector.shape_cast %67 : vector<1x64x128xf32> to vector<64x128xf32>
    %69 = vector.shape_cast %66 : vector<64x128xf32> to vector<1x64x128xf32>
    tpu.vector_store %arg3[%c0_73, %c0_74, %c0_75], %69 {strides = array<i32>} : memref<1x64x128xf32, #tpu.memory_space<vmem>>, vector<1x64x128xf32>,
    %c0_76 = arith.constant 0 : index
    %c0_77 = arith.constant 0 : index
    %70 = vector.load %arg4[%c0_76, %c0_77] : memref<1x128xf32, #tpu.memory_space<vmem>>, vector<1x128xf32>
    %cst_78 = arith.constant dense<0.000000e+00> : vector<128xf32>
    %71 = vector.multi_reduction <add>, %66, %cst_78 [0] : vector<64x128xf32> to vector<128xf32>
    %72 = vector.shape_cast %71 : vector<128xf32> to vector<1x128xf32>
    %73 = arith.addf %70, %72 : vector<1x128xf32>
    %c0_79 = arith.constant 0 : index
    %c0_80 = arith.constant 0 : index
    %74 = vector.load %arg4[%c0_79, %c0_80] : memref<1x128xf32, #tpu.memory_space<vmem>>, vector<1x128xf32>
    tpu.vector_store %arg4[%c0_79, %c0_80], %73 {strides = array<i32>} : memref<1x128xf32, #tpu.memory_space<vmem>>, vector<1x128xf32>,
    %c0_81 = arith.constant 0 : index
    %c0_82 = arith.constant 0 : index
    %75 = vector.load %arg5[%c0_81, %c0_82] : memref<1x128xf32, #tpu.memory_space<vmem>>, vector<1x128xf32>
    %76 = arith.mulf %66, %66 : vector<64x128xf32>
    %cst_83 = arith.constant dense<0.000000e+00> : vector<128xf32>
    %77 = vector.multi_reduction <add>, %76, %cst_83 [0] : vector<64x128xf32> to vector<128xf32>
    %78 = vector.shape_cast %77 : vector<128xf32> to vector<1x128xf32>
    %79 = arith.addf %75, %78 : vector<1x128xf32>
    %c0_84 = arith.constant 0 : index
    %c0_85 = arith.constant 0 : index
    %80 = vector.load %arg5[%c0_84, %c0_85] : memref<1x128xf32, #tpu.memory_space<vmem>>, vector<1x128xf32>
    tpu.vector_store %arg5[%c0_84, %c0_85], %79 {strides = array<i32>} : memref<1x128xf32, #tpu.memory_space<vmem>>, vector<1x128xf32>,
    return
  }
  func.func @transform_0(%arg0: i32) -> (i32, i32, i32, i32, i32) {
    %c0_i32 = arith.constant 0 : i32
    %c0_i32_0 = arith.constant 0 : i32
    %c0_i32_1 = arith.constant 0 : i32
    %c0_i32_2 = arith.constant 0 : i32
    %c0_i32_3 = arith.constant 0 : i32
    return %arg0, %c0_i32, %c0_i32_0, %c0_i32_1, %c0_i32_2 : i32, i32, i32, i32, i32
  }
  func.func @transform_1(%arg0: i32) -> (i32, i32, i32) {
    %c0_i32 = arith.constant 0 : i32
    %c0_i32_0 = arith.constant 0 : i32
    %c0_i32_1 = arith.constant 0 : i32
    %c0_i32_2 = arith.constant 0 : i32
    return %c0_i32, %c0_i32_0, %c0_i32_1 : i32, i32, i32
  }
  func.func @transform_2(%arg0: i32) -> (i32, i32, i32) {
    %c0_i32 = arith.constant 0 : i32
    %c0_i32_0 = arith.constant 0 : i32
    %c0_i32_1 = arith.constant 0 : i32
    return %arg0, %c0_i32, %c0_i32_0 : i32, i32, i32
  }
  func.func @transform_3(%arg0: i32) -> (i32, i32) {
    %c0_i32 = arith.constant 0 : i32
    %c0_i32_0 = arith.constant 0 : i32
    %c0_i32_1 = arith.constant 0 : i32
    return %c0_i32, %c0_i32_0 : i32, i32
  }
  func.func @transform_4(%arg0: i32) -> (i32, i32) {
    %c0_i32 = arith.constant 0 : i32
    %c0_i32_0 = arith.constant 0 : i32
    %c0_i32_1 = arith.constant 0 : i32
    return %c0_i32, %c0_i32_0 : i32, i32
  }
}

module attributes {stable_mosaic.version = 11 : i64} {
  func.func @_bn_add_relu_kernel(%arg0: i32, %arg1: memref<128x128xf32, #tpu.memory_space<vmem>>, %arg2: memref<128x128xf32, #tpu.memory_space<vmem>>, %arg3: memref<1x128xf32, #tpu.memory_space<vmem>>, %arg4: memref<1x128xf32, #tpu.memory_space<vmem>>, %arg5: memref<1x128xf32, #tpu.memory_space<vmem>>, %arg6: memref<1x128xf32, #tpu.memory_space<vmem>>, %arg7: memref<128x128xf32, #tpu.memory_space<vmem>>) attributes {dimension_semantics = [#tpu.dimension_semantics<parallel>], iteration_bounds = array<i64: 1>, scalar_prefetch = 0 : i64, scratch_operands = 0 : i64, tpu.core_type = #tpu.core_type<tc>, window_params = [{transform_indices = @transform_0, window_bounds = array<i64: 128, 128>}, {transform_indices = @transform_1, window_bounds = array<i64: 128, 128>}, {pipeline_mode = #tpu.pipeline_mode<synchronous>, transform_indices = @transform_2, window_bounds = array<i64: 1, 128>}, {pipeline_mode = #tpu.pipeline_mode<synchronous>, transform_indices = @transform_3, window_bounds = array<i64: 1, 128>}, {pipeline_mode = #tpu.pipeline_mode<synchronous>, transform_indices = @transform_4, window_bounds = array<i64: 1, 128>}, {pipeline_mode = #tpu.pipeline_mode<synchronous>, transform_indices = @transform_5, window_bounds = array<i64: 1, 128>}, {transform_indices = @transform_6, window_bounds = array<i64: 128, 128>}]} {
    %c0 = arith.constant 0 : index
    %c0_0 = arith.constant 0 : index
    %0 = vector.load %arg1[%c0, %c0_0] : memref<128x128xf32, #tpu.memory_space<vmem>>, vector<128x128xf32>
    %c0_1 = arith.constant 0 : index
    %c0_2 = arith.constant 0 : index
    %1 = vector.load %arg3[%c0_1, %c0_2] : memref<1x128xf32, #tpu.memory_space<vmem>>, vector<1x128xf32>
    %2 = vector.broadcast %1 : vector<1x128xf32> to vector<128x128xf32>
    %3 = arith.mulf %0, %2 : vector<128x128xf32>
    %c0_3 = arith.constant 0 : index
    %c0_4 = arith.constant 0 : index
    %4 = vector.load %arg4[%c0_3, %c0_4] : memref<1x128xf32, #tpu.memory_space<vmem>>, vector<1x128xf32>
    %5 = vector.broadcast %4 : vector<1x128xf32> to vector<128x128xf32>
    %6 = arith.addf %3, %5 : vector<128x128xf32>
    %c0_5 = arith.constant 0 : index
    %c0_6 = arith.constant 0 : index
    %7 = vector.load %arg2[%c0_5, %c0_6] : memref<128x128xf32, #tpu.memory_space<vmem>>, vector<128x128xf32>
    %c0_7 = arith.constant 0 : index
    %c0_8 = arith.constant 0 : index
    %8 = vector.load %arg5[%c0_7, %c0_8] : memref<1x128xf32, #tpu.memory_space<vmem>>, vector<1x128xf32>
    %9 = vector.broadcast %8 : vector<1x128xf32> to vector<128x128xf32>
    %10 = arith.mulf %7, %9 : vector<128x128xf32>
    %c0_9 = arith.constant 0 : index
    %c0_10 = arith.constant 0 : index
    %11 = vector.load %arg6[%c0_9, %c0_10] : memref<1x128xf32, #tpu.memory_space<vmem>>, vector<1x128xf32>
    %12 = vector.broadcast %11 : vector<1x128xf32> to vector<128x128xf32>
    %13 = arith.addf %10, %12 : vector<128x128xf32>
    %14 = arith.addf %6, %13 : vector<128x128xf32>
    %cst = arith.constant 0.000000e+00 : f32
    %15 = vector.broadcast %cst : f32 to vector<128x128xf32>
    %16 = arith.maximumf %14, %15 : vector<128x128xf32>
    %c0_11 = arith.constant 0 : index
    %c0_12 = arith.constant 0 : index
    %17 = vector.load %arg7[%c0_11, %c0_12] : memref<128x128xf32, #tpu.memory_space<vmem>>, vector<128x128xf32>
    tpu.vector_store %arg7[%c0_11, %c0_12], %16 {strides = array<i32>} : memref<128x128xf32, #tpu.memory_space<vmem>>, vector<128x128xf32>,
    return
  }
  func.func @transform_0(%arg0: i32) -> (i32, i32) {
    %c0_i32 = arith.constant 0 : i32
    %c0_i32_0 = arith.constant 0 : i32
    return %arg0, %c0_i32 : i32, i32
  }
  func.func @transform_1(%arg0: i32) -> (i32, i32) {
    %c0_i32 = arith.constant 0 : i32
    %c0_i32_0 = arith.constant 0 : i32
    return %arg0, %c0_i32 : i32, i32
  }
  func.func @transform_2(%arg0: i32) -> (i32, i32) {
    %c0_i32 = arith.constant 0 : i32
    %c0_i32_0 = arith.constant 0 : i32
    %c0_i32_1 = arith.constant 0 : i32
    return %c0_i32, %c0_i32_0 : i32, i32
  }
  func.func @transform_3(%arg0: i32) -> (i32, i32) {
    %c0_i32 = arith.constant 0 : i32
    %c0_i32_0 = arith.constant 0 : i32
    %c0_i32_1 = arith.constant 0 : i32
    return %c0_i32, %c0_i32_0 : i32, i32
  }
  func.func @transform_4(%arg0: i32) -> (i32, i32) {
    %c0_i32 = arith.constant 0 : i32
    %c0_i32_0 = arith.constant 0 : i32
    %c0_i32_1 = arith.constant 0 : i32
    return %c0_i32, %c0_i32_0 : i32, i32
  }
  func.func @transform_5(%arg0: i32) -> (i32, i32) {
    %c0_i32 = arith.constant 0 : i32
    %c0_i32_0 = arith.constant 0 : i32
    %c0_i32_1 = arith.constant 0 : i32
    return %c0_i32, %c0_i32_0 : i32, i32
  }
  func.func @transform_6(%arg0: i32) -> (i32, i32) {
    %c0_i32 = arith.constant 0 : i32
    %c0_i32_0 = arith.constant 0 : i32
    return %arg0, %c0_i32 : i32, i32
  }
}

module attributes {stable_mosaic.version = 11 : i64} {
  func.func @_matmul_stats_kernel(%arg0: i32, %arg1: memref<128x4xf32, #tpu.memory_space<vmem>>, %arg2: memref<4x128xf32, #tpu.memory_space<vmem>>, %arg3: memref<128x128xf32, #tpu.memory_space<vmem>>, %arg4: memref<1x128xf32, #tpu.memory_space<vmem>>, %arg5: memref<1x128xf32, #tpu.memory_space<vmem>>) attributes {dimension_semantics = [#tpu.dimension_semantics<arbitrary>], iteration_bounds = array<i64: 1>, scalar_prefetch = 0 : i64, scratch_operands = 0 : i64, tpu.core_type = #tpu.core_type<tc>, window_params = [{transform_indices = @transform_0, window_bounds = array<i64: 128, 4>}, {pipeline_mode = #tpu.pipeline_mode<synchronous>, transform_indices = @transform_1, window_bounds = array<i64: 4, 128>}, {transform_indices = @transform_2, window_bounds = array<i64: 128, 128>}, {pipeline_mode = #tpu.pipeline_mode<synchronous>, transform_indices = @transform_3, window_bounds = array<i64: 1, 128>}, {pipeline_mode = #tpu.pipeline_mode<synchronous>, transform_indices = @transform_4, window_bounds = array<i64: 1, 128>}]} {
    %c0_i32 = arith.constant 0 : i32
    %0 = arith.cmpi eq, %arg0, %c0_i32 : i32
    %1 = arith.extui %0 : i1 to i32
    %c0_i32_0 = arith.constant 0 : i32
    %2 = arith.cmpi ne, %1, %c0_i32_0 : i32
    scf.if %2 {
      %cst_16 = arith.constant 0.000000e+00 : f32
      %18 = vector.broadcast %cst_16 : f32 to vector<1x128xf32>
      %c0_17 = arith.constant 0 : index
      %c0_18 = arith.constant 0 : index
      %19 = vector.load %arg4[%c0_17, %c0_18] : memref<1x128xf32, #tpu.memory_space<vmem>>, vector<1x128xf32>
      tpu.vector_store %arg4[%c0_17, %c0_18], %18 {strides = array<i32>} : memref<1x128xf32, #tpu.memory_space<vmem>>, vector<1x128xf32>,
      %cst_19 = arith.constant 0.000000e+00 : f32
      %20 = vector.broadcast %cst_19 : f32 to vector<1x128xf32>
      %c0_20 = arith.constant 0 : index
      %c0_21 = arith.constant 0 : index
      %21 = vector.load %arg5[%c0_20, %c0_21] : memref<1x128xf32, #tpu.memory_space<vmem>>, vector<1x128xf32>
      tpu.vector_store %arg5[%c0_20, %c0_21], %20 {strides = array<i32>} : memref<1x128xf32, #tpu.memory_space<vmem>>, vector<1x128xf32>,
    } else {
    }
    %c0 = arith.constant 0 : index
    %c0_1 = arith.constant 0 : index
    %3 = vector.load %arg1[%c0, %c0_1] : memref<128x4xf32, #tpu.memory_space<vmem>>, vector<128x4xf32>
    %c0_2 = arith.constant 0 : index
    %c0_3 = arith.constant 0 : index
    %4 = vector.load %arg2[%c0_2, %c0_3] : memref<4x128xf32, #tpu.memory_space<vmem>>, vector<4x128xf32>
    %cst = arith.constant dense<0.000000e+00> : vector<128x128xf32>
    %5 = tpu.matmul %3, %4, %cst {dimension_numbers = #tpu.dot_dimension_numbers<[1], [0], [0], [1], [0, 0, 1, 1], [], []>} : vector<128x4xf32>, vector<4x128xf32>, vector<128x128xf32> -> vector<128x128xf32>
    %c0_4 = arith.constant 0 : index
    %c0_5 = arith.constant 0 : index
    %6 = vector.load %arg3[%c0_4, %c0_5] : memref<128x128xf32, #tpu.memory_space<vmem>>, vector<128x128xf32>
    tpu.vector_store %arg3[%c0_4, %c0_5], %5 {strides = array<i32>} : memref<128x128xf32, #tpu.memory_space<vmem>>, vector<128x128xf32>,
    %c0_6 = arith.constant 0 : index
    %c0_7 = arith.constant 0 : index
    %7 = vector.load %arg4[%c0_6, %c0_7] : memref<1x128xf32, #tpu.memory_space<vmem>>, vector<1x128xf32>
    %cst_8 = arith.constant dense<0.000000e+00> : vector<128xf32>
    %8 = vector.multi_reduction <add>, %5, %cst_8 [0] : vector<128x128xf32> to vector<128xf32>
    %9 = vector.shape_cast %8 : vector<128xf32> to vector<1x128xf32>
    %10 = arith.addf %7, %9 : vector<1x128xf32>
    %c0_9 = arith.constant 0 : index
    %c0_10 = arith.constant 0 : index
    %11 = vector.load %arg4[%c0_9, %c0_10] : memref<1x128xf32, #tpu.memory_space<vmem>>, vector<1x128xf32>
    tpu.vector_store %arg4[%c0_9, %c0_10], %10 {strides = array<i32>} : memref<1x128xf32, #tpu.memory_space<vmem>>, vector<1x128xf32>,
    %c0_11 = arith.constant 0 : index
    %c0_12 = arith.constant 0 : index
    %12 = vector.load %arg5[%c0_11, %c0_12] : memref<1x128xf32, #tpu.memory_space<vmem>>, vector<1x128xf32>
    %13 = arith.mulf %5, %5 : vector<128x128xf32>
    %cst_13 = arith.constant dense<0.000000e+00> : vector<128xf32>
    %14 = vector.multi_reduction <add>, %13, %cst_13 [0] : vector<128x128xf32> to vector<128xf32>
    %15 = vector.shape_cast %14 : vector<128xf32> to vector<1x128xf32>
    %16 = arith.addf %12, %15 : vector<1x128xf32>
    %c0_14 = arith.constant 0 : index
    %c0_15 = arith.constant 0 : index
    %17 = vector.load %arg5[%c0_14, %c0_15] : memref<1x128xf32, #tpu.memory_space<vmem>>, vector<1x128xf32>
    tpu.vector_store %arg5[%c0_14, %c0_15], %16 {strides = array<i32>} : memref<1x128xf32, #tpu.memory_space<vmem>>, vector<1x128xf32>,
    return
  }
  func.func @transform_0(%arg0: i32) -> (i32, i32) {
    %c0_i32 = arith.constant 0 : i32
    %c0_i32_0 = arith.constant 0 : i32
    return %arg0, %c0_i32 : i32, i32
  }
  func.func @transform_1(%arg0: i32) -> (i32, i32) {
    %c0_i32 = arith.constant 0 : i32
    %c0_i32_0 = arith.constant 0 : i32
    %c0_i32_1 = arith.constant 0 : i32
    return %c0_i32, %c0_i32_0 : i32, i32
  }
  func.func @transform_2(%arg0: i32) -> (i32, i32) {
    %c0_i32 = arith.constant 0 : i32
    %c0_i32_0 = arith.constant 0 : i32
    return %arg0, %c0_i32 : i32, i32
  }
  func.func @transform_3(%arg0: i32) -> (i32, i32) {
    %c0_i32 = arith.constant 0 : i32
    %c0_i32_0 = arith.constant 0 : i32
    %c0_i32_1 = arith.constant 0 : i32
    return %c0_i32, %c0_i32_0 : i32, i32
  }
  func.func @transform_4(%arg0: i32) -> (i32, i32) {
    %c0_i32 = arith.constant 0 : i32
    %c0_i32_0 = arith.constant 0 : i32
    %c0_i32_1 = arith.constant 0 : i32
    return %c0_i32, %c0_i32_0 : i32, i32
  }
}

</mosaic_0001>

<llo_original>
// kernel: residual_block_forward.6
$region0: #{residual_block_forward.6}
  #allocation0 [shape = 'u32[]', space=smem, size = 0x4, offset = 0x4, fixed_abs, tag = 'smem constant byte address 0x4 - core index']
  #allocation1 [shape = 'u32[144,128]{1,0:T(1,128)}', space=vmem, size = 0x12000, scoped, tag = 'internal scratch']
  %s0 = inlined_call_operand.vmem [shape: f32[128,128], index: 0, kind: input, shape index: {}]
  %s1 = inlined_call_operand.vmem [shape: f32[1,128], index: 1, kind: input, shape index: {}]
  %s2 = inlined_call_operand.vmem [shape: f32[1,128], index: 2, kind: input, shape index: {}]
  %s3 = inlined_call_operand.vmem [shape: f32[128,128], index: 3, kind: output, shape index: {}]
  %s4 = sld [smem:[#allocation0]]
  $region22: #{residual_block_forward.6} parent=0
    _
  %s6 = ssub.s32 1, %s4
  %s7 = scalar_select 0, %s6, %s4
  // Predicated region
  $region2: #{residual_block_forward.6} parent=0 // pred_check
    _
  $region3: #{residual_block_forward.6} parent=0 // pred_check_branch
    %9 = sbr.rel (0) target = $region5
  $region4: #{residual_block_forward.6} parent=0 // pred_region
    _
  $region5: #{residual_block_forward.6} parent=0 // pred_fallthru
    _
  // Predicated region
  $region6: #{residual_block_forward.6} parent=0 // pred_check
    _
  $region7: #{residual_block_forward.6} parent=0 // pred_check_branch
    %11 = sbr.rel (0) target = $region9
  $region8: #{residual_block_forward.6} parent=0 // pred_region
    _
  $region9: #{residual_block_forward.6} parent=0 // pred_fallthru
    _
  // Predicated region
  $region10: #{residual_block_forward.6} parent=0 // pred_check
    _
  $region11: #{residual_block_forward.6} parent=0 // pred_check_branch
    %13 = sbr.rel (0) target = $region13
  $region12: #{residual_block_forward.6} parent=0 // pred_region
    _
  $region13: #{residual_block_forward.6} parent=0 // pred_fallthru
    _
  %v14 = vld [vmem:[%s0] sm:$0xff]
  %v15 = vld [vmem:[%s0 + $0x8] sm:$0xff]
  %v16 = vld [vmem:[%s0 + $0x10] sm:$0xff]
  %v17 = vld [vmem:[%s0 + $0x18] sm:$0xff]
  %v18 = vld [vmem:[%s0 + $0x20] sm:$0xff]
  %v19 = vld [vmem:[%s0 + $0x28] sm:$0xff]
  %v20 = vld [vmem:[%s0 + $0x30] sm:$0xff]
  %v21 = vld [vmem:[%s0 + $0x38] sm:$0xff]
  %v22 = vld [vmem:[%s0 + $0x40] sm:$0xff]
  %v23 = vld [vmem:[%s0 + $0x48] sm:$0xff]
  %v24 = vld [vmem:[%s0 + $0x50] sm:$0xff]
  %v25 = vld [vmem:[%s0 + $0x58] sm:$0xff]
  %v26 = vld [vmem:[%s0 + $0x60] sm:$0xff]
  %v27 = vld [vmem:[%s0 + $0x68] sm:$0xff]
  %v28 = vld [vmem:[%s0 + $0x70] sm:$0xff]
  %v29 = vld [vmem:[%s0 + $0x78] sm:$0xff]
  %v30 = vld [vmem:[%s1] sm:$0x1]
  %v32 = vlaneseq
  %v33 = vshrl.u32 %v32, 7
  %v34 = vsub.s32 0, %v33
  %v35 = vrot.slane %v30, %v34
  %v37 = vmul.f32 %v14, %v35
  %v38 = vmul.f32 %v15, %v35
  %v39 = vmul.f32 %v16, %v35
  %v40 = vmul.f32 %v17, %v35
  %v41 = vmul.f32 %v18, %v35
  %v42 = vmul.f32 %v19, %v35
  %v43 = vmul.f32 %v20, %v35
  %v44 = vmul.f32 %v21, %v35
  %v45 = vmul.f32 %v22, %v35
  %v46 = vmul.f32 %v23, %v35
  %v47 = vmul.f32 %v24, %v35
  %v48 = vmul.f32 %v25, %v35
  %v49 = vmul.f32 %v26, %v35
  %v50 = vmul.f32 %v27, %v35
  %v51 = vmul.f32 %v28, %v35
  %v52 = vmul.f32 %v29, %v35
  %v53 = vld [vmem:[%s2] sm:$0x1]
  %v55 = vlaneseq
  %v56 = vshrl.u32 %v55, 7
  %v57 = vsub.s32 0, %v56
  %v58 = vrot.slane %v53, %v57
  %v60 = vadd.f32 %v37, %v58
  %v61 = vadd.f32 %v38, %v58
  %v62 = vadd.f32 %v39, %v58
  %v63 = vadd.f32 %v40, %v58
  %v64 = vadd.f32 %v41, %v58
  %v65 = vadd.f32 %v42, %v58
  %v66 = vadd.f32 %v43, %v58
  %v67 = vadd.f32 %v44, %v58
  %v68 = vadd.f32 %v45, %v58
  %v69 = vadd.f32 %v46, %v58
  %v70 = vadd.f32 %v47, %v58
  %v71 = vadd.f32 %v48, %v58
  %v72 = vadd.f32 %v49, %v58
  %v73 = vadd.f32 %v50, %v58
  %v74 = vadd.f32 %v51, %v58
  %v75 = vadd.f32 %v52, %v58
  %v76 = vmax.f32 %v60, 0.0
  %v77 = vmax.f32 %v61, 0.0
  %v78 = vmax.f32 %v62, 0.0
  %v79 = vmax.f32 %v63, 0.0
  %v80 = vmax.f32 %v64, 0.0
  %v81 = vmax.f32 %v65, 0.0
  %v82 = vmax.f32 %v66, 0.0
  %v83 = vmax.f32 %v67, 0.0
  %v84 = vmax.f32 %v68, 0.0
  %v85 = vmax.f32 %v69, 0.0
  %v86 = vmax.f32 %v70, 0.0
  %v87 = vmax.f32 %v71, 0.0
  %v88 = vmax.f32 %v72, 0.0
  %v89 = vmax.f32 %v73, 0.0
  %v90 = vmax.f32 %v74, 0.0
  %v91 = vmax.f32 %v75, 0.0
  %92 = vst [vmem:[%s3] sm:$0xff] %v76
  %93 = vst [vmem:[%s3 + $0x8] sm:$0xff] %v77
  %94 = vst [vmem:[%s3 + $0x10] sm:$0xff] %v78
  %95 = vst [vmem:[%s3 + $0x18] sm:$0xff] %v79
  %96 = vst [vmem:[%s3 + $0x20] sm:$0xff] %v80
  %97 = vst [vmem:[%s3 + $0x28] sm:$0xff] %v81
  %98 = vst [vmem:[%s3 + $0x30] sm:$0xff] %v82
  %99 = vst [vmem:[%s3 + $0x38] sm:$0xff] %v83
  %100 = vst [vmem:[%s3 + $0x40] sm:$0xff] %v84
  %101 = vst [vmem:[%s3 + $0x48] sm:$0xff] %v85
  %102 = vst [vmem:[%s3 + $0x50] sm:$0xff] %v86
  %103 = vst [vmem:[%s3 + $0x58] sm:$0xff] %v87
  %104 = vst [vmem:[%s3 + $0x60] sm:$0xff] %v88
  %105 = vst [vmem:[%s3 + $0x68] sm:$0xff] %v89
  %106 = vst [vmem:[%s3 + $0x70] sm:$0xff] %v90
  %107 = vst [vmem:[%s3 + $0x78] sm:$0xff] %v91
  // Predicated region
  $region14: #{residual_block_forward.6} parent=0 // pred_check
    _
  $region15: #{residual_block_forward.6} parent=0 // pred_check_branch
    %109 = sbr.rel (0) target = $region17
  $region16: #{residual_block_forward.6} parent=0 // pred_region
    _
  $region17: #{residual_block_forward.6} parent=0 // pred_fallthru
    _
  // Predicated region
  $region18: #{residual_block_forward.6} parent=0 // pred_check
    _
  $region19: #{residual_block_forward.6} parent=0 // pred_check_branch
    %111 = sbr.rel (0) target = $region21
  $region20: #{residual_block_forward.6} parent=0 // pred_region
    _
  $region21: #{residual_block_forward.6} parent=0 // pred_fallthru
    _

// kernel: residual_block_forward.5
$region0: #{residual_block_forward.5}
  #allocation0 [shape = 'u32[]', space=smem, size = 0x4, offset = 0x4, fixed_abs, tag = 'smem constant byte address 0x4 - core index']
  #allocation1 [shape = 'u32[144,128]{1,0:T(1,128)}', space=vmem, size = 0x12000, scoped, tag = 'internal scratch']
  %s0 = inlined_call_operand.vmem [shape: f32[2,4,9,9,4], index: 0, kind: input, shape index: {}]
  %s1 = inlined_call_operand.vmem [shape: f32[9,4,128], index: 1, kind: input, shape index: {}]
  %s2 = inlined_call_operand.vmem [shape: f32[2,64,128], index: 2, kind: output, shape index: {0}]
  %s3 = inlined_call_operand.vmem [shape: f32[1,128], index: 3, kind: output, shape index: {1}]
  %s4 = inlined_call_operand.vmem [shape: f32[1,128], index: 4, kind: output, shape index: {2}]
  %5 = xla_tuple %s2, %s3, %s4
  %s6 = sld [smem:[#allocation0]]
  $region61: #{residual_block_forward.5} parent=0
    _
  %s8 = ssub.s32 1, %s6
  %s9 = scalar_select 0, %s8, %s6
  loop: start=0, step=1, limit=4
  $region2: #{residual_block_forward.5} parent=0 // loop_pre_header
    _
  $region3: #{residual_block_forward.5} parent=0 // loop_header
    %s11 = sphi 0, %s15
    %p12 = scmp.ge.s32.totalorder %s11, 4
    %s21 = sphi 0, %s23
    %s24 = sphi 0, %s21
    %s25 = sphi 0, %s24
    %s41 = sphi 0, %s25
    %s45 = sphi 0, %s45
    %s47 = sphi 0, %s45
    %s48 = sphi 0, %s47
    %s62 = sphi 0, %s48
    %s68 = sphi 0, %s70
    %s71 = sphi 0, %s68
    %s72 = sphi 0, %s71
    %s88 = sphi 0, %s72
    %s92 = sphi 0, %s92
    %s94 = sphi 0, %s92
    %s95 = sphi 0, %s94
    %s109 = sphi 0, %s95
    %s113 = sphi 0, %s113
    %s115 = sphi 0, %s113
    %s116 = sphi 0, %s115
    %s130 = sphi 0, %s116
  $region4: #{residual_block_forward.5} parent=0 // loop_header_branch
    %14 = sbr.rel (%p12) target = $region8
  $region5: #{residual_block_forward.5} parent=0 // loop_body
    %s16 = ssub.s32 %s11, 1
    %s17 = ssub.s32 %s11, 2
    %s18 = sadd.s32 %s11, 1
    %s19 = ssub.s32 %s11, %s18
    %p20 = scmp.eq.s32.totalorder %s19, 0
    %s22 = sadd.s32 %s21, 1
    %s23 = scalar_select %p20, %s21, %s22
    %p26 = pneg %p20
    %p27 = scmp.eq.s32.totalorder %s11, 1
    %p28 = por %p26, %p27
    %p29 = scmp.ne.s32.totalorder %s21, %s24
    %p30 = scmp.eq.s32.totalorder %s11, 0
    %p31 = por %p29, %p30
    %p32 = scmp.ne.s32.totalorder %s21, %s24
    %p33 = scmp.eq.s32.totalorder %s16, 1
    %p34 = por %p32, %p33
    %p35 = scmp.ne.s32.totalorder %s24, %s25
    %p36 = scmp.eq.s32.totalorder %s16, 0
    %p37 = por %p35, %p36
    %p38 = scmp.ne.s32.totalorder %s24, %s25
    %p39 = scmp.eq.s32.totalorder %s17, 1
    %p40 = por %p38, %p39
    %p42 = scmp.ne.s32.totalorder %s25, %s41
    %p43 = scmp.eq.s32.totalorder %s17, 0
    %p44 = por %p42, %p43
    %s46 = sadd.s32 %s45, 1
    %p49 = scmp.eq.s32.totalorder %s11, 1
    %p50 = scmp.ne.s32.totalorder %s45, %s47
    %p51 = scmp.eq.s32.totalorder %s11, 0
    %p52 = por %p50, %p51
    %p53 = scmp.ne.s32.totalorder %s45, %s47
    %p54 = scmp.eq.s32.totalorder %s16, 1
    %p55 = por %p53, %p54
    %p56 = scmp.ne.s32.totalorder %s47, %s48
    %p57 = scmp.eq.s32.totalorder %s16, 0
    %p58 = por %p56, %p57
    %p59 = scmp.ne.s32.totalorder %s47, %s48
    %p60 = scmp.eq.s32.totalorder %s17, 1
    %p61 = por %p59, %p60
    %p63 = scmp.ne.s32.totalorder %s48, %s62
    %p64 = scmp.eq.s32.totalorder %s17, 0
    %p65 = por %p63, %p64
    %s66 = ssub.s32 %s11, %s18
    %p67 = scmp.eq.s32.totalorder %s66, 0
    %s69 = sadd.s32 %s68, 1
    %s70 = scalar_select %p67, %s68, %s69
    %p73 = pneg %p67
    %p74 = scmp.eq.s32.totalorder %s11, 1
    %p75 = por %p73, %p74
    %p76 = scmp.ne.s32.totalorder %s68, %s71
    %p77 = scmp.eq.s32.totalorder %s11, 0
    %p78 = por %p76, %p77
    %p79 = scmp.ne.s32.totalorder %s68, %s71
    %p80 = scmp.eq.s32.totalorder %s16, 1
    %p81 = por %p79, %p80
    %p82 = scmp.ne.s32.totalorder %s71, %s72
    %p83 = scmp.eq.s32.totalorder %s16, 0
    %p84 = por %p82, %p83
    %p85 = scmp.ne.s32.totalorder %s71, %s72
    %p86 = scmp.eq.s32.totalorder %s17, 1
    %p87 = por %p85, %p86
    %p89 = scmp.ne.s32.totalorder %s72, %s88
    %p90 = scmp.eq.s32.totalorder %s17, 0
    %p91 = por %p89, %p90
    %s93 = sadd.s32 %s92, 1
    %p96 = scmp.eq.s32.totalorder %s11, 1
    %p97 = scmp.ne.s32.totalorder %s92, %s94
    %p98 = scmp.eq.s32.totalorder %s11, 0
    %p99 = por %p97, %p98
    %p100 = scmp.ne.s32.totalorder %s92, %s94
    %p101 = scmp.eq.s32.totalorder %s16, 1
    %p102 = por %p100, %p101
    %p103 = scmp.ne.s32.totalorder %s94, %s95
    %p104 = scmp.eq.s32.totalorder %s16, 0
    %p105 = por %p103, %p104
    %p106 = scmp.ne.s32.totalorder %s94, %s95
    %p107 = scmp.eq.s32.totalorder %s17, 1
    %p108 = por %p106, %p107
    %p110 = scmp.ne.s32.totalorder %s95, %s109
    %p111 = scmp.eq.s32.totalorder %s17, 0
    %p112 = por %p110, %p111
    %s114 = sadd.s32 %s113, 1
    %p117 = scmp.eq.s32.totalorder %s11, 1
    %p118 = scmp.ne.s32.totalorder %s113, %s115
    %p119 = scmp.eq.s32.totalorder %s11, 0
    %p120 = por %p118, %p119
    %p121 = scmp.ne.s32.totalorder %s113, %s115
    %p122 = scmp.eq.s32.totalorder %s16, 1
    %p123 = por %p121, %p122
    %p124 = scmp.ne.s32.totalorder %s115, %s116
    %p125 = scmp.eq.s32.totalorder %s16, 0
    %p126 = por %p124, %p125
    %p127 = scmp.ne.s32.totalorder %s115, %s116
    %p128 = scmp.eq.s32.totalorder %s17, 1
    %p129 = por %p127, %p128
    %p131 = scmp.ne.s32.totalorder %s116, %s130
    %p132 = scmp.eq.s32.totalorder %s17, 0
    %p133 = por %p131, %p132
    %p134 = scmp.le.s32.totalorder 1, %s11
    %p135 = scmp.lt.s32.totalorder %s11, 3
    %p136 = pnand %p134, %p135
    %p137 = pneg %p136
    // Predicated region
    $region9: #{residual_block_forward.5} parent=5 // pred_check
      _
    $region10: #{residual_block_forward.5} parent=5 // pred_check_branch
      %139 = sbr.rel (%p136) target = $region12
    $region11: #{residual_block_forward.5} parent=5 // pred_region
      %s140 = ssub.s32 %s11, 1
      // Predicated region
      $region13: #{residual_block_forward.5} parent=11 // pred_check
        %p141 = pneg %p58
      $region14: #{residual_block_forward.5} parent=11 // pred_check_branch
        %143 = sbr.rel (%p141) target = $region16
      $region15: #{residual_block_forward.5} parent=11 // pred_region
        _
      $region16: #{residual_block_forward.5} parent=11 // pred_fallthru
        _
    $region12: #{residual_block_forward.5} parent=5 // pred_fallthru
      _
    %p144 = scmp.lt.s32.totalorder %s11, 2
    // Predicated region
    $region17: #{residual_block_forward.5} parent=5 // pred_check
      %p145 = pneg %p144
    $region18: #{residual_block_forward.5} parent=5 // pred_check_branch
      %147 = sbr.rel (%p145) target = $region20
    $region19: #{residual_block_forward.5} parent=5 // pred_region
      // Predicated region
      $region21: #{residual_block_forward.5} parent=19 // pred_check
        %p148 = pneg %p31
      $region22: #{residual_block_forward.5} parent=19 // pred_check_branch
        %150 = sbr.rel (%p148) target = $region24
      $region23: #{residual_block_forward.5} parent=19 // pred_region
        %p151 = scmp.lt.s32.totalorder %s11, 1
        %s152 = scalar_select %p151, %s11, 1
        %s153 = smul.addr %s152, 72
        %s154 = smul.addr %s153, 8
        %s155 = scalar_lea.vmem %s0, %s154
      $region24: #{residual_block_forward.5} parent=19 // pred_fallthru
        _
    $region20: #{residual_block_forward.5} parent=5 // pred_fallthru
      _
    %p156 = scmp.le.s32.totalorder 1, %s11
    %p157 = scmp.lt.s32.totalorder %s11, 3
    %p158 = pnand %p156, %p157
    %p159 = pneg %p158
    // Predicated region
    $region25: #{residual_block_forward.5} parent=5 // pred_check
      _
    $region26: #{residual_block_forward.5} parent=5 // pred_check_branch
      %161 = sbr.rel (%p158) target = $region28
    $region27: #{residual_block_forward.5} parent=5 // pred_region
      %s162 = ssub.s32 %s11, 1
      %p163 = scmp.lt.s32.totalorder %s16, 1
      %s164 = scalar_select %p163, %s16, 1
      %s165 = smul.addr %s164, 72
      %s166 = smul.addr %s165, 8
      %s167 = scalar_lea.vmem %s0, %s166
      %p168 = pneg %p37
      %p169 = pneg %p34
      %p170 = pneg %p58
      %p171 = pneg %p55
      %p172 = pneg %p84
      %p173 = pneg %p81
      %p174 = scmp.lt.s32.totalorder %s16, 1
      %s175 = scalar_select %p174, %s16, 1
      %s176 = smul.addr %s175, 8
      %s177 = smul.addr %s176, 8
      %s178 = scalar_lea.vmem %s2, %s177
      %p179 = pneg %p105
      %p180 = pneg %p102
      %p181 = pneg %p126
      %p182 = pneg %p123
      %p183 = scmp.lt.s32.totalorder %s16, 1
      %s184 = scalar_select %p183, %s16, 1
      %s185 = smul.addr %s184, 72
      %s186 = smul.addr %s185, 8
      %s187 = scalar_lea.vmem %s0, %s186
      %p188 = scmp.lt.s32.totalorder %s16, 1
      %s189 = scalar_select %p188, %s16, 1
      %s190 = smul.addr %s189, 8
      %s191 = smul.addr %s190, 8
      %s192 = scalar_lea.vmem %s2, %s191
      %p193 = scmp.eq.s32.totalorder %s16, 0
      // Predicated region
      $region29: #{residual_block_forward.5} parent=27 // pred_check
        %p194 = pneg %p193
      $region30: #{residual_block_forward.5} parent=27 // pred_check_branch
        %196 = sbr.rel (%p194) target = $region32
      $region31: #{residual_block_forward.5} parent=27 // pred_region
        %197 = vst [vmem:[%s3] sm:$0x1] 0.0
        %198 = vst [vmem:[%s4] sm:$0x1] 0.0
      $region32: #{residual_block_forward.5} parent=27 // pred_fallthru
        _
      %v199 = vld [vmem:[%s187] sm:$0xff]
      %v200 = vld [vmem:[%s187 + $0x10] sm:$0xff]
      %v201 = vld [vmem:[%s187 + $0x20] sm:$0xff]
      %v202 = vld [vmem:[%s187 + $0x30] sm:$0xff]
      %v203 = vld [vmem:[%s187 + $0x40] sm:$0xff]
      %v204 = vld [vmem:[%s187 + $0x50] sm:$0xff]
      %v205 = vld [vmem:[%s187 + $0x60] sm:$0xff]
      %v206 = vld [vmem:[%s187 + $0x70] sm:$0xff]
      %v207 = vld [vmem:[%s1] sm:$0xf]
      %s208 = scalar_lea.vmem %s187, 144
      %v209 = vld [vmem:[%s208] sm:$0xff]
      %v210 = vld [vmem:[%s208 + $0x10] sm:$0xff]
      %v211 = vld [vmem:[%s208 + $0x20] sm:$0xff]
      %v212 = vld [vmem:[%s208 + $0x30] sm:$0xff]
      %v213 = vld [vmem:[%s208 + $0x40] sm:$0xff]
      %v214 = vld [vmem:[%s208 + $0x50] sm:$0xff]
      %v215 = vld [vmem:[%s208 + $0x60] sm:$0xff]
      %v216 = vld [vmem:[%s208 + $0x70] sm:$0xff]
      %s217 = scalar_lea.vmem %s1, 4
      %v218 = vld [vmem:[%s217] sm:$0xf]
      %vm219 = vcmask 31744
      %v221 = vsel %vm219, %v209, 0
      %v224 = vsel %vm219, %v210, 0
      %v227 = vsel %vm219, %v211, 0
      %v230 = vsel %vm219, %v212, 0
      %v233 = vsel %vm219, %v213, 0
      %v236 = vsel %vm219, %v214, 0
      %v239 = vsel %vm219, %v215, 0
      %v242 = vsel %vm219, %v216, 0
      %vm244 = vcmask 1043456
      %v246 = vsel %vm244, %v218, 0
      %248 = vmatprep.subr.mxu0 0.0
      %249 = vmatpush1.msra.mxu0 0.0
      %250 = vmatprep.subr.mxu0 0.0
      %251 = vmatpush1.msra.mxu0 0.0
      %252 = vmatprep.subr.mxu0 0.0
      %253 = vmatpush1.msra.mxu0 0.0
      %254 = vmatprep.subr.mxu0 0.0
      %255 = vmatpush1.msra.mxu0 0.0
      %256 = vmatprep.subr.mxu0 0.0
      %257 = vmatpush1.msra.mxu0 0.0
      %258 = vmatprep.subr.mxu0 0.0
      %259 = vmatpush1.msra.mxu0 0.0
      %260 = vmatprep.subr.mxu0 0.0
      %261 = vmatpush1.msra.mxu0 0.0
      %262 = vmatprep.subr.mxu0 0.0
      %263 = vmatpush1.msra.mxu0 0.0
      %264 = vmatprep.subr.mxu0 0.0
      %265 = vmatpush1.msra.mxu0 0.0
      %266 = vmatprep.subr.mxu0 0.0
      %267 = vmatpush1.msra.mxu0 0.0
      %268 = vmatprep.subr.mxu0 0.0
      %269 = vmatpush1.msra.mxu0 0.0
      %270 = vmatprep.subr.mxu0 0.0
      %271 = vmatpush1.msra.mxu0 0.0
      %272 = vmatprep.subr.mxu0 0.0
      %273 = vmatpush1.msra.mxu0 0.0
      %274 = vmatprep.subr.mxu0 0.0
      %275 = vmatpush1.msra.mxu0 0.0
      %276 = vmatprep.subr.mxu0 0.0
      %277 = vmatpush1.msra.mxu0 0.0
      %278 = vmatprep.subr.mxu0 0.0
      %279 = vmatpush1.msra.mxu0 %v246
      %280 = vmatprep.subr.mxu0 0.0
      %281 = vmatpush2.msra.mxu0 0.0
      %282 = vmatprep.subr.mxu0 0.0
      %283 = vmatpush2.msra.mxu0 0.0
      %284 = vmatprep.subr.mxu0 0.0
      %285 = vmatpush2.msra.mxu0 0.0
      %286 = vmatprep.subr.mxu0 0.0
      %287 = vmatpush2.msra.mxu0 0.0
      %288 = vmatprep.subr.mxu0 0.0
      %289 = vmatpush2.msra.mxu0 0.0
      %290 = vmatprep.subr.mxu0 0.0
      %291 = vmatpush2.msra.mxu0 0.0
      %292 = vmatprep.subr.mxu0 0.0
      %293 = vmatpush2.msra.mxu0 0.0
      %294 = vmatprep.subr.mxu0 0.0
      %295 = vmatpush2.msra.mxu0 0.0
      %296 = vmatprep.subr.mxu0 0.0
      %297 = vmatpush2.msra.mxu0 0.0
      %298 = vmatprep.subr.mxu0 0.0
      %299 = vmatpush2.msra.mxu0 0.0
      %300 = vmatprep.subr.mxu0 0.0
      %301 = vmatpush2.msra.mxu0 0.0
      %302 = vmatprep.subr.mxu0 0.0
      %303 = vmatpush2.msra.mxu0 0.0
      %304 = vmatprep.subr.mxu0 0.0
      %305 = vmatpush2.msra.mxu0 0.0
      %306 = vmatprep.subr.mxu0 0.0
      %307 = vmatpush2.msra.mxu0 0.0
      %308 = vmatprep.subr.mxu0 0.0
      %309 = vmatpush2.msra.mxu0 0.0
      %310 = vmatprep.subr.mxu0 0.0
      %311 = vmatpush2.msra.mxu0 0.0
      %312 = vmatprep.mubr.f32.mxu0 0.0
      %313 = vmatmul.mubr.f32.gmra.mxu0 %v221
      %v314 = vpop.f32.mrf.mxu0
      %v315 = vadd.f32 0.0, %v314
      %v316 = vpop.f32.mrf.mxu0
      %317 = vmatprep.mubr.f32.mxu0 0.0
      %318 = vmatmul.mubr.f32.gmra.mxu0 %v224
      %v319 = vpop.f32.mrf.mxu0
      %v320 = vadd.f32 0.0, %v319
      %v321 = vpop.f32.mrf.mxu0
      %322 = vmatprep.mubr.f32.mxu0 0.0
      %323 = vmatmul.mubr.f32.gmra.mxu0 %v227
      %v324 = vpop.f32.mrf.mxu0
      %v325 = vadd.f32 0.0, %v324
      %v326 = vpop.f32.mrf.mxu0
      %327 = vmatprep.mubr.f32.mxu0 0.0
      %328 = vmatmul.mubr.f32.gmra.mxu0 %v230
      %v329 = vpop.f32.mrf.mxu0
      %v330 = vadd.f32 0.0, %v329
      %v331 = vpop.f32.mrf.mxu0
      %332 = vmatprep.mubr.f32.mxu0 0.0
      %333 = vmatmul.mubr.f32.gmra.mxu0 %v233
      %v334 = vpop.f32.mrf.mxu0
      %v335 = vadd.f32 0.0, %v334
      %v336 = vpop.f32.mrf.mxu0
      %337 = vmatprep.mubr.f32.mxu0 0.0
      %338 = vmatmul.mubr.f32.gmra.mxu0 %v236
      %v339 = vpop.f32.mrf.mxu0
      %v340 = vadd.f32 0.0, %v339
      %v341 = vpop.f32.mrf.mxu0
      %342 = vmatprep.mubr.f32.mxu0 0.0
      %343 = vmatmul.mubr.f32.gmra.mxu0 %v239
      %v344 = vpop.f32.mrf.mxu0
      %v345 = vadd.f32 0.0, %v344
      %v346 = vpop.f32.mrf.mxu0
      %347 = vmatprep.mubr.f32.mxu0 0.0
      %348 = vmatmul.mubr.f32.gmra.mxu0 %v242
      %v349 = vpop.f32.mrf.mxu0
      %v350 = vadd.f32 0.0, %v349
      %v351 = vpop.f32.mrf.mxu0
      %352 = vdwg.mxu0
      %v354 = vsel %vm219, %v199, 0
      %v357 = vsel %vm219, %v200, 0
      %v360 = vsel %vm219, %v201, 0
      %v363 = vsel %vm219, %v202, 0
      %v366 = vsel %vm219, %v203, 0
      %v369 = vsel %vm219, %v204, 0
      %v372 = vsel %vm219, %v205, 0
      %v375 = vsel %vm219, %v206, 0
      %v378 = vsel %vm244, %v207, 0
      %380 = vmatprep.subr.mxu0 0.0
      %381 = vmatpush1.msra.mxu0 0.0
      %382 = vmatprep.subr.mxu0 0.0
      %383 = vmatpush1.msra.mxu0 0.0
      %384 = vmatprep.subr.mxu0 0.0
      %385 = vmatpush1.msra.mxu0 0.0
      %386 = vmatprep.subr.mxu0 0.0
      %387 = vmatpush1.msra.mxu0 0.0
      %388 = vmatprep.subr.mxu0 0.0
      %389 = vmatpush1.msra.mxu0 0.0
      %390 = vmatprep.subr.mxu0 0.0
      %391 = vmatpush1.msra.mxu0 0.0
      %392 = vmatprep.subr.mxu0 0.0
      %393 = vmatpush1.msra.mxu0 0.0
      %394 = vmatprep.subr.mxu0 0.0
      %395 = vmatpush1.msra.mxu0 0.0
      %396 = vmatprep.subr.mxu0 0.0
      %397 = vmatpush1.msra.mxu0 0.0
      %398 = vmatprep.subr.mxu0 0.0
      %399 = vmatpush1.msra.mxu0 0.0
      %400 = vmatprep.subr.mxu0 0.0
      %401 = vmatpush1.msra.mxu0 0.0
      %402 = vmatprep.subr.mxu0 0.0
      %403 = vmatpush1.msra.mxu0 0.0
      %404 = vmatprep.subr.mxu0 0.0
      %405 = vmatpush1.msra.mxu0 0.0
      %406 = vmatprep.subr.mxu0 0.0
      %407 = vmatpush1.msra.mxu0 0.0
      %408 = vmatprep.subr.mxu0 0.0
      %409 = vmatpush1.msra.mxu0 0.0
      %410 = vmatprep.subr.mxu0 0.0
      %411 = vmatpush1.msra.mxu0 %v378
      %412 = vmatprep.subr.mxu0 0.0
      %413 = vmatpush2.msra.mxu0 0.0
      %414 = vmatprep.subr.mxu0 0.0
      %415 = vmatpush2.msra.mxu0 0.0
      %416 = vmatprep.subr.mxu0 0.0
      %417 = vmatpush2.msra.mxu0 0.0
      %418 = vmatprep.subr.mxu0 0.0
      %419 = vmatpush2.msra.mxu0 0.0
      %420 = vmatprep.subr.mxu0 0.0
      %421 = vmatpush2.msra.mxu0 0.0
      %422 = vmatprep.subr.mxu0 0.0
      %423 = vmatpush2.msra.mxu0 0.0
      %424 = vmatprep.subr.mxu0 0.0
      %425 = vmatpush2.msra.mxu0 0.0
      %426 = vmatprep.subr.mxu0 0.0
      %427 = vmatpush2.msra.mxu0 0.0
      %428 = vmatprep.subr.mxu0 0.0
      %429 = vmatpush2.msra.mxu0 0.0
      %430 = vmatprep.subr.mxu0 0.0
      %431 = vmatpush2.msra.mxu0 0.0
      %432 = vmatprep.subr.mxu0 0.0
      %433 = vmatpush2.msra.mxu0 0.0
      %434 = vmatprep.subr.mxu0 0.0
      %435 = vmatpush2.msra.mxu0 0.0
      %436 = vmatprep.subr.mxu0 0.0
      %437 = vmatpush2.msra.mxu0 0.0
      %438 = vmatprep.subr.mxu0 0.0
      %439 = vmatpush2.msra.mxu0 0.0
      %440 = vmatprep.subr.mxu0 0.0
      %441 = vmatpush2.msra.mxu0 0.0
      %442 = vmatprep.subr.mxu0 0.0
      %443 = vmatpush2.msra.mxu0 0.0
      %444 = vmatprep.mubr.f32.mxu0 0.0
      %445 = vmatmul.mubr.f32.gmra.mxu0 %v354
      %v446 = vpop.f32.mrf.mxu0
      %v447 = vadd.f32 %v315, %v446
      %v448 = vpop.f32.mrf.mxu0
      %449 = vmatprep.mubr.f32.mxu0 0.0
      %450 = vmatmul.mubr.f32.gmra.mxu0 %v357
      %v451 = vpop.f32.mrf.mxu0
      %v452 = vadd.f32 %v320, %v451
      %v453 = vpop.f32.mrf.mxu0
      %454 = vmatprep.mubr.f32.mxu0 0.0
      %455 = vmatmul.mubr.f32.gmra.mxu0 %v360
      %v456 = vpop.f32.mrf.mxu0
      %v457 = vadd.f32 %v325, %v456
      %v458 = vpop.f32.mrf.mxu0
      %459 = vmatprep.mubr.f32.mxu0 0.0
      %460 = vmatmul.mubr.f32.gmra.mxu0 %v363
      %v461 = vpop.f32.mrf.mxu0
      %v462 = vadd.f32 %v330, %v461
      %v463 = vpop.f32.mrf.mxu0
      %464 = vmatprep.mubr.f32.mxu0 0.0
      %465 = vmatmul.mubr.f32.gmra.mxu0 %v366
      %v466 = vpop.f32.mrf.mxu0
      %v467 = vadd.f32 %v335, %v466
      %v468 = vpop.f32.mrf.mxu0
      %469 = vmatprep.mubr.f32.mxu0 0.0
      %470 = vmatmul.mubr.f32.gmra.mxu0 %v369
      %v471 = vpop.f32.mrf.mxu0
      %v472 = vadd.f32 %v340, %v471
      %v473 = vpop.f32.mrf.mxu0
      %474 = vmatprep.mubr.f32.mxu0 0.0
      %475 = vmatmul.mubr.f32.gmra.mxu0 %v372
      %v476 = vpop.f32.mrf.mxu0
      %v477 = vadd.f32 %v345, %v476
      %v478 = vpop.f32.mrf.mxu0
      %479 = vmatprep.mubr.f32.mxu0 0.0
      %480 = vmatmul.mubr.f32.gmra.mxu0 %v375
      %v481 = vpop.f32.mrf.mxu0
      %v482 = vadd.f32 %v350, %v481
      %v483 = vpop.f32.mrf.mxu0
      %484 = vdwg.mxu0
      %v485 = vld [vmem:[%s187 + $0x1] sm:$0xff]
      %v486 = vld [vmem:[%s187 + $0x11] sm:$0xff]
      %v487 = vld [vmem:[%s187 + $0x21] sm:$0xff]
      %v488 = vld [vmem:[%s187 + $0x31] sm:$0xff]
      %v489 = vld [vmem:[%s187 + $0x41] sm:$0xff]
      %v490 = vld [vmem:[%s187 + $0x51] sm:$0xff]
      %v491 = vld [vmem:[%s187 + $0x61] sm:$0xff]
      %v492 = vld [vmem:[%s187 + $0x71] sm:$0xff]
      %s493 = scalar_lea.vmem %s1, 8
      %v494 = vld [vmem:[%s493] sm:$0xf]
      %v496 = vsel %vm219, %v485, 0
      %v499 = vsel %vm219, %v486, 0
      %v502 = vsel %vm219, %v487, 0
      %v505 = vsel %vm219, %v488, 0
      %v508 = vsel %vm219, %v489, 0
      %v511 = vsel %vm219, %v490, 0
      %v514 = vsel %vm219, %v491, 0
      %v517 = vsel %vm219, %v492, 0
      %v520 = vsel %vm244, %v494, 0
      %522 = vmatprep.subr.mxu0 0.0
      %523 = vmatpush1.msra.mxu0 0.0
      %524 = vmatprep.subr.mxu0 0.0
      %525 = vmatpush1.msra.mxu0 0.0
      %526 = vmatprep.subr.mxu0 0.0
      %527 = vmatpush1.msra.mxu0 0.0
      %528 = vmatprep.subr.mxu0 0.0
      %529 = vmatpush1.msra.mxu0 0.0
      %530 = vmatprep.subr.mxu0 0.0
      %531 = vmatpush1.msra.mxu0 0.0
      %532 = vmatprep.subr.mxu0 0.0
      %533 = vmatpush1.msra.mxu0 0.0
      %534 = vmatprep.subr.mxu0 0.0
      %535 = vmatpush1.msra.mxu0 0.0
      %536 = vmatprep.subr.mxu0 0.0
      %537 = vmatpush1.msra.mxu0 0.0
      %538 = vmatprep.subr.mxu0 0.0
      %539 = vmatpush1.msra.mxu0 0.0
      %540 = vmatprep.subr.mxu0 0.0
      %541 = vmatpush1.msra.mxu0 0.0
      %542 = vmatprep.subr.mxu0 0.0
      %543 = vmatpush1.msra.mxu0 0.0
      %544 = vmatprep.subr.mxu0 0.0
      %545 = vmatpush1.msra.mxu0 0.0
      %546 = vmatprep.subr.mxu0 0.0
      %547 = vmatpush1.msra.mxu0 0.0
      %548 = vmatprep.subr.mxu0 0.0
      %549 = vmatpush1.msra.mxu0 0.0
      %550 = vmatprep.subr.mxu0 0.0
      %551 = vmatpush1.msra.mxu0 0.0
      %552 = vmatprep.subr.mxu0 0.0
      %553 = vmatpush1.msra.mxu0 %v520
      %554 = vmatprep.subr.mxu0 0.0
      %555 = vmatpush2.msra.mxu0 0.0
      %556 = vmatprep.subr.mxu0 0.0
      %557 = vmatpush2.msra.mxu0 0.0
      %558 = vmatprep.subr.mxu0 0.0
      %559 = vmatpush2.msra.mxu0 0.0
      %560 = vmatprep.subr.mxu0 0.0
      %561 = vmatpush2.msra.mxu0 0.0
      %562 = vmatprep.subr.mxu0 0.0
      %563 = vmatpush2.msra.mxu0 0.0
      %564 = vmatprep.subr.mxu0 0.0
      %565 = vmatpush2.msra.mxu0 0.0
      %566 = vmatprep.subr.mxu0 0.0
      %567 = vmatpush2.msra.mxu0 0.0
      %568 = vmatprep.subr.mxu0 0.0
      %569 = vmatpush2.msra.mxu0 0.0
      %570 = vmatprep.subr.mxu0 0.0
      %571 = vmatpush2.msra.mxu0 0.0
      %572 = vmatprep.subr.mxu0 0.0
      %573 = vmatpush2.msra.mxu0 0.0
      %574 = vmatprep.subr.mxu0 0.0
      %575 = vmatpush2.msra.mxu0 0.0
      %576 = vmatprep.subr.mxu0 0.0
      %577 = vmatpush2.msra.mxu0 0.0
      %578 = vmatprep.subr.mxu0 0.0
      %579 = vmatpush2.msra.mxu0 0.0
      %580 = vmatprep.subr.mxu0 0.0
      %581 = vmatpush2.msra.mxu0 0.0
      %582 = vmatprep.subr.mxu0 0.0
      %583 = vmatpush2.msra.mxu0 0.0
      %584 = vmatprep.subr.mxu0 0.0
      %585 = vmatpush2.msra.mxu0 0.0
      %586 = vmatprep.mubr.f32.mxu0 0.0
      %587 = vmatmul.mubr.f32.gmra.mxu0 %v496
      %v588 = vpop.f32.mrf.mxu0
      %v589 = vadd.f32 0.0, %v588
      %v590 = vpop.f32.mrf.mxu0
      %591 = vmatprep.mubr.f32.mxu0 0.0
      %592 = vmatmul.mubr.f32.gmra.mxu0 %v499
      %v593 = vpop.f32.mrf.mxu0
      %v594 = vadd.f32 0.0, %v593
      %v595 = vpop.f32.mrf.mxu0
      %596 = vmatprep.mubr.f32.mxu0 0.0
      %597 = vmatmul.mubr.f32.gmra.mxu0 %v502
      %v598 = vpop.f32.mrf.mxu0
      %v599 = vadd.f32 0.0, %v598
      %v600 = vpop.f32.mrf.mxu0
      %601 = vmatprep.mubr.f32.mxu0 0.0
      %602 = vmatmul.mubr.f32.gmra.mxu0 %v505
      %v603 = vpop.f32.mrf.mxu0
      %v604 = vadd.f32 0.0, %v603
      %v605 = vpop.f32.mrf.mxu0
      %606 = vmatprep.mubr.f32.mxu0 0.0
      %607 = vmatmul.mubr.f32.gmra.mxu0 %v508
      %v608 = vpop.f32.mrf.mxu0
      %v609 = vadd.f32 0.0, %v608
      %v610 = vpop.f32.mrf.mxu0
      %611 = vmatprep.mubr.f32.mxu0 0.0
      %612 = vmatmul.mubr.f32.gmra.mxu0 %v511
      %v613 = vpop.f32.mrf.mxu0
      %v614 = vadd.f32 0.0, %v613
      %v615 = vpop.f32.mrf.mxu0
      %616 = vmatprep.mubr.f32.mxu0 0.0
      %617 = vmatmul.mubr.f32.gmra.mxu0 %v514
      %v618 = vpop.f32.mrf.mxu0
      %v619 = vadd.f32 0.0, %v618
      %v620 = vpop.f32.mrf.mxu0
      %621 = vmatprep.mubr.f32.mxu0 0.0
      %622 = vmatmul.mubr.f32.gmra.mxu0 %v517
      %v623 = vpop.f32.mrf.mxu0
      %v624 = vadd.f32 0.0, %v623
      %v625 = vpop.f32.mrf.mxu0
      %626 = vdwg.mxu0
      %v627 = vadd.f32 %v447, %v589
      %v628 = vadd.f32 %v452, %v594
      %v629 = vadd.f32 %v457, %v599
      %v630 = vadd.f32 %v462, %v604
      %v631 = vadd.f32 %v467, %v609
      %v632 = vadd.f32 %v472, %v614
      %v633 = vadd.f32 %v477, %v619
      %v634 = vadd.f32 %v482, %v624
      %s635 = scalar_lea.vmem %s187, 288
      %v636 = vld [vmem:[%s635] sm:$0xff]
      %v637 = vld [vmem:[%s635 + $0x10] sm:$0xff]
      %v638 = vld [vmem:[%s635 + $0x20] sm:$0xff]
      %v639 = vld [vmem:[%s635 + $0x30] sm:$0xff]
      %v640 = vld [vmem:[%s635 + $0x40] sm:$0xff]
      %v641 = vld [vmem:[%s635 + $0x50] sm:$0xff]
      %v642 = vld [vmem:[%s635 + $0x60] sm:$0xff]
      %v643 = vld [vmem:[%s635 + $0x70] sm:$0xff]
      %s644 = scalar_lea.vmem %s1, 12
      %v645 = vld [vmem:[%s644] sm:$0xf]
      %v647 = vsel %vm219, %v636, 0
      %v650 = vsel %vm219, %v637, 0
      %v653 = vsel %vm219, %v638, 0
      %v656 = vsel %vm219, %v639, 0
      %v659 = vsel %vm219, %v640, 0
      %v662 = vsel %vm219, %v641, 0
      %v665 = vsel %vm219, %v642, 0
      %v668 = vsel %vm219, %v643, 0
      %v671 = vsel %vm244, %v645, 0
      %673 = vmatprep.subr.mxu0 0.0
      %674 = vmatpush1.msra.mxu0 0.0
      %675 = vmatprep.subr.mxu0 0.0
      %676 = vmatpush1.msra.mxu0 0.0
      %677 = vmatprep.subr.mxu0 0.0
      %678 = vmatpush1.msra.mxu0 0.0
      %679 = vmatprep.subr.mxu0 0.0
      %680 = vmatpush1.msra.mxu0 0.0
      %681 = vmatprep.subr.mxu0 0.0
      %682 = vmatpush1.msra.mxu0 0.0
      %683 = vmatprep.subr.mxu0 0.0
      %684 = vmatpush1.msra.mxu0 0.0
      %685 = vmatprep.subr.mxu0 0.0
      %686 = vmatpush1.msra.mxu0 0.0
      %687 = vmatprep.subr.mxu0 0.0
      %688 = vmatpush1.msra.mxu0 0.0
      %689 = vmatprep.subr.mxu0 0.0
      %690 = vmatpush1.msra.mxu0 0.0
      %691 = vmatprep.subr.mxu0 0.0
      %692 = vmatpush1.msra.mxu0 0.0
      %693 = vmatprep.subr.mxu0 0.0
      %694 = vmatpush1.msra.mxu0 0.0
      %695 = vmatprep.subr.mxu0 0.0
      %696 = vmatpush1.msra.mxu0 0.0
      %697 = vmatprep.subr.mxu0 0.0
      %698 = vmatpush1.msra.mxu0 0.0
      %699 = vmatprep.subr.mxu0 0.0
      %700 = vmatpush1.msra.mxu0 0.0
      %701 = vmatprep.subr.mxu0 0.0
      %702 = vmatpush1.msra.mxu0 0.0
      %703 = vmatprep.subr.mxu0 0.0
      %704 = vmatpush1.msra.mxu0 %v671
      %705 = vmatprep.subr.mxu0 0.0
      %706 = vmatpush2.msra.mxu0 0.0
      %707 = vmatprep.subr.mxu0 0.0
      %708 = vmatpush2.msra.mxu0 0.0
      %709 = vmatprep.subr.mxu0 0.0
      %710 = vmatpush2.msra.mxu0 0.0
      %711 = vmatprep.subr.mxu0 0.0
      %712 = vmatpush2.msra.mxu0 0.0
      %713 = vmatprep.subr.mxu0 0.0
      %714 = vmatpush2.msra.mxu0 0.0
      %715 = vmatprep.subr.mxu0 0.0
      %716 = vmatpush2.msra.mxu0 0.0
      %717 = vmatprep.subr.mxu0 0.0
      %718 = vmatpush2.msra.mxu0 0.0
      %719 = vmatprep.subr.mxu0 0.0
      %720 = vmatpush2.msra.mxu0 0.0
      %721 = vmatprep.subr.mxu0 0.0
      %722 = vmatpush2.msra.mxu0 0.0
      %723 = vmatprep.subr.mxu0 0.0
      %724 = vmatpush2.msra.mxu0 0.0
      %725 = vmatprep.subr.mxu0 0.0
      %726 = vmatpush2.msra.mxu0 0.0
      %727 = vmatprep.subr.mxu0 0.0
      %728 = vmatpush2.msra.mxu0 0.0
      %729 = vmatprep.subr.mxu0 0.0
      %730 = vmatpush2.msra.mxu0 0.0
      %731 = vmatprep.subr.mxu0 0.0
      %732 = vmatpush2.msra.mxu0 0.0
      %733 = vmatprep.subr.mxu0 0.0
      %734 = vmatpush2.msra.mxu0 0.0
      %735 = vmatprep.subr.mxu0 0.0
      %736 = vmatpush2.msra.mxu0 0.0
      %737 = vmatprep.mubr.f32.mxu0 0.0
      %738 = vmatmul.mubr.f32.gmra.mxu0 %v647
      %v739 = vpop.f32.mrf.mxu0
      %v740 = vadd.f32 0.0, %v739
      %v741 = vpop.f32.mrf.mxu0
      %742 = vmatprep.mubr.f32.mxu0 0.0
      %743 = vmatmul.mubr.f32.gmra.mxu0 %v650
      %v744 = vpop.f32.mrf.mxu0
      %v745 = vadd.f32 0.0, %v744
      %v746 = vpop.f32.mrf.mxu0
      %747 = vmatprep.mubr.f32.mxu0 0.0
      %748 = vmatmul.mubr.f32.gmra.mxu0 %v653
      %v749 = vpop.f32.mrf.mxu0
      %v750 = vadd.f32 0.0, %v749
      %v751 = vpop.f32.mrf.mxu0
      %752 = vmatprep.mubr.f32.mxu0 0.0
      %753 = vmatmul.mubr.f32.gmra.mxu0 %v656
      %v754 = vpop.f32.mrf.mxu0
      %v755 = vadd.f32 0.0, %v754
      %v756 = vpop.f32.mrf.mxu0
      %757 = vmatprep.mubr.f32.mxu0 0.0
      %758 = vmatmul.mubr.f32.gmra.mxu0 %v659
      %v759 = vpop.f32.mrf.mxu0
      %v760 = vadd.f32 0.0, %v759
      %v761 = vpop.f32.mrf.mxu0
      %762 = vmatprep.mubr.f32.mxu0 0.0
      %763 = vmatmul.mubr.f32.gmra.mxu0 %v662
      %v764 = vpop.f32.mrf.mxu0
      %v765 = vadd.f32 0.0, %v764
      %v766 = vpop.f32.mrf.mxu0
      %767 = vmatprep.mubr.f32.mxu0 0.0
      %768 = vmatmul.mubr.f32.gmra.mxu0 %v665
      %v769 = vpop.f32.mrf.mxu0
      %v770 = vadd.f32 0.0, %v769
      %v771 = vpop.f32.mrf.mxu0
      %772 = vmatprep.mubr.f32.mxu0 0.0
      %773 = vmatmul.mubr.f32.gmra.mxu0 %v668
      %v774 = vpop.f32.mrf.mxu0
      %v775 = vadd.f32 0.0, %v774
      %v776 = vpop.f32.mrf.mxu0
      %777 = vdwg.mxu0
      %v778 = vadd.f32 %v627, %v740
      %v779 = vadd.f32 %v628, %v745
      %v780 = vadd.f32 %v629, %v750
      %v781 = vadd.f32 %v630, %v755
      %v782 = vadd.f32 %v631, %v760
      %v783 = vadd.f32 %v632, %v765
      %v784 = vadd.f32 %v633, %v770
      %v785 = vadd.f32 %v634, %v775
      %s786 = scalar_lea.vmem %s187, 432
      %v787 = vld [vmem:[%s786] sm:$0xff]
      %v788 = vld [vmem:[%s786 + $0x10] sm:$0xff]
      %v789 = vld [vmem:[%s786 + $0x20] sm:$0xff]
      %v790 = vld [vmem:[%s786 + $0x30] sm:$0xff]
      %v791 = vld [vmem:[%s786 + $0x40] sm:$0xff]
      %v792 = vld [vmem:[%s786 + $0x50] sm:$0xff]
      %v793 = vld [vmem:[%s786 + $0x60] sm:$0xff]
      %v794 = vld [vmem:[%s786 + $0x70] sm:$0xff]
      %s795 = scalar_lea.vmem %s1, 16
      %v796 = vld [vmem:[%s795] sm:$0xf]
      %v798 = vsel %vm219, %v787, 0
      %v801 = vsel %vm219, %v788, 0
      %v804 = vsel %vm219, %v789, 0
      %v807 = vsel %vm219, %v790, 0
      %v810 = vsel %vm219, %v791, 0
      %v813 = vsel %vm219, %v792, 0
      %v816 = vsel %vm219, %v793, 0
      %v819 = vsel %vm219, %v794, 0
      %v822 = vsel %vm244, %v796, 0
      %824 = vmatprep.subr.mxu0 0.0
      %825 = vmatpush1.msra.mxu0 0.0
      %826 = vmatprep.subr.mxu0 0.0
      %827 = vmatpush1.msra.mxu0 0.0
      %828 = vmatprep.subr.mxu0 0.0
      %829 = vmatpush1.msra.mxu0 0.0
      %830 = vmatprep.subr.mxu0 0.0
      %831 = vmatpush1.msra.mxu0 0.0
      %832 = vmatprep.subr.mxu0 0.0
      %833 = vmatpush1.msra.mxu0 0.0
      %834 = vmatprep.subr.mxu0 0.0
      %835 = vmatpush1.msra.mxu0 0.0
      %836 = vmatprep.subr.mxu0 0.0
      %837 = vmatpush1.msra.mxu0 0.0
      %838 = vmatprep.subr.mxu0 0.0
      %839 = vmatpush1.msra.mxu0 0.0
      %840 = vmatprep.subr.mxu0 0.0
      %841 = vmatpush1.msra.mxu0 0.0
      %842 = vmatprep.subr.mxu0 0.0
      %843 = vmatpush1.msra.mxu0 0.0
      %844 = vmatprep.subr.mxu0 0.0
      %845 = vmatpush1.msra.mxu0 0.0
      %846 = vmatprep.subr.mxu0 0.0
      %847 = vmatpush1.msra.mxu0 0.0
      %848 = vmatprep.subr.mxu0 0.0
      %849 = vmatpush1.msra.mxu0 0.0
      %850 = vmatprep.subr.mxu0 0.0
      %851 = vmatpush1.msra.mxu0 0.0
      %852 = vmatprep.subr.mxu0 0.0
      %853 = vmatpush1.msra.mxu0 0.0
      %854 = vmatprep.subr.mxu0 0.0
      %855 = vmatpush1.msra.mxu0 %v822
      %856 = vmatprep.subr.mxu0 0.0
      %857 = vmatpush2.msra.mxu0 0.0
      %858 = vmatprep.subr.mxu0 0.0
      %859 = vmatpush2.msra.mxu0 0.0
      %860 = vmatprep.subr.mxu0 0.0
      %861 = vmatpush2.msra.mxu0 0.0
      %862 = vmatprep.subr.mxu0 0.0
      %863 = vmatpush2.msra.mxu0 0.0
      %864 = vmatprep.subr.mxu0 0.0
      %865 = vmatpush2.msra.mxu0 0.0
      %866 = vmatprep.subr.mxu0 0.0
      %867 = vmatpush2.msra.mxu0 0.0
      %868 = vmatprep.subr.mxu0 0.0
      %869 = vmatpush2.msra.mxu0 0.0
      %870 = vmatprep.subr.mxu0 0.0
      %871 = vmatpush2.msra.mxu0 0.0
      %872 = vmatprep.subr.mxu0 0.0
      %873 = vmatpush2.msra.mxu0 0.0
      %874 = vmatprep.subr.mxu0 0.0
      %875 = vmatpush2.msra.mxu0 0.0
      %876 = vmatprep.subr.mxu0 0.0
      %877 = vmatpush2.msra.mxu0 0.0
      %878 = vmatprep.subr.mxu0 0.0
      %879 = vmatpush2.msra.mxu0 0.0
      %880 = vmatprep.subr.mxu0 0.0
      %881 = vmatpush2.msra.mxu0 0.0
      %882 = vmatprep.subr.mxu0 0.0
      %883 = vmatpush2.msra.mxu0 0.0
      %884 = vmatprep.subr.mxu0 0.0
      %885 = vmatpush2.msra.mxu0 0.0
      %886 = vmatprep.subr.mxu0 0.0
      %887 = vmatpush2.msra.mxu0 0.0
      %888 = vmatprep.mubr.f32.mxu0 0.0
      %889 = vmatmul.mubr.f32.gmra.mxu0 %v798
      %v890 = vpop.f32.mrf.mxu0
      %v891 = vadd.f32 0.0, %v890
      %v892 = vpop.f32.mrf.mxu0
      %893 = vmatprep.mubr.f32.mxu0 0.0
      %894 = vmatmul.mubr.f32.gmra.mxu0 %v801
      %v895 = vpop.f32.mrf.mxu0
      %v896 = vadd.f32 0.0, %v895
      %v897 = vpop.f32.mrf.mxu0
      %898 = vmatprep.mubr.f32.mxu0 0.0
      %899 = vmatmul.mubr.f32.gmra.mxu0 %v804
      %v900 = vpop.f32.mrf.mxu0
      %v901 = vadd.f32 0.0, %v900
      %v902 = vpop.f32.mrf.mxu0
      %903 = vmatprep.mubr.f32.mxu0 0.0
      %904 = vmatmul.mubr.f32.gmra.mxu0 %v807
      %v905 = vpop.f32.mrf.mxu0
      %v906 = vadd.f32 0.0, %v905
      %v907 = vpop.f32.mrf.mxu0
      %908 = vmatprep.mubr.f32.mxu0 0.0
      %909 = vmatmul.mubr.f32.gmra.mxu0 %v810
      %v910 = vpop.f32.mrf.mxu0
      %v911 = vadd.f32 0.0, %v910
      %v912 = vpop.f32.mrf.mxu0
      %913 = vmatprep.mubr.f32.mxu0 0.0
      %914 = vmatmul.mubr.f32.gmra.mxu0 %v813
      %v915 = vpop.f32.mrf.mxu0
      %v916 = vadd.f32 0.0, %v915
      %v917 = vpop.f32.mrf.mxu0
      %918 = vmatprep.mubr.f32.mxu0 0.0
      %919 = vmatmul.mubr.f32.gmra.mxu0 %v816
      %v920 = vpop.f32.mrf.mxu0
      %v921 = vadd.f32 0.0, %v920
      %v922 = vpop.f32.mrf.mxu0
      %923 = vmatprep.mubr.f32.mxu0 0.0
      %924 = vmatmul.mubr.f32.gmra.mxu0 %v819
      %v925 = vpop.f32.mrf.mxu0
      %v926 = vadd.f32 0.0, %v925
      %v927 = vpop.f32.mrf.mxu0
      %928 = vdwg.mxu0
      %v929 = vadd.f32 %v778, %v891
      %v930 = vadd.f32 %v779, %v896
      %v931 = vadd.f32 %v780, %v901
      %v932 = vadd.f32 %v781, %v906
      %v933 = vadd.f32 %v782, %v911
      %v934 = vadd.f32 %v783, %v916
      %v935 = vadd.f32 %v784, %v921
      %v936 = vadd.f32 %v785, %v926
      %v937 = vld [vmem:[%s635 + $0x1] sm:$0xff]
      %v938 = vld [vmem:[%s635 + $0x11] sm:$0xff]
      %v939 = vld [vmem:[%s635 + $0x21] sm:$0xff]
      %v940 = vld [vmem:[%s635 + $0x31] sm:$0xff]
      %v941 = vld [vmem:[%s635 + $0x41] sm:$0xff]
      %v942 = vld [vmem:[%s635 + $0x51] sm:$0xff]
      %v943 = vld [vmem:[%s635 + $0x61] sm:$0xff]
      %v944 = vld [vmem:[%s635 + $0x71] sm:$0xff]
      %s945 = scalar_lea.vmem %s1, 20
      %v946 = vld [vmem:[%s945] sm:$0xf]
      %v948 = vsel %vm219, %v937, 0
      %v951 = vsel %vm219, %v938, 0
      %v954 = vsel %vm219, %v939, 0
      %v957 = vsel %vm219, %v940, 0
      %v960 = vsel %vm219, %v941, 0
      %v963 = vsel %vm219, %v942, 0
      %v966 = vsel %vm219, %v943, 0
      %v969 = vsel %vm219, %v944, 0
      %v972 = vsel %vm244, %v946, 0
      %974 = vmatprep.subr.mxu0 0.0
      %975 = vmatpush1.msra.mxu0 0.0
      %976 = vmatprep.subr.mxu0 0.0
      %977 = vmatpush1.msra.mxu0 0.0
      %978 = vmatprep.subr.mxu0 0.0
      %979 = vmatpush1.msra.mxu0 0.0
      %980 = vmatprep.subr.mxu0 0.0
      %981 = vmatpush1.msra.mxu0 0.0
      %982 = vmatprep.subr.mxu0 0.0
      %983 = vmatpush1.msra.mxu0 0.0
      %984 = vmatprep.subr.mxu0 0.0
      %985 = vmatpush1.msra.mxu0 0.0
      %986 = vmatprep.subr.mxu0 0.0
      %987 = vmatpush1.msra.mxu0 0.0
      %988 = vmatprep.subr.mxu0 0.0
      %989 = vmatpush1.msra.mxu0 0.0
      %990 = vmatprep.subr.mxu0 0.0
      %991 = vmatpush1.msra.mxu0 0.0
      %992 = vmatprep.subr.mxu0 0.0
      %993 = vmatpush1.msra.mxu0 0.0
      %994 = vmatprep.subr.mxu0 0.0
      %995 = vmatpush1.msra.mxu0 0.0
      %996 = vmatprep.subr.mxu0 0.0
      %997 = vmatpush1.msra.mxu0 0.0
      %998 = vmatprep.subr.mxu0 0.0
      %999 = vmatpush1.msra.mxu0 0.0
      %1000 = vmatprep.subr.mxu0 0.0
      %1001 = vmatpush1.msra.mxu0 0.0
      %1002 = vmatprep.subr.mxu0 0.0
      %1003 = vmatpush1.msra.mxu0 0.0
      %1004 = vmatprep.subr.mxu0 0.0
      %1005 = vmatpush1.msra.mxu0 %v972
      %1006 = vmatprep.subr.mxu0 0.0
      %1007 = vmatpush2.msra.mxu0 0.0
      %1008 = vmatprep.subr.mxu0 0.0
      %1009 = vmatpush2.msra.mxu0 0.0
      %1010 = vmatprep.subr.mxu0 0.0
      %1011 = vmatpush2.msra.mxu0 0.0
      %1012 = vmatprep.subr.mxu0 0.0
      %1013 = vmatpush2.msra.mxu0 0.0
      %1014 = vmatprep.subr.mxu0 0.0
      %1015 = vmatpush2.msra.mxu0 0.0
      %1016 = vmatprep.subr.mxu0 0.0
      %1017 = vmatpush2.msra.mxu0 0.0
      %1018 = vmatprep.subr.mxu0 0.0
      %1019 = vmatpush2.msra.mxu0 0.0
      %1020 = vmatprep.subr.mxu0 0.0
      %1021 = vmatpush2.msra.mxu0 0.0
      %1022 = vmatprep.subr.mxu0 0.0
      %1023 = vmatpush2.msra.mxu0 0.0
      %1024 = vmatprep.subr.mxu0 0.0
      %1025 = vmatpush2.msra.mxu0 0.0
      %1026 = vmatprep.subr.mxu0 0.0
      %1027 = vmatpush2.msra.mxu0 0.0
      %1028 = vmatprep.subr.mxu0 0.0
      %1029 = vmatpush2.msra.mxu0 0.0
      %1030 = vmatprep.subr.mxu0 0.0
      %1031 = vmatpush2.msra.mxu0 0.0
      %1032 = vmatprep.subr.mxu0 0.0
      %1033 = vmatpush2.msra.mxu0 0.0
      %1034 = vmatprep.subr.mxu0 0.0
      %1035 = vmatpush2.msra.mxu0 0.0
      %1036 = vmatprep.subr.mxu0 0.0
      %1037 = vmatpush2.msra.mxu0 0.0
      %1038 = vmatprep.mubr.f32.mxu0 0.0
      %1039 = vmatmul.mubr.f32.gmra.mxu0 %v948
      %v1040 = vpop.f32.mrf.mxu0
      %v1041 = vadd.f32 0.0, %v1040
      %v1042 = vpop.f32.mrf.mxu0
      %1043 = vmatprep.mubr.f32.mxu0 0.0
      %1044 = vmatmul.mubr.f32.gmra.mxu0 %v951
      %v1045 = vpop.f32.mrf.mxu0
      %v1046 = vadd.f32 0.0, %v1045
      %v1047 = vpop.f32.mrf.mxu0
      %1048 = vmatprep.mubr.f32.mxu0 0.0
      %1049 = vmatmul.mubr.f32.gmra.mxu0 %v954
      %v1050 = vpop.f32.mrf.mxu0
      %v1051 = vadd.f32 0.0, %v1050
      %v1052 = vpop.f32.mrf.mxu0
      %1053 = vmatprep.mubr.f32.mxu0 0.0
      %1054 = vmatmul.mubr.f32.gmra.mxu0 %v957
      %v1055 = vpop.f32.mrf.mxu0
      %v1056 = vadd.f32 0.0, %v1055
      %v1057 = vpop.f32.mrf.mxu0
      %1058 = vmatprep.mubr.f32.mxu0 0.0
      %1059 = vmatmul.mubr.f32.gmra.mxu0 %v960
      %v1060 = vpop.f32.mrf.mxu0
      %v1061 = vadd.f32 0.0, %v1060
      %v1062 = vpop.f32.mrf.mxu0
      %1063 = vmatprep.mubr.f32.mxu0 0.0
      %1064 = vmatmul.mubr.f32.gmra.mxu0 %v963
      %v1065 = vpop.f32.mrf.mxu0
      %v1066 = vadd.f32 0.0, %v1065
      %v1067 = vpop.f32.mrf.mxu0
      %1068 = vmatprep.mubr.f32.mxu0 0.0
      %1069 = vmatmul.mubr.f32.gmra.mxu0 %v966
      %v1070 = vpop.f32.mrf.mxu0
      %v1071 = vadd.f32 0.0, %v1070
      %v1072 = vpop.f32.mrf.mxu0
      %1073 = vmatprep.mubr.f32.mxu0 0.0
      %1074 = vmatmul.mubr.f32.gmra.mxu0 %v969
      %v1075 = vpop.f32.mrf.mxu0
      %v1076 = vadd.f32 0.0, %v1075
      %v1077 = vpop.f32.mrf.mxu0
      %1078 = vdwg.mxu0
      %v1079 = vadd.f32 %v929, %v1041
      %v1080 = vadd.f32 %v930, %v1046
      %v1081 = vadd.f32 %v931, %v1051
      %v1082 = vadd.f32 %v932, %v1056
      %v1083 = vadd.f32 %v933, %v1061
      %v1084 = vadd.f32 %v934, %v1066
      %v1085 = vadd.f32 %v935, %v1071
      %v1086 = vadd.f32 %v936, %v1076
      %s1087 = scalar_lea.vmem %s187, 16
      %v1088 = vld [vmem:[%s1087] sm:$0xff]
      %v1089 = vld [vmem:[%s1087 + $0x10] sm:$0xff]
      %v1090 = vld [vmem:[%s1087 + $0x20] sm:$0xff]
      %v1091 = vld [vmem:[%s1087 + $0x30] sm:$0xff]
      %v1092 = vld [vmem:[%s1087 + $0x40] sm:$0xff]
      %v1093 = vld [vmem:[%s1087 + $0x50] sm:$0xff]
      %v1094 = vld [vmem:[%s1087 + $0x60] sm:$0xff]
      %v1095 = vld [vmem:[%s1087 + $0x70] sm:$0xff]
      %s1096 = scalar_lea.vmem %s1, 24
      %v1097 = vld [vmem:[%s1096] sm:$0xf]
      %v1099 = vsel %vm219, %v1088, 0
      %v1102 = vsel %vm219, %v1089, 0
      %v1105 = vsel %vm219, %v1090, 0
      %v1108 = vsel %vm219, %v1091, 0
      %v1111 = vsel %vm219, %v1092, 0
      %v1114 = vsel %vm219, %v1093, 0
      %v1117 = vsel %vm219, %v1094, 0
      %v1120 = vsel %vm219, %v1095, 0
      %v1123 = vsel %vm244, %v1097, 0
      %1125 = vmatprep.subr.mxu0 0.0
      %1126 = vmatpush1.msra.mxu0 0.0
      %1127 = vmatprep.subr.mxu0 0.0
      %1128 = vmatpush1.msra.mxu0 0.0
      %1129 = vmatprep.subr.mxu0 0.0
      %1130 = vmatpush1.msra.mxu0 0.0
      %1131 = vmatprep.subr.mxu0 0.0
      %1132 = vmatpush1.msra.mxu0 0.0
      %1133 = vmatprep.subr.mxu0 0.0
      %1134 = vmatpush1.msra.mxu0 0.0
      %1135 = vmatprep.subr.mxu0 0.0
      %1136 = vmatpush1.msra.mxu0 0.0
      %1137 = vmatprep.subr.mxu0 0.0
      %1138 = vmatpush1.msra.mxu0 0.0
      %1139 = vmatprep.subr.mxu0 0.0
      %1140 = vmatpush1.msra.mxu0 0.0
      %1141 = vmatprep.subr.mxu0 0.0
      %1142 = vmatpush1.msra.mxu0 0.0
      %1143 = vmatprep.subr.mxu0 0.0
      %1144 = vmatpush1.msra.mxu0 0.0
      %1145 = vmatprep.subr.mxu0 0.0
      %1146 = vmatpush1.msra.mxu0 0.0
      %1147 = vmatprep.subr.mxu0 0.0
      %1148 = vmatpush1.msra.mxu0 0.0
      %1149 = vmatprep.subr.mxu0 0.0
      %1150 = vmatpush1.msra.mxu0 0.0
      %1151 = vmatprep.subr.mxu0 0.0
      %1152 = vmatpush1.msra.mxu0 0.0
      %1153 = vmatprep.subr.mxu0 0.0
      %1154 = vmatpush1.msra.mxu0 0.0
      %1155 = vmatprep.subr.mxu0 0.0
      %1156 = vmatpush1.msra.mxu0 %v1123
      %1157 = vmatprep.subr.mxu0 0.0
      %1158 = vmatpush2.msra.mxu0 0.0
      %1159 = vmatprep.subr.mxu0 0.0
      %1160 = vmatpush2.msra.mxu0 0.0
      %1161 = vmatprep.subr.mxu0 0.0
      %1162 = vmatpush2.msra.mxu0 0.0
      %1163 = vmatprep.subr.mxu0 0.0
      %1164 = vmatpush2.msra.mxu0 0.0
      %1165 = vmatprep.subr.mxu0 0.0
      %1166 = vmatpush2.msra.mxu0 0.0
      %1167 = vmatprep.subr.mxu0 0.0
      %1168 = vmatpush2.msra.mxu0 0.0
      %1169 = vmatprep.subr.mxu0 0.0
      %1170 = vmatpush2.msra.mxu0 0.0
      %1171 = vmatprep.subr.mxu0 0.0
      %1172 = vmatpush2.msra.mxu0 0.0
      %1173 = vmatprep.subr.mxu0 0.0
      %1174 = vmatpush2.msra.mxu0 0.0
      %1175 = vmatprep.subr.mxu0 0.0
      %1176 = vmatpush2.msra.mxu0 0.0
      %1177 = vmatprep.subr.mxu0 0.0
      %1178 = vmatpush2.msra.mxu0 0.0
      %1179 = vmatprep.subr.mxu0 0.0
      %1180 = vmatpush2.msra.mxu0 0.0
      %1181 = vmatprep.subr.mxu0 0.0
      %1182 = vmatpush2.msra.mxu0 0.0
      %1183 = vmatprep.subr.mxu0 0.0
      %1184 = vmatpush2.msra.mxu0 0.0
      %1185 = vmatprep.subr.mxu0 0.0
      %1186 = vmatpush2.msra.mxu0 0.0
      %1187 = vmatprep.subr.mxu0 0.0
      %1188 = vmatpush2.msra.mxu0 0.0
      %1189 = vmatprep.mubr.f32.mxu0 0.0
      %1190 = vmatmul.mubr.f32.gmra.mxu0 %v1099
      %v1191 = vpop.f32.mrf.mxu0
      %v1192 = vadd.f32 0.0, %v1191
      %v1193 = vpop.f32.mrf.mxu0
      %1194 = vmatprep.mubr.f32.mxu0 0.0
      %1195 = vmatmul.mubr.f32.gmra.mxu0 %v1102
      %v1196 = vpop.f32.mrf.mxu0
      %v1197 = vadd.f32 0.0, %v1196
      %v1198 = vpop.f32.mrf.mxu0
      %1199 = vmatprep.mubr.f32.mxu0 0.0
      %1200 = vmatmul.mubr.f32.gmra.mxu0 %v1105
      %v1201 = vpop.f32.mrf.mxu0
      %v1202 = vadd.f32 0.0, %v1201
      %v1203 = vpop.f32.mrf.mxu0
      %1204 = vmatprep.mubr.f32.mxu0 0.0
      %1205 = vmatmul.mubr.f32.gmra.mxu0 %v1108
      %v1206 = vpop.f32.mrf.mxu0
      %v1207 = vadd.f32 0.0, %v1206
      %v1208 = vpop.f32.mrf.mxu0
      %1209 = vmatprep.mubr.f32.mxu0 0.0
      %1210 = vmatmul.mubr.f32.gmra.mxu0 %v1111
      %v1211 = vpop.f32.mrf.mxu0
      %v1212 = vadd.f32 0.0, %v1211
      %v1213 = vpop.f32.mrf.mxu0
      %1214 = vmatprep.mubr.f32.mxu0 0.0
      %1215 = vmatmul.mubr.f32.gmra.mxu0 %v1114
      %v1216 = vpop.f32.mrf.mxu0
      %v1217 = vadd.f32 0.0, %v1216
      %v1218 = vpop.f32.mrf.mxu0
      %1219 = vmatprep.mubr.f32.mxu0 0.0
      %1220 = vmatmul.mubr.f32.gmra.mxu0 %v1117
      %v1221 = vpop.f32.mrf.mxu0
      %v1222 = vadd.f32 0.0, %v1221
      %v1223 = vpop.f32.mrf.mxu0
      %1224 = vmatprep.mubr.f32.mxu0 0.0
      %1225 = vmatmul.mubr.f32.gmra.mxu0 %v1120
      %v1226 = vpop.f32.mrf.mxu0
      %v1227 = vadd.f32 0.0, %v1226
      %v1228 = vpop.f32.mrf.mxu0
      %1229 = vdwg.mxu0
      %v1230 = vadd.f32 %v1079, %v1192
      %v1231 = vadd.f32 %v1080, %v1197
      %v1232 = vadd.f32 %v1081, %v1202
      %v1233 = vadd.f32 %v1082, %v1207
      %v1234 = vadd.f32 %v1083, %v1212
      %v1235 = vadd.f32 %v1084, %v1217
      %v1236 = vadd.f32 %v1085, %v1222
      %v1237 = vadd.f32 %v1086, %v1227
      %s1238 = scalar_lea.vmem %s187, 160
      %v1239 = vld [vmem:[%s1238] sm:$0xff]
      %v1240 = vld [vmem:[%s1238 + $0x10] sm:$0xff]
      %v1241 = vld [vmem:[%s1238 + $0x20] sm:$0xff]
      %v1242 = vld [vmem:[%s1238 + $0x30] sm:$0xff]
      %v1243 = vld [vmem:[%s1238 + $0x40] sm:$0xff]
      %v1244 = vld [vmem:[%s1238 + $0x50] sm:$0xff]
      %v1245 = vld [vmem:[%s1238 + $0x60] sm:$0xff]
      %v1246 = vld [vmem:[%s1238 + $0x70] sm:$0xff]
      %s1247 = scalar_lea.vmem %s1, 28
      %v1248 = vld [vmem:[%s1247] sm:$0xf]
      %v1250 = vsel %vm219, %v1239, 0
      %v1253 = vsel %vm219, %v1240, 0
      %v1256 = vsel %vm219, %v1241, 0
      %v1259 = vsel %vm219, %v1242, 0
      %v1262 = vsel %vm219, %v1243, 0
      %v1265 = vsel %vm219, %v1244, 0
      %v1268 = vsel %vm219, %v1245, 0
      %v1271 = vsel %vm219, %v1246, 0
      %v1274 = vsel %vm244, %v1248, 0
      %1276 = vmatprep.subr.mxu0 0.0
      %1277 = vmatpush1.msra.mxu0 0.0
      %1278 = vmatprep.subr.mxu0 0.0
      %1279 = vmatpush1.msra.mxu0 0.0
      %1280 = vmatprep.subr.mxu0 0.0
      %1281 = vmatpush1.msra.mxu0 0.0
      %1282 = vmatprep.subr.mxu0 0.0
      %1283 = vmatpush1.msra.mxu0 0.0
      %1284 = vmatprep.subr.mxu0 0.0
      %1285 = vmatpush1.msra.mxu0 0.0
      %1286 = vmatprep.subr.mxu0 0.0
      %1287 = vmatpush1.msra.mxu0 0.0
      %1288 = vmatprep.subr.mxu0 0.0
      %1289 = vmatpush1.msra.mxu0 0.0
      %1290 = vmatprep.subr.mxu0 0.0
      %1291 = vmatpush1.msra.mxu0 0.0
      %1292 = vmatprep.subr.mxu0 0.0
      %1293 = vmatpush1.msra.mxu0 0.0
      %1294 = vmatprep.subr.mxu0 0.0
      %1295 = vmatpush1.msra.mxu0 0.0
      %1296 = vmatprep.subr.mxu0 0.0
      %1297 = vmatpush1.msra.mxu0 0.0
      %1298 = vmatprep.subr.mxu0 0.0
      %1299 = vmatpush1.msra.mxu0 0.0
      %1300 = vmatprep.subr.mxu0 0.0
      %1301 = vmatpush1.msra.mxu0 0.0
      %1302 = vmatprep.subr.mxu0 0.0
      %1303 = vmatpush1.msra.mxu0 0.0
      %1304 = vmatprep.subr.mxu0 0.0
      %1305 = vmatpush1.msra.mxu0 0.0
      %1306 = vmatprep.subr.mxu0 0.0
      %1307 = vmatpush1.msra.mxu0 %v1274
      %1308 = vmatprep.subr.mxu0 0.0
      %1309 = vmatpush2.msra.mxu0 0.0
      %1310 = vmatprep.subr.mxu0 0.0
      %1311 = vmatpush2.msra.mxu0 0.0
      %1312 = vmatprep.subr.mxu0 0.0
      %1313 = vmatpush2.msra.mxu0 0.0
      %1314 = vmatprep.subr.mxu0 0.0
      %1315 = vmatpush2.msra.mxu0 0.0
      %1316 = vmatprep.subr.mxu0 0.0
      %1317 = vmatpush2.msra.mxu0 0.0
      %1318 = vmatprep.subr.mxu0 0.0
      %1319 = vmatpush2.msra.mxu0 0.0
      %1320 = vmatprep.subr.mxu0 0.0
      %1321 = vmatpush2.msra.mxu0 0.0
      %1322 = vmatprep.subr.mxu0 0.0
      %1323 = vmatpush2.msra.mxu0 0.0
      %1324 = vmatprep.subr.mxu0 0.0
      %1325 = vmatpush2.msra.mxu0 0.0
      %1326 = vmatprep.subr.mxu0 0.0
      %1327 = vmatpush2.msra.mxu0 0.0
      %1328 = vmatprep.subr.mxu0 0.0
      %1329 = vmatpush2.msra.mxu0 0.0
      %1330 = vmatprep.subr.mxu0 0.0
      %1331 = vmatpush2.msra.mxu0 0.0
      %1332 = vmatprep.subr.mxu0 0.0
      %1333 = vmatpush2.msra.mxu0 0.0
      %1334 = vmatprep.subr.mxu0 0.0
      %1335 = vmatpush2.msra.mxu0 0.0
      %1336 = vmatprep.subr.mxu0 0.0
      %1337 = vmatpush2.msra.mxu0 0.0
      %1338 = vmatprep.subr.mxu0 0.0
      %1339 = vmatpush2.msra.mxu0 0.0
      %1340 = vmatprep.mubr.f32.mxu0 0.0
      %1341 = vmatmul.mubr.f32.gmra.mxu0 %v1250
      %v1342 = vpop.f32.mrf.mxu0
      %v1343 = vadd.f32 0.0, %v1342
      %v1344 = vpop.f32.mrf.mxu0
      %1345 = vmatprep.mubr.f32.mxu0 0.0
      %1346 = vmatmul.mubr.f32.gmra.mxu0 %v1253
      %v1347 = vpop.f32.mrf.mxu0
      %v1348 = vadd.f32 0.0, %v1347
      %v1349 = vpop.f32.mrf.mxu0
      %1350 = vmatprep.mubr.f32.mxu0 0.0
      %1351 = vmatmul.mubr.f32.gmra.mxu0 %v1256
      %v1352 = vpop.f32.mrf.mxu0
      %v1353 = vadd.f32 0.0, %v1352
      %v1354 = vpop.f32.mrf.mxu0
      %1355 = vmatprep.mubr.f32.mxu0 0.0
      %1356 = vmatmul.mubr.f32.gmra.mxu0 %v1259
      %v1357 = vpop.f32.mrf.mxu0
      %v1358 = vadd.f32 0.0, %v1357
      %v1359 = vpop.f32.mrf.mxu0
      %1360 = vmatprep.mubr.f32.mxu0 0.0
      %1361 = vmatmul.mubr.f32.gmra.mxu0 %v1262
      %v1362 = vpop.f32.mrf.mxu0
      %v1363 = vadd.f32 0.0, %v1362
      %v1364 = vpop.f32.mrf.mxu0
      %1365 = vmatprep.mubr.f32.mxu0 0.0
      %1366 = vmatmul.mubr.f32.gmra.mxu0 %v1265
      %v1367 = vpop.f32.mrf.mxu0
      %v1368 = vadd.f32 0.0, %v1367
      %v1369 = vpop.f32.mrf.mxu0
      %1370 = vmatprep.mubr.f32.mxu0 0.0
      %1371 = vmatmul.mubr.f32.gmra.mxu0 %v1268
      %v1372 = vpop.f32.mrf.mxu0
      %v1373 = vadd.f32 0.0, %v1372
      %v1374 = vpop.f32.mrf.mxu0
      %1375 = vmatprep.mubr.f32.mxu0 0.0
      %1376 = vmatmul.mubr.f32.gmra.mxu0 %v1271
      %v1377 = vpop.f32.mrf.mxu0
      %v1378 = vadd.f32 0.0, %v1377
      %v1379 = vpop.f32.mrf.mxu0
      %1380 = vdwg.mxu0
      %v1381 = vadd.f32 %v1230, %v1343
      %v1382 = vadd.f32 %v1231, %v1348
      %v1383 = vadd.f32 %v1232, %v1353
      %v1384 = vadd.f32 %v1233, %v1358
      %v1385 = vadd.f32 %v1234, %v1363
      %v1386 = vadd.f32 %v1235, %v1368
      %v1387 = vadd.f32 %v1236, %v1373
      %v1388 = vadd.f32 %v1237, %v1378
      %v1389 = vld [vmem:[%s1087 + $0x1] sm:$0xff]
      %v1390 = vld [vmem:[%s1087 + $0x11] sm:$0xff]
      %v1391 = vld [vmem:[%s1087 + $0x21] sm:$0xff]
      %v1392 = vld [vmem:[%s1087 + $0x31] sm:$0xff]
      %v1393 = vld [vmem:[%s1087 + $0x41] sm:$0xff]
      %v1394 = vld [vmem:[%s1087 + $0x51] sm:$0xff]
      %v1395 = vld [vmem:[%s1087 + $0x61] sm:$0xff]
      %v1396 = vld [vmem:[%s1087 + $0x71] sm:$0xff]
      %s1397 = scalar_lea.vmem %s1, 32
      %v1398 = vld [vmem:[%s1397] sm:$0xf]
      %v1400 = vsel %vm219, %v1389, 0
      %v1403 = vsel %vm219, %v1390, 0
      %v1406 = vsel %vm219, %v1391, 0
      %v1409 = vsel %vm219, %v1392, 0
      %v1412 = vsel %vm219, %v1393, 0
      %v1415 = vsel %vm219, %v1394, 0
      %v1418 = vsel %vm219, %v1395, 0
      %v1421 = vsel %vm219, %v1396, 0
      %v1424 = vsel %vm244, %v1398, 0
      %1426 = vmatprep.subr.mxu0 0.0
      %1427 = vmatpush1.msra.mxu0 0.0
      %1428 = vmatprep.subr.mxu0 0.0
      %1429 = vmatpush1.msra.mxu0 0.0
      %1430 = vmatprep.subr.mxu0 0.0
      %1431 = vmatpush1.msra.mxu0 0.0
      %1432 = vmatprep.subr.mxu0 0.0
      %1433 = vmatpush1.msra.mxu0 0.0
      %1434 = vmatprep.subr.mxu0 0.0
      %1435 = vmatpush1.msra.mxu0 0.0
      %1436 = vmatprep.subr.mxu0 0.0
      %1437 = vmatpush1.msra.mxu0 0.0
      %1438 = vmatprep.subr.mxu0 0.0
      %1439 = vmatpush1.msra.mxu0 0.0
      %1440 = vmatprep.subr.mxu0 0.0
      %1441 = vmatpush1.msra.mxu0 0.0
      %1442 = vmatprep.subr.mxu0 0.0
      %1443 = vmatpush1.msra.mxu0 0.0
      %1444 = vmatprep.subr.mxu0 0.0
      %1445 = vmatpush1.msra.mxu0 0.0
      %1446 = vmatprep.subr.mxu0 0.0
      %1447 = vmatpush1.msra.mxu0 0.0
      %1448 = vmatprep.subr.mxu0 0.0
      %1449 = vmatpush1.msra.mxu0 0.0
      %1450 = vmatprep.subr.mxu0 0.0
      %1451 = vmatpush1.msra.mxu0 0.0
      %1452 = vmatprep.subr.mxu0 0.0
      %1453 = vmatpush1.msra.mxu0 0.0
      %1454 = vmatprep.subr.mxu0 0.0
      %1455 = vmatpush1.msra.mxu0 0.0
      %1456 = vmatprep.subr.mxu0 0.0
      %1457 = vmatpush1.msra.mxu0 %v1424
      %1458 = vmatprep.subr.mxu0 0.0
      %1459 = vmatpush2.msra.mxu0 0.0
      %1460 = vmatprep.subr.mxu0 0.0
      %1461 = vmatpush2.msra.mxu0 0.0
      %1462 = vmatprep.subr.mxu0 0.0
      %1463 = vmatpush2.msra.mxu0 0.0
      %1464 = vmatprep.subr.mxu0 0.0
      %1465 = vmatpush2.msra.mxu0 0.0
      %1466 = vmatprep.subr.mxu0 0.0
      %1467 = vmatpush2.msra.mxu0 0.0
      %1468 = vmatprep.subr.mxu0 0.0
      %1469 = vmatpush2.msra.mxu0 0.0
      %1470 = vmatprep.subr.mxu0 0.0
      %1471 = vmatpush2.msra.mxu0 0.0
      %1472 = vmatprep.subr.mxu0 0.0
      %1473 = vmatpush2.msra.mxu0 0.0
      %1474 = vmatprep.subr.mxu0 0.0
      %1475 = vmatpush2.msra.mxu0 0.0
      %1476 = vmatprep.subr.mxu0 0.0
      %1477 = vmatpush2.msra.mxu0 0.0
      %1478 = vmatprep.subr.mxu0 0.0
      %1479 = vmatpush2.msra.mxu0 0.0
      %1480 = vmatprep.subr.mxu0 0.0
      %1481 = vmatpush2.msra.mxu0 0.0
      %1482 = vmatprep.subr.mxu0 0.0
      %1483 = vmatpush2.msra.mxu0 0.0
      %1484 = vmatprep.subr.mxu0 0.0
      %1485 = vmatpush2.msra.mxu0 0.0
      %1486 = vmatprep.subr.mxu0 0.0
      %1487 = vmatpush2.msra.mxu0 0.0
      %1488 = vmatprep.subr.mxu0 0.0
      %1489 = vmatpush2.msra.mxu0 0.0
      %1490 = vmatprep.mubr.f32.mxu0 0.0
      %1491 = vmatmul.mubr.f32.gmra.mxu0 %v1400
      %v1492 = vpop.f32.mrf.mxu0
      %v1493 = vadd.f32 0.0, %v1492
      %v1494 = vpop.f32.mrf.mxu0
      %1495 = vmatprep.mubr.f32.mxu0 0.0
      %1496 = vmatmul.mubr.f32.gmra.mxu0 %v1403
      %v1497 = vpop.f32.mrf.mxu0
      %v1498 = vadd.f32 0.0, %v1497
      %v1499 = vpop.f32.mrf.mxu0
      %1500 = vmatprep.mubr.f32.mxu0 0.0
      %1501 = vmatmul.mubr.f32.gmra.mxu0 %v1406
      %v1502 = vpop.f32.mrf.mxu0
      %v1503 = vadd.f32 0.0, %v1502
      %v1504 = vpop.f32.mrf.mxu0
      %1505 = vmatprep.mubr.f32.mxu0 0.0
      %1506 = vmatmul.mubr.f32.gmra.mxu0 %v1409
      %v1507 = vpop.f32.mrf.mxu0
      %v1508 = vadd.f32 0.0, %v1507
      %v1509 = vpop.f32.mrf.mxu0
      %1510 = vmatprep.mubr.f32.mxu0 0.0
      %1511 = vmatmul.mubr.f32.gmra.mxu0 %v1412
      %v1512 = vpop.f32.mrf.mxu0
      %v1513 = vadd.f32 0.0, %v1512
      %v1514 = vpop.f32.mrf.mxu0
      %1515 = vmatprep.mubr.f32.mxu0 0.0
      %1516 = vmatmul.mubr.f32.gmra.mxu0 %v1415
      %v1517 = vpop.f32.mrf.mxu0
      %v1518 = vadd.f32 0.0, %v1517
      %v1519 = vpop.f32.mrf.mxu0
      %1520 = vmatprep.mubr.f32.mxu0 0.0
      %1521 = vmatmul.mubr.f32.gmra.mxu0 %v1418
      %v1522 = vpop.f32.mrf.mxu0
      %v1523 = vadd.f32 0.0, %v1522
      %v1524 = vpop.f32.mrf.mxu0
      %1525 = vmatprep.mubr.f32.mxu0 0.0
      %1526 = vmatmul.mubr.f32.gmra.mxu0 %v1421
      %v1527 = vpop.f32.mrf.mxu0
      %v1528 = vadd.f32 0.0, %v1527
      %v1529 = vpop.f32.mrf.mxu0
      %1530 = vdwg.mxu0
      %v1531 = vadd.f32 %v1381, %v1493
      %v1532 = vadd.f32 %v1382, %v1498
      %v1533 = vadd.f32 %v1383, %v1503
      %v1534 = vadd.f32 %v1384, %v1508
      %v1535 = vadd.f32 %v1385, %v1513
      %v1536 = vadd.f32 %v1386, %v1518
      %v1537 = vadd.f32 %v1387, %v1523
      %v1538 = vadd.f32 %v1388, %v1528
      %1539 = vst [vmem:[%s192] sm:$0xff] %v1531
      %1540 = vst [vmem:[%s192 + $0x8] sm:$0xff] %v1532
      %1541 = vst [vmem:[%s192 + $0x10] sm:$0xff] %v1533
      %1542 = vst [vmem:[%s192 + $0x18] sm:$0xff] %v1534
      %1543 = vst [vmem:[%s192 + $0x20] sm:$0xff] %v1535
      %1544 = vst [vmem:[%s192 + $0x28] sm:$0xff] %v1536
      %1545 = vst [vmem:[%s192 + $0x30] sm:$0xff] %v1537
      %1546 = vst [vmem:[%s192 + $0x38] sm:$0xff] %v1538
      %v1547 = vld [vmem:[%s3] sm:$0x1]
      %v1548 = vadd.f32 %v1531, %v1532
      %v1549 = vadd.f32 %v1548, %v1533
      %v1550 = vadd.f32 %v1549, %v1534
      %v1551 = vadd.f32 %v1550, %v1535
      %v1552 = vadd.f32 %v1551, %v1536
      %v1553 = vadd.f32 %v1552, %v1537
      %v1554 = vadd.f32 %v1553, %v1538
      %v1555 = vrot.slane %v1554, 4
      %v1556 = vadd.f32 %v1554, %v1555
      %v1557 = vrot.slane %v1556, 2
      %v1558 = vadd.f32 %v1556, %v1557
      %v1559 = vrot.slane %v1558, 1
      %v1560 = vadd.f32 %v1558, %v1559
      %v1561 = vadd.f32 %v1547, %v1560
      %1562 = vst [vmem:[%s3] sm:$0x1] %v1561
      %v1563 = vld [vmem:[%s4] sm:$0x1]
      %v1564 = vmul.f32 %v1531, %v1531
      %v1565 = vmul.f32 %v1532, %v1532
      %v1566 = vmul.f32 %v1533, %v1533
      %v1567 = vmul.f32 %v1534, %v1534
      %v1568 = vmul.f32 %v1535, %v1535
      %v1569 = vmul.f32 %v1536, %v1536
      %v1570 = vmul.f32 %v1537, %v1537
      %v1571 = vmul.f32 %v1538, %v1538
      %v1572 = vadd.f32 %v1564, %v1565
      %v1573 = vadd.f32 %v1572, %v1566
      %v1574 = vadd.f32 %v1573, %v1567
      %v1575 = vadd.f32 %v1574, %v1568
      %v1576 = vadd.f32 %v1575, %v1569
      %v1577 = vadd.f32 %v1576, %v1570
      %v1578 = vadd.f32 %v1577, %v1571
      %v1579 = vrot.slane %v1578, 4
      %v1580 = vadd.f32 %v1578, %v1579
      %v1581 = vrot.slane %v1580, 2
      %v1582 = vadd.f32 %v1580, %v1581
      %v1583 = vrot.slane %v1582, 1
      %v1584 = vadd.f32 %v1582, %v1583
      %v1585 = vadd.f32 %v1563, %v1584
      %1586 = vst [vmem:[%s4] sm:$0x1] %v1585
      %p1587 = scmp.lt.s32.totalorder %s16, 1
      %s1588 = scalar_select %p1587, %s16, 1
      %s1589 = smul.addr %s1588, 8
      %s1590 = smul.addr %s1589, 8
      %s1591 = scalar_lea.vmem %s2, %s1590
      // Predicated region
      $region33: #{residual_block_forward.5} parent=27 // pred_check
        %p1592 = pneg %p81
      $region34: #{residual_block_forward.5} parent=27 // pred_check_branch
        %1594 = sbr.rel (%p1592) target = $region36
      $region35: #{residual_block_forward.5} parent=27 // pred_region
        _
      $region36: #{residual_block_forward.5} parent=27 // pred_fallthru
        _
      // Predicated region
      $region37: #{residual_block_forward.5} parent=27 // pred_check
        %p1595 = pneg %p102
      $region38: #{residual_block_forward.5} parent=27 // pred_check_branch
        %1597 = sbr.rel (%p1595) target = $region40
      $region39: #{residual_block_forward.5} parent=27 // pred_region
        _
      $region40: #{residual_block_forward.5} parent=27 // pred_fallthru
        _
      // Predicated region
      $region41: #{residual_block_forward.5} parent=27 // pred_check
        %p1598 = pneg %p123
      $region42: #{residual_block_forward.5} parent=27 // pred_check_branch
        %1600 = sbr.rel (%p1598) target = $region44
      $region43: #{residual_block_forward.5} parent=27 // pred_region
        _
      $region44: #{residual_block_forward.5} parent=27 // pred_fallthru
        _
      // Predicated region
      $region45: #{residual_block_forward.5} parent=27 // pred_check
        %p1601 = pneg %p102
      $region46: #{residual_block_forward.5} parent=27 // pred_check_branch
        %1603 = sbr.rel (%p1601) target = $region48
      $region47: #{residual_block_forward.5} parent=27 // pred_region
        _
      $region48: #{residual_block_forward.5} parent=27 // pred_fallthru
        _
      // Predicated region
      $region49: #{residual_block_forward.5} parent=27 // pred_check
        %p1604 = pneg %p123
      $region50: #{residual_block_forward.5} parent=27 // pred_check_branch
        %1606 = sbr.rel (%p1604) target = $region52
      $region51: #{residual_block_forward.5} parent=27 // pred_region
        _
      $region52: #{residual_block_forward.5} parent=27 // pred_fallthru
        _
    $region28: #{residual_block_forward.5} parent=5 // pred_fallthru
      _
    %p1607 = scmp.le.s32.totalorder 2, %s11
    // Predicated region
    $region53: #{residual_block_forward.5} parent=5 // pred_check
      %p1608 = pneg %p1607
    $region54: #{residual_block_forward.5} parent=5 // pred_check_branch
      %1610 = sbr.rel (%p1608) target = $region56
    $region55: #{residual_block_forward.5} parent=5 // pred_region
      %s1611 = ssub.s32 %s11, 2
      // Predicated region
      $region57: #{residual_block_forward.5} parent=55 // pred_check
        %p1612 = pneg %p87
      $region58: #{residual_block_forward.5} parent=55 // pred_check_branch
        %1614 = sbr.rel (%p1612) target = $region60
      $region59: #{residual_block_forward.5} parent=55 // pred_region
        %p1615 = scmp.lt.s32.totalorder %s17, 1
        %s1616 = scalar_select %p1615, %s17, 1
        %s1617 = smul.addr %s1616, 8
        %s1618 = smul.addr %s1617, 8
        %s1619 = scalar_lea.vmem %s2, %s1618
      $region60: #{residual_block_forward.5} parent=55 // pred_fallthru
        _
    $region56: #{residual_block_forward.5} parent=5 // pred_fallthru
      _
  $region6: #{residual_block_forward.5} parent=0 // loop_footer
    %s15 = sadd.s32 1, %s11
  $region7: #{residual_block_forward.5} parent=0 // loop_footer_branch
    %10 = sbr.rel target = $region3
  $region8: #{residual_block_forward.5} parent=0 // loop_exit
    _

// kernel: residual_block_forward.9
$region0: #{residual_block_forward.9}
  #allocation0 [shape = 'u32[]', space=smem, size = 0x4, offset = 0x4, fixed_abs, tag = 'smem constant byte address 0x4 - core index']
  #allocation1 [shape = 'u32[144,128]{1,0:T(1,128)}', space=vmem, size = 0x12000, scoped, tag = 'internal scratch']
  %s0 = inlined_call_operand.vmem [shape: f32[128,128], index: 0, kind: input, shape index: {}]
  %s1 = inlined_call_operand.vmem [shape: f32[128,128], index: 1, kind: input, shape index: {}]
  %s2 = inlined_call_operand.vmem [shape: f32[1,128], index: 2, kind: input, shape index: {}]
  %s3 = inlined_call_operand.vmem [shape: f32[1,128], index: 3, kind: input, shape index: {}]
  %s4 = inlined_call_operand.vmem [shape: f32[1,128], index: 4, kind: input, shape index: {}]
  %s5 = inlined_call_operand.vmem [shape: f32[1,128], index: 5, kind: input, shape index: {}]
  %s6 = inlined_call_operand.vmem [shape: f32[128,128], index: 6, kind: output, shape index: {}]
  %s7 = sld [smem:[#allocation0]]
  $region34: #{residual_block_forward.9} parent=0
    _
  %s9 = ssub.s32 1, %s7
  %s10 = scalar_select 0, %s9, %s7
  // Predicated region
  $region2: #{residual_block_forward.9} parent=0 // pred_check
    _
  $region3: #{residual_block_forward.9} parent=0 // pred_check_branch
    %12 = sbr.rel (0) target = $region5
  $region4: #{residual_block_forward.9} parent=0 // pred_region
    _
  $region5: #{residual_block_forward.9} parent=0 // pred_fallthru
    _
  // Predicated region
  $region6: #{residual_block_forward.9} parent=0 // pred_check
    _
  $region7: #{residual_block_forward.9} parent=0 // pred_check_branch
    %14 = sbr.rel (0) target = $region9
  $region8: #{residual_block_forward.9} parent=0 // pred_region
    _
  $region9: #{residual_block_forward.9} parent=0 // pred_fallthru
    _
  // Predicated region
  $region10: #{residual_block_forward.9} parent=0 // pred_check
    _
  $region11: #{residual_block_forward.9} parent=0 // pred_check_branch
    %16 = sbr.rel (0) target = $region13
  $region12: #{residual_block_forward.9} parent=0 // pred_region
    _
  $region13: #{residual_block_forward.9} parent=0 // pred_fallthru
    _
  // Predicated region
  $region14: #{residual_block_forward.9} parent=0 // pred_check
    _
  $region15: #{residual_block_forward.9} parent=0 // pred_check_branch
    %18 = sbr.rel (0) target = $region17
  $region16: #{residual_block_forward.9} parent=0 // pred_region
    _
  $region17: #{residual_block_forward.9} parent=0 // pred_fallthru
    _
  // Predicated region
  $region18: #{residual_block_forward.9} parent=0 // pred_check
    _
  $region19: #{residual_block_forward.9} parent=0 // pred_check_branch
    %20 = sbr.rel (0) target = $region21
  $region20: #{residual_block_forward.9} parent=0 // pred_region
    _
  $region21: #{residual_block_forward.9} parent=0 // pred_fallthru
    _
  // Predicated region
  $region22: #{residual_block_forward.9} parent=0 // pred_check
    _
  $region23: #{residual_block_forward.9} parent=0 // pred_check_branch
    %22 = sbr.rel (0) target = $region25
  $region24: #{residual_block_forward.9} parent=0 // pred_region
    _
  $region25: #{residual_block_forward.9} parent=0 // pred_fallthru
    _
  %v23 = vld [vmem:[%s0] sm:$0xff]
  %v24 = vld [vmem:[%s0 + $0x8] sm:$0xff]
  %v25 = vld [vmem:[%s0 + $0x10] sm:$0xff]
  %v26 = vld [vmem:[%s0 + $0x18] sm:$0xff]
  %v27 = vld [vmem:[%s0 + $0x20] sm:$0xff]
  %v28 = vld [vmem:[%s0 + $0x28] sm:$0xff]
  %v29 = vld [vmem:[%s0 + $0x30] sm:$0xff]
  %v30 = vld [vmem:[%s0 + $0x38] sm:$0xff]
  %v31 = vld [vmem:[%s0 + $0x40] sm:$0xff]
  %v32 = vld [vmem:[%s0 + $0x48] sm:$0xff]
  %v33 = vld [vmem:[%s0 + $0x50] sm:$0xff]
  %v34 = vld [vmem:[%s0 + $0x58] sm:$0xff]
  %v35 = vld [vmem:[%s0 + $0x60] sm:$0xff]
  %v36 = vld [vmem:[%s0 + $0x68] sm:$0xff]
  %v37 = vld [vmem:[%s0 + $0x70] sm:$0xff]
  %v38 = vld [vmem:[%s0 + $0x78] sm:$0xff]
  %v39 = vld [vmem:[%s2] sm:$0x1]
  %v41 = vlaneseq
  %v42 = vshrl.u32 %v41, 7
  %v43 = vsub.s32 0, %v42
  %v44 = vrot.slane %v39, %v43
  %v46 = vmul.f32 %v23, %v44
  %v47 = vmul.f32 %v24, %v44
  %v48 = vmul.f32 %v25, %v44
  %v49 = vmul.f32 %v26, %v44
  %v50 = vmul.f32 %v27, %v44
  %v51 = vmul.f32 %v28, %v44
  %v52 = vmul.f32 %v29, %v44
  %v53 = vmul.f32 %v30, %v44
  %v54 = vmul.f32 %v31, %v44
  %v55 = vmul.f32 %v32, %v44
  %v56 = vmul.f32 %v33, %v44
  %v57 = vmul.f32 %v34, %v44
  %v58 = vmul.f32 %v35, %v44
  %v59 = vmul.f32 %v36, %v44
  %v60 = vmul.f32 %v37, %v44
  %v61 = vmul.f32 %v38, %v44
  %v62 = vld [vmem:[%s3] sm:$0x1]
  %v64 = vlaneseq
  %v65 = vshrl.u32 %v64, 7
  %v66 = vsub.s32 0, %v65
  %v67 = vrot.slane %v62, %v66
  %v69 = vadd.f32 %v46, %v67
  %v70 = vadd.f32 %v47, %v67
  %v71 = vadd.f32 %v48, %v67
  %v72 = vadd.f32 %v49, %v67
  %v73 = vadd.f32 %v50, %v67
  %v74 = vadd.f32 %v51, %v67
  %v75 = vadd.f32 %v52, %v67
  %v76 = vadd.f32 %v53, %v67
  %v77 = vadd.f32 %v54, %v67
  %v78 = vadd.f32 %v55, %v67
  %v79 = vadd.f32 %v56, %v67
  %v80 = vadd.f32 %v57, %v67
  %v81 = vadd.f32 %v58, %v67
  %v82 = vadd.f32 %v59, %v67
  %v83 = vadd.f32 %v60, %v67
  %v84 = vadd.f32 %v61, %v67
  %v85 = vld [vmem:[%s1] sm:$0xff]
  %v86 = vld [vmem:[%s1 + $0x8] sm:$0xff]
  %v87 = vld [vmem:[%s1 + $0x10] sm:$0xff]
  %v88 = vld [vmem:[%s1 + $0x18] sm:$0xff]
  %v89 = vld [vmem:[%s1 + $0x20] sm:$0xff]
  %v90 = vld [vmem:[%s1 + $0x28] sm:$0xff]
  %v91 = vld [vmem:[%s1 + $0x30] sm:$0xff]
  %v92 = vld [vmem:[%s1 + $0x38] sm:$0xff]
  %v93 = vld [vmem:[%s1 + $0x40] sm:$0xff]
  %v94 = vld [vmem:[%s1 + $0x48] sm:$0xff]
  %v95 = vld [vmem:[%s1 + $0x50] sm:$0xff]
  %v96 = vld [vmem:[%s1 + $0x58] sm:$0xff]
  %v97 = vld [vmem:[%s1 + $0x60] sm:$0xff]
  %v98 = vld [vmem:[%s1 + $0x68] sm:$0xff]
  %v99 = vld [vmem:[%s1 + $0x70] sm:$0xff]
  %v100 = vld [vmem:[%s1 + $0x78] sm:$0xff]
  %v101 = vld [vmem:[%s4] sm:$0x1]
  %v103 = vlaneseq
  %v104 = vshrl.u32 %v103, 7
  %v105 = vsub.s32 0, %v104
  %v106 = vrot.slane %v101, %v105
  %v108 = vmul.f32 %v85, %v106
  %v109 = vmul.f32 %v86, %v106
  %v110 = vmul.f32 %v87, %v106
  %v111 = vmul.f32 %v88, %v106
  %v112 = vmul.f32 %v89, %v106
  %v113 = vmul.f32 %v90, %v106
  %v114 = vmul.f32 %v91, %v106
  %v115 = vmul.f32 %v92, %v106
  %v116 = vmul.f32 %v93, %v106
  %v117 = vmul.f32 %v94, %v106
  %v118 = vmul.f32 %v95, %v106
  %v119 = vmul.f32 %v96, %v106
  %v120 = vmul.f32 %v97, %v106
  %v121 = vmul.f32 %v98, %v106
  %v122 = vmul.f32 %v99, %v106
  %v123 = vmul.f32 %v100, %v106
  %v124 = vld [vmem:[%s5] sm:$0x1]
  %v126 = vlaneseq
  %v127 = vshrl.u32 %v126, 7
  %v128 = vsub.s32 0, %v127
  %v129 = vrot.slane %v124, %v128
  %v131 = vadd.f32 %v108, %v129
  %v132 = vadd.f32 %v109, %v129
  %v133 = vadd.f32 %v110, %v129
  %v134 = vadd.f32 %v111, %v129
  %v135 = vadd.f32 %v112, %v129
  %v136 = vadd.f32 %v113, %v129
  %v137 = vadd.f32 %v114, %v129
  %v138 = vadd.f32 %v115, %v129
  %v139 = vadd.f32 %v116, %v129
  %v140 = vadd.f32 %v117, %v129
  %v141 = vadd.f32 %v118, %v129
  %v142 = vadd.f32 %v119, %v129
  %v143 = vadd.f32 %v120, %v129
  %v144 = vadd.f32 %v121, %v129
  %v145 = vadd.f32 %v122, %v129
  %v146 = vadd.f32 %v123, %v129
  %v147 = vadd.f32 %v69, %v131
  %v148 = vadd.f32 %v70, %v132
  %v149 = vadd.f32 %v71, %v133
  %v150 = vadd.f32 %v72, %v134
  %v151 = vadd.f32 %v73, %v135
  %v152 = vadd.f32 %v74, %v136
  %v153 = vadd.f32 %v75, %v137
  %v154 = vadd.f32 %v76, %v138
  %v155 = vadd.f32 %v77, %v139
  %v156 = vadd.f32 %v78, %v140
  %v157 = vadd.f32 %v79, %v141
  %v158 = vadd.f32 %v80, %v142
  %v159 = vadd.f32 %v81, %v143
  %v160 = vadd.f32 %v82, %v144
  %v161 = vadd.f32 %v83, %v145
  %v162 = vadd.f32 %v84, %v146
  %v163 = vmax.f32 %v147, 0.0
  %v164 = vmax.f32 %v148, 0.0
  %v165 = vmax.f32 %v149, 0.0
  %v166 = vmax.f32 %v150, 0.0
  %v167 = vmax.f32 %v151, 0.0
  %v168 = vmax.f32 %v152, 0.0
  %v169 = vmax.f32 %v153, 0.0
  %v170 = vmax.f32 %v154, 0.0
  %v171 = vmax.f32 %v155, 0.0
  %v172 = vmax.f32 %v156, 0.0
  %v173 = vmax.f32 %v157, 0.0
  %v174 = vmax.f32 %v158, 0.0
  %v175 = vmax.f32 %v159, 0.0
  %v176 = vmax.f32 %v160, 0.0
  %v177 = vmax.f32 %v161, 0.0
  %v178 = vmax.f32 %v162, 0.0
  %179 = vst [vmem:[%s6] sm:$0xff] %v163
  %180 = vst [vmem:[%s6 + $0x8] sm:$0xff] %v164
  %181 = vst [vmem:[%s6 + $0x10] sm:$0xff] %v165
  %182 = vst [vmem:[%s6 + $0x18] sm:$0xff] %v166
  %183 = vst [vmem:[%s6 + $0x20] sm:$0xff] %v167
  %184 = vst [vmem:[%s6 + $0x28] sm:$0xff] %v168
  %185 = vst [vmem:[%s6 + $0x30] sm:$0xff] %v169
  %186 = vst [vmem:[%s6 + $0x38] sm:$0xff] %v170
  %187 = vst [vmem:[%s6 + $0x40] sm:$0xff] %v171
  %188 = vst [vmem:[%s6 + $0x48] sm:$0xff] %v172
  %189 = vst [vmem:[%s6 + $0x50] sm:$0xff] %v173
  %190 = vst [vmem:[%s6 + $0x58] sm:$0xff] %v174
  %191 = vst [vmem:[%s6 + $0x60] sm:$0xff] %v175
  %192 = vst [vmem:[%s6 + $0x68] sm:$0xff] %v176
  %193 = vst [vmem:[%s6 + $0x70] sm:$0xff] %v177
  %194 = vst [vmem:[%s6 + $0x78] sm:$0xff] %v178
  // Predicated region
  $region26: #{residual_block_forward.9} parent=0 // pred_check
    _
  $region27: #{residual_block_forward.9} parent=0 // pred_check_branch
    %196 = sbr.rel (0) target = $region29
  $region28: #{residual_block_forward.9} parent=0 // pred_region
    _
  $region29: #{residual_block_forward.9} parent=0 // pred_fallthru
    _
  // Predicated region
  $region30: #{residual_block_forward.9} parent=0 // pred_check
    _
  $region31: #{residual_block_forward.9} parent=0 // pred_check_branch
    %198 = sbr.rel (0) target = $region33
  $region32: #{residual_block_forward.9} parent=0 // pred_region
    _
  $region33: #{residual_block_forward.9} parent=0 // pred_fallthru
    _

// kernel: residual_block_forward.8
$region0: #{residual_block_forward.8}
  #allocation0 [shape = 'u32[]', space=smem, size = 0x4, offset = 0x4, fixed_abs, tag = 'smem constant byte address 0x4 - core index']
  #allocation1 [shape = 'u32[144,128]{1,0:T(1,128)}', space=vmem, size = 0x12000, scoped, tag = 'internal scratch']
  %s0 = inlined_call_operand.vmem [shape: f32[128,4], index: 0, kind: input, shape index: {}]
  %s1 = inlined_call_operand.vmem [shape: f32[4,128], index: 1, kind: input, shape index: {}]
  %s2 = inlined_call_operand.vmem [shape: f32[128,128], index: 2, kind: output, shape index: {0}]
  %s3 = inlined_call_operand.vmem [shape: f32[1,128], index: 3, kind: output, shape index: {1}]
  %s4 = inlined_call_operand.vmem [shape: f32[1,128], index: 4, kind: output, shape index: {2}]
  %5 = xla_tuple %s2, %s3, %s4
  %s6 = sld [smem:[#allocation0]]
  $region38: #{residual_block_forward.8} parent=0
    _
  %s8 = ssub.s32 1, %s6
  %s9 = scalar_select 0, %s8, %s6
  // Predicated region
  $region2: #{residual_block_forward.8} parent=0 // pred_check
    _
  $region3: #{residual_block_forward.8} parent=0 // pred_check_branch
    %11 = sbr.rel (0) target = $region5
  $region4: #{residual_block_forward.8} parent=0 // pred_region
    _
  $region5: #{residual_block_forward.8} parent=0 // pred_fallthru
    _
  // Predicated region
  $region6: #{residual_block_forward.8} parent=0 // pred_check
    _
  $region7: #{residual_block_forward.8} parent=0 // pred_check_branch
    %13 = sbr.rel (0) target = $region9
  $region8: #{residual_block_forward.8} parent=0 // pred_region
    _
  $region9: #{residual_block_forward.8} parent=0 // pred_fallthru
    _
  %p14 = scmp.eq.s32.totalorder 0, 0
  // Predicated region
  $region10: #{residual_block_forward.8} parent=0 // pred_check
    %p15 = pneg %p14
  $region11: #{residual_block_forward.8} parent=0 // pred_check_branch
    %17 = sbr.rel (%p15) target = $region13
  $region12: #{residual_block_forward.8} parent=0 // pred_region
    %18 = vst [vmem:[%s3] sm:$0x1] 0.0
    %19 = vst [vmem:[%s4] sm:$0x1] 0.0
  $region13: #{residual_block_forward.8} parent=0 // pred_fallthru
    _
  %v20 = vld [vmem:[%s0] sm:$0xff]
  %v21 = vld [vmem:[%s0 + $0x8] sm:$0xff]
  %v22 = vld [vmem:[%s0 + $0x10] sm:$0xff]
  %v23 = vld [vmem:[%s0 + $0x18] sm:$0xff]
  %v24 = vld [vmem:[%s0 + $0x20] sm:$0xff]
  %v25 = vld [vmem:[%s0 + $0x28] sm:$0xff]
  %v26 = vld [vmem:[%s0 + $0x30] sm:$0xff]
  %v27 = vld [vmem:[%s0 + $0x38] sm:$0xff]
  %v28 = vld [vmem:[%s0 + $0x40] sm:$0xff]
  %v29 = vld [vmem:[%s0 + $0x48] sm:$0xff]
  %v30 = vld [vmem:[%s0 + $0x50] sm:$0xff]
  %v31 = vld [vmem:[%s0 + $0x58] sm:$0xff]
  %v32 = vld [vmem:[%s0 + $0x60] sm:$0xff]
  %v33 = vld [vmem:[%s0 + $0x68] sm:$0xff]
  %v34 = vld [vmem:[%s0 + $0x70] sm:$0xff]
  %v35 = vld [vmem:[%s0 + $0x78] sm:$0xff]
  %v36 = vld [vmem:[%s1] sm:$0xf]
  %vm37 = vcmask 31744
  %v39 = vsel %vm37, %v20, 0
  %v42 = vsel %vm37, %v21, 0
  %v45 = vsel %vm37, %v22, 0
  %v48 = vsel %vm37, %v23, 0
  %v51 = vsel %vm37, %v24, 0
  %v54 = vsel %vm37, %v25, 0
  %v57 = vsel %vm37, %v26, 0
  %v60 = vsel %vm37, %v27, 0
  %v63 = vsel %vm37, %v28, 0
  %v66 = vsel %vm37, %v29, 0
  %v69 = vsel %vm37, %v30, 0
  %v72 = vsel %vm37, %v31, 0
  %v75 = vsel %vm37, %v32, 0
  %v78 = vsel %vm37, %v33, 0
  %v81 = vsel %vm37, %v34, 0
  %v84 = vsel %vm37, %v35, 0
  %vm86 = vcmask 1043456
  %v88 = vsel %vm86, %v36, 0
  %90 = vmatprep.subr.mxu0 0.0
  %91 = vmatpush1.msra.mxu0 0.0
  %92 = vmatprep.subr.mxu0 0.0
  %93 = vmatpush1.msra.mxu0 0.0
  %94 = vmatprep.subr.mxu0 0.0
  %95 = vmatpush1.msra.mxu0 0.0
  %96 = vmatprep.subr.mxu0 0.0
  %97 = vmatpush1.msra.mxu0 0.0
  %98 = vmatprep.subr.mxu0 0.0
  %99 = vmatpush1.msra.mxu0 0.0
  %100 = vmatprep.subr.mxu0 0.0
  %101 = vmatpush1.msra.mxu0 0.0
  %102 = vmatprep.subr.mxu0 0.0
  %103 = vmatpush1.msra.mxu0 0.0
  %104 = vmatprep.subr.mxu0 0.0
  %105 = vmatpush1.msra.mxu0 0.0
  %106 = vmatprep.subr.mxu0 0.0
  %107 = vmatpush1.msra.mxu0 0.0
  %108 = vmatprep.subr.mxu0 0.0
  %109 = vmatpush1.msra.mxu0 0.0
  %110 = vmatprep.subr.mxu0 0.0
  %111 = vmatpush1.msra.mxu0 0.0
  %112 = vmatprep.subr.mxu0 0.0
  %113 = vmatpush1.msra.mxu0 0.0
  %114 = vmatprep.subr.mxu0 0.0
  %115 = vmatpush1.msra.mxu0 0.0
  %116 = vmatprep.subr.mxu0 0.0
  %117 = vmatpush1.msra.mxu0 0.0
  %118 = vmatprep.subr.mxu0 0.0
  %119 = vmatpush1.msra.mxu0 0.0
  %120 = vmatprep.subr.mxu0 0.0
  %121 = vmatpush1.msra.mxu0 %v88
  %122 = vmatprep.subr.mxu0 0.0
  %123 = vmatpush2.msra.mxu0 0.0
  %124 = vmatprep.subr.mxu0 0.0
  %125 = vmatpush2.msra.mxu0 0.0
  %126 = vmatprep.subr.mxu0 0.0
  %127 = vmatpush2.msra.mxu0 0.0
  %128 = vmatprep.subr.mxu0 0.0
  %129 = vmatpush2.msra.mxu0 0.0
  %130 = vmatprep.subr.mxu0 0.0
  %131 = vmatpush2.msra.mxu0 0.0
  %132 = vmatprep.subr.mxu0 0.0
  %133 = vmatpush2.msra.mxu0 0.0
  %134 = vmatprep.subr.mxu0 0.0
  %135 = vmatpush2.msra.mxu0 0.0
  %136 = vmatprep.subr.mxu0 0.0
  %137 = vmatpush2.msra.mxu0 0.0
  %138 = vmatprep.subr.mxu0 0.0
  %139 = vmatpush2.msra.mxu0 0.0
  %140 = vmatprep.subr.mxu0 0.0
  %141 = vmatpush2.msra.mxu0 0.0
  %142 = vmatprep.subr.mxu0 0.0
  %143 = vmatpush2.msra.mxu0 0.0
  %144 = vmatprep.subr.mxu0 0.0
  %145 = vmatpush2.msra.mxu0 0.0
  %146 = vmatprep.subr.mxu0 0.0
  %147 = vmatpush2.msra.mxu0 0.0
  %148 = vmatprep.subr.mxu0 0.0
  %149 = vmatpush2.msra.mxu0 0.0
  %150 = vmatprep.subr.mxu0 0.0
  %151 = vmatpush2.msra.mxu0 0.0
  %152 = vmatprep.subr.mxu0 0.0
  %153 = vmatpush2.msra.mxu0 0.0
  %154 = vmatprep.mubr.f32.mxu0 0.0
  %155 = vmatmul.mubr.f32.gmra.mxu0 %v39
  %v156 = vpop.f32.mrf.mxu0
  %v157 = vadd.f32 0.0, %v156
  %v158 = vpop.f32.mrf.mxu0
  %159 = vmatprep.mubr.f32.mxu0 0.0
  %160 = vmatmul.mubr.f32.gmra.mxu0 %v42
  %v161 = vpop.f32.mrf.mxu0
  %v162 = vadd.f32 0.0, %v161
  %v163 = vpop.f32.mrf.mxu0
  %164 = vmatprep.mubr.f32.mxu0 0.0
  %165 = vmatmul.mubr.f32.gmra.mxu0 %v45
  %v166 = vpop.f32.mrf.mxu0
  %v167 = vadd.f32 0.0, %v166
  %v168 = vpop.f32.mrf.mxu0
  %169 = vmatprep.mubr.f32.mxu0 0.0
  %170 = vmatmul.mubr.f32.gmra.mxu0 %v48
  %v171 = vpop.f32.mrf.mxu0
  %v172 = vadd.f32 0.0, %v171
  %v173 = vpop.f32.mrf.mxu0
  %174 = vmatprep.mubr.f32.mxu0 0.0
  %175 = vmatmul.mubr.f32.gmra.mxu0 %v51
  %v176 = vpop.f32.mrf.mxu0
  %v177 = vadd.f32 0.0, %v176
  %v178 = vpop.f32.mrf.mxu0
  %179 = vmatprep.mubr.f32.mxu0 0.0
  %180 = vmatmul.mubr.f32.gmra.mxu0 %v54
  %v181 = vpop.f32.mrf.mxu0
  %v182 = vadd.f32 0.0, %v181
  %v183 = vpop.f32.mrf.mxu0
  %184 = vmatprep.mubr.f32.mxu0 0.0
  %185 = vmatmul.mubr.f32.gmra.mxu0 %v57
  %v186 = vpop.f32.mrf.mxu0
  %v187 = vadd.f32 0.0, %v186
  %v188 = vpop.f32.mrf.mxu0
  %189 = vmatprep.mubr.f32.mxu0 0.0
  %190 = vmatmul.mubr.f32.gmra.mxu0 %v60
  %v191 = vpop.f32.mrf.mxu0
  %v192 = vadd.f32 0.0, %v191
  %v193 = vpop.f32.mrf.mxu0
  %194 = vmatprep.mubr.f32.mxu0 0.0
  %195 = vmatmul.mubr.f32.gmra.mxu0 %v63
  %v196 = vpop.f32.mrf.mxu0
  %v197 = vadd.f32 0.0, %v196
  %v198 = vpop.f32.mrf.mxu0
  %199 = vmatprep.mubr.f32.mxu0 0.0
  %200 = vmatmul.mubr.f32.gmra.mxu0 %v66
  %v201 = vpop.f32.mrf.mxu0
  %v202 = vadd.f32 0.0, %v201
  %v203 = vpop.f32.mrf.mxu0
  %204 = vmatprep.mubr.f32.mxu0 0.0
  %205 = vmatmul.mubr.f32.gmra.mxu0 %v69
  %v206 = vpop.f32.mrf.mxu0
  %v207 = vadd.f32 0.0, %v206
  %v208 = vpop.f32.mrf.mxu0
  %209 = vmatprep.mubr.f32.mxu0 0.0
  %210 = vmatmul.mubr.f32.gmra.mxu0 %v72
  %v211 = vpop.f32.mrf.mxu0
  %v212 = vadd.f32 0.0, %v211
  %v213 = vpop.f32.mrf.mxu0
  %214 = vmatprep.mubr.f32.mxu0 0.0
  %215 = vmatmul.mubr.f32.gmra.mxu0 %v75
  %v216 = vpop.f32.mrf.mxu0
  %v217 = vadd.f32 0.0, %v216
  %v218 = vpop.f32.mrf.mxu0
  %219 = vmatprep.mubr.f32.mxu0 0.0
  %220 = vmatmul.mubr.f32.gmra.mxu0 %v78
  %v221 = vpop.f32.mrf.mxu0
  %v222 = vadd.f32 0.0, %v221
  %v223 = vpop.f32.mrf.mxu0
  %224 = vmatprep.mubr.f32.mxu0 0.0
  %225 = vmatmul.mubr.f32.gmra.mxu0 %v81
  %v226 = vpop.f32.mrf.mxu0
  %v227 = vadd.f32 0.0, %v226
  %v228 = vpop.f32.mrf.mxu0
  %229 = vmatprep.mubr.f32.mxu0 0.0
  %230 = vmatmul.mubr.f32.gmra.mxu0 %v84
  %v231 = vpop.f32.mrf.mxu0
  %v232 = vadd.f32 0.0, %v231
  %v233 = vpop.f32.mrf.mxu0
  %234 = vdwg.mxu0
  %235 = vst [vmem:[%s2] sm:$0xff] %v157
  %236 = vst [vmem:[%s2 + $0x8] sm:$0xff] %v162
  %237 = vst [vmem:[%s2 + $0x10] sm:$0xff] %v167
  %238 = vst [vmem:[%s2 + $0x18] sm:$0xff] %v172
  %239 = vst [vmem:[%s2 + $0x20] sm:$0xff] %v177
  %240 = vst [vmem:[%s2 + $0x28] sm:$0xff] %v182
  %241 = vst [vmem:[%s2 + $0x30] sm:$0xff] %v187
  %242 = vst [vmem:[%s2 + $0x38] sm:$0xff] %v192
  %243 = vst [vmem:[%s2 + $0x40] sm:$0xff] %v197
  %244 = vst [vmem:[%s2 + $0x48] sm:$0xff] %v202
  %245 = vst [vmem:[%s2 + $0x50] sm:$0xff] %v207
  %246 = vst [vmem:[%s2 + $0x58] sm:$0xff] %v212
  %247 = vst [vmem:[%s2 + $0x60] sm:$0xff] %v217
  %248 = vst [vmem:[%s2 + $0x68] sm:$0xff] %v222
  %249 = vst [vmem:[%s2 + $0x70] sm:$0xff] %v227
  %250 = vst [vmem:[%s2 + $0x78] sm:$0xff] %v232
  %v251 = vld [vmem:[%s3] sm:$0x1]
  %v252 = vadd.f32 %v157, %v162
  %v253 = vadd.f32 %v252, %v167
  %v254 = vadd.f32 %v253, %v172
  %v255 = vadd.f32 %v254, %v177
  %v256 = vadd.f32 %v255, %v182
  %v257 = vadd.f32 %v256, %v187
  %v258 = vadd.f32 %v257, %v192
  %v259 = vadd.f32 %v258, %v197
  %v260 = vadd.f32 %v259, %v202
  %v261 = vadd.f32 %v260, %v207
  %v262 = vadd.f32 %v261, %v212
  %v263 = vadd.f32 %v262, %v217
  %v264 = vadd.f32 %v263, %v222
  %v265 = vadd.f32 %v264, %v227
  %v266 = vadd.f32 %v265, %v232
  %v267 = vrot.slane %v266, 4
  %v268 = vadd.f32 %v266, %v267
  %v269 = vrot.slane %v268, 2
  %v270 = vadd.f32 %v268, %v269
  %v271 = vrot.slane %v270, 1
  %v272 = vadd.f32 %v270, %v271
  %v273 = vadd.f32 %v251, %v272
  %274 = vst [vmem:[%s3] sm:$0x1] %v273
  %v275 = vld [vmem:[%s4] sm:$0x1]
  %v276 = vmul.f32 %v157, %v157
  %v277 = vmul.f32 %v162, %v162
  %v278 = vmul.f32 %v167, %v167
  %v279 = vmul.f32 %v172, %v172
  %v280 = vmul.f32 %v177, %v177
  %v281 = vmul.f32 %v182, %v182
  %v282 = vmul.f32 %v187, %v187
  %v283 = vmul.f32 %v192, %v192
  %v284 = vmul.f32 %v197, %v197
  %v285 = vmul.f32 %v202, %v202
  %v286 = vmul.f32 %v207, %v207
  %v287 = vmul.f32 %v212, %v212
  %v288 = vmul.f32 %v217, %v217
  %v289 = vmul.f32 %v222, %v222
  %v290 = vmul.f32 %v227, %v227
  %v291 = vmul.f32 %v232, %v232
  %v292 = vadd.f32 %v276, %v277
  %v293 = vadd.f32 %v292, %v278
  %v294 = vadd.f32 %v293, %v279
  %v295 = vadd.f32 %v294, %v280
  %v296 = vadd.f32 %v295, %v281
  %v297 = vadd.f32 %v296, %v282
  %v298 = vadd.f32 %v297, %v283
  %v299 = vadd.f32 %v298, %v284
  %v300 = vadd.f32 %v299, %v285
  %v301 = vadd.f32 %v300, %v286
  %v302 = vadd.f32 %v301, %v287
  %v303 = vadd.f32 %v302, %v288
  %v304 = vadd.f32 %v303, %v289
  %v305 = vadd.f32 %v304, %v290
  %v306 = vadd.f32 %v305, %v291
  %v307 = vrot.slane %v306, 4
  %v308 = vadd.f32 %v306, %v307
  %v309 = vrot.slane %v308, 2
  %v310 = vadd.f32 %v308, %v309
  %v311 = vrot.slane %v310, 1
  %v312 = vadd.f32 %v310, %v311
  %v313 = vadd.f32 %v275, %v312
  %314 = vst [vmem:[%s4] sm:$0x1] %v313
  // Predicated region
  $region14: #{residual_block_forward.8} parent=0 // pred_check
    _
  $region15: #{residual_block_forward.8} parent=0 // pred_check_branch
    %316 = sbr.rel (0) target = $region17
  $region16: #{residual_block_forward.8} parent=0 // pred_region
    _
  $region17: #{residual_block_forward.8} parent=0 // pred_fallthru
    _
  // Predicated region
  $region18: #{residual_block_forward.8} parent=0 // pred_check
    _
  $region19: #{residual_block_forward.8} parent=0 // pred_check_branch
    %318 = sbr.rel (0) target = $region21
  $region20: #{residual_block_forward.8} parent=0 // pred_region
    _
  $region21: #{residual_block_forward.8} parent=0 // pred_fallthru
    _
  // Predicated region
  $region22: #{residual_block_forward.8} parent=0 // pred_check
    _
  $region23: #{residual_block_forward.8} parent=0 // pred_check_branch
    %320 = sbr.rel (0) target = $region25
  $region24: #{residual_block_forward.8} parent=0 // pred_region
    _
  $region25: #{residual_block_forward.8} parent=0 // pred_fallthru
    _
  // Predicated region
  $region26: #{residual_block_forward.8} parent=0 // pred_check
    _
  $region27: #{residual_block_forward.8} parent=0 // pred_check_branch
    %322 = sbr.rel (0) target = $region29
  $region28: #{residual_block_forward.8} parent=0 // pred_region
    _
  $region29: #{residual_block_forward.8} parent=0 // pred_fallthru
    _
  // Predicated region
  $region30: #{residual_block_forward.8} parent=0 // pred_check
    _
  $region31: #{residual_block_forward.8} parent=0 // pred_check_branch
    %324 = sbr.rel (0) target = $region33
  $region32: #{residual_block_forward.8} parent=0 // pred_region
    _
  $region33: #{residual_block_forward.8} parent=0 // pred_fallthru
    _
  // Predicated region
  $region34: #{residual_block_forward.8} parent=0 // pred_check
    _
  $region35: #{residual_block_forward.8} parent=0 // pred_check_branch
    %326 = sbr.rel (0) target = $region37
  $region36: #{residual_block_forward.8} parent=0 // pred_region
    _
  $region37: #{residual_block_forward.8} parent=0 // pred_fallthru
    _

// kernel: residual_block_forward.7
$region0: #{residual_block_forward.7}
  #allocation0 [shape = 'u32[]', space=smem, size = 0x4, offset = 0x4, fixed_abs, tag = 'smem constant byte address 0x4 - core index']
  #allocation1 [shape = 'u32[144,128]{1,0:T(1,128)}', space=vmem, size = 0x12000, scoped, tag = 'internal scratch']
  %s0 = inlined_call_operand.vmem [shape: f32[2,1,10,10,128], index: 0, kind: input, shape index: {}]
  %s1 = inlined_call_operand.vmem [shape: f32[9,128,128], index: 1, kind: input, shape index: {}]
  %s2 = inlined_call_operand.vmem [shape: f32[2,64,128], index: 2, kind: output, shape index: {0}]
  %s3 = inlined_call_operand.vmem [shape: f32[1,128], index: 3, kind: output, shape index: {1}]
  %s4 = inlined_call_operand.vmem [shape: f32[1,128], index: 4, kind: output, shape index: {2}]
  %5 = xla_tuple %s2, %s3, %s4
  %s6 = sld [smem:[#allocation0]]
  $region61: #{residual_block_forward.7} parent=0
    _
  %s8 = ssub.s32 1, %s6
  %s9 = scalar_select 0, %s8, %s6
  loop: start=0, step=1, limit=4
  $region2: #{residual_block_forward.7} parent=0 // loop_pre_header
    _
  $region3: #{residual_block_forward.7} parent=0 // loop_header
    %s11 = sphi 0, %s15
    %p12 = scmp.ge.s32.totalorder %s11, 4
    %s21 = sphi 0, %s23
    %s24 = sphi 0, %s21
    %s25 = sphi 0, %s24
    %s41 = sphi 0, %s25
    %s45 = sphi 0, %s45
    %s47 = sphi 0, %s45
    %s48 = sphi 0, %s47
    %s62 = sphi 0, %s48
    %s68 = sphi 0, %s70
    %s71 = sphi 0, %s68
    %s72 = sphi 0, %s71
    %s88 = sphi 0, %s72
    %s92 = sphi 0, %s92
    %s94 = sphi 0, %s92
    %s95 = sphi 0, %s94
    %s109 = sphi 0, %s95
    %s113 = sphi 0, %s113
    %s115 = sphi 0, %s113
    %s116 = sphi 0, %s115
    %s130 = sphi 0, %s116
  $region4: #{residual_block_forward.7} parent=0 // loop_header_branch
    %14 = sbr.rel (%p12) target = $region8
  $region5: #{residual_block_forward.7} parent=0 // loop_body
    %s16 = ssub.s32 %s11, 1
    %s17 = ssub.s32 %s11, 2
    %s18 = sadd.s32 %s11, 1
    %s19 = ssub.s32 %s11, %s18
    %p20 = scmp.eq.s32.totalorder %s19, 0
    %s22 = sadd.s32 %s21, 1
    %s23 = scalar_select %p20, %s21, %s22
    %p26 = pneg %p20
    %p27 = scmp.eq.s32.totalorder %s11, 1
    %p28 = por %p26, %p27
    %p29 = scmp.ne.s32.totalorder %s21, %s24
    %p30 = scmp.eq.s32.totalorder %s11, 0
    %p31 = por %p29, %p30
    %p32 = scmp.ne.s32.totalorder %s21, %s24
    %p33 = scmp.eq.s32.totalorder %s16, 1
    %p34 = por %p32, %p33
    %p35 = scmp.ne.s32.totalorder %s24, %s25
    %p36 = scmp.eq.s32.totalorder %s16, 0
    %p37 = por %p35, %p36
    %p38 = scmp.ne.s32.totalorder %s24, %s25
    %p39 = scmp.eq.s32.totalorder %s17, 1
    %p40 = por %p38, %p39
    %p42 = scmp.ne.s32.totalorder %s25, %s41
    %p43 = scmp.eq.s32.totalorder %s17, 0
    %p44 = por %p42, %p43
    %s46 = sadd.s32 %s45, 1
    %p49 = scmp.eq.s32.totalorder %s11, 1
    %p50 = scmp.ne.s32.totalorder %s45, %s47
    %p51 = scmp.eq.s32.totalorder %s11, 0
    %p52 = por %p50, %p51
    %p53 = scmp.ne.s32.totalorder %s45, %s47
    %p54 = scmp.eq.s32.totalorder %s16, 1
    %p55 = por %p53, %p54
    %p56 = scmp.ne.s32.totalorder %s47, %s48
    %p57 = scmp.eq.s32.totalorder %s16, 0
    %p58 = por %p56, %p57
    %p59 = scmp.ne.s32.totalorder %s47, %s48
    %p60 = scmp.eq.s32.totalorder %s17, 1
    %p61 = por %p59, %p60
    %p63 = scmp.ne.s32.totalorder %s48, %s62
    %p64 = scmp.eq.s32.totalorder %s17, 0
    %p65 = por %p63, %p64
    %s66 = ssub.s32 %s11, %s18
    %p67 = scmp.eq.s32.totalorder %s66, 0
    %s69 = sadd.s32 %s68, 1
    %s70 = scalar_select %p67, %s68, %s69
    %p73 = pneg %p67
    %p74 = scmp.eq.s32.totalorder %s11, 1
    %p75 = por %p73, %p74
    %p76 = scmp.ne.s32.totalorder %s68, %s71
    %p77 = scmp.eq.s32.totalorder %s11, 0
    %p78 = por %p76, %p77
    %p79 = scmp.ne.s32.totalorder %s68, %s71
    %p80 = scmp.eq.s32.totalorder %s16, 1
    %p81 = por %p79, %p80
    %p82 = scmp.ne.s32.totalorder %s71, %s72
    %p83 = scmp.eq.s32.totalorder %s16, 0
    %p84 = por %p82, %p83
    %p85 = scmp.ne.s32.totalorder %s71, %s72
    %p86 = scmp.eq.s32.totalorder %s17, 1
    %p87 = por %p85, %p86
    %p89 = scmp.ne.s32.totalorder %s72, %s88
    %p90 = scmp.eq.s32.totalorder %s17, 0
    %p91 = por %p89, %p90
    %s93 = sadd.s32 %s92, 1
    %p96 = scmp.eq.s32.totalorder %s11, 1
    %p97 = scmp.ne.s32.totalorder %s92, %s94
    %p98 = scmp.eq.s32.totalorder %s11, 0
    %p99 = por %p97, %p98
    %p100 = scmp.ne.s32.totalorder %s92, %s94
    %p101 = scmp.eq.s32.totalorder %s16, 1
    %p102 = por %p100, %p101
    %p103 = scmp.ne.s32.totalorder %s94, %s95
    %p104 = scmp.eq.s32.totalorder %s16, 0
    %p105 = por %p103, %p104
    %p106 = scmp.ne.s32.totalorder %s94, %s95
    %p107 = scmp.eq.s32.totalorder %s17, 1
    %p108 = por %p106, %p107
    %p110 = scmp.ne.s32.totalorder %s95, %s109
    %p111 = scmp.eq.s32.totalorder %s17, 0
    %p112 = por %p110, %p111
    %s114 = sadd.s32 %s113, 1
    %p117 = scmp.eq.s32.totalorder %s11, 1
    %p118 = scmp.ne.s32.totalorder %s113, %s115
    %p119 = scmp.eq.s32.totalorder %s11, 0
    %p120 = por %p118, %p119
    %p121 = scmp.ne.s32.totalorder %s113, %s115
    %p122 = scmp.eq.s32.totalorder %s16, 1
    %p123 = por %p121, %p122
    %p124 = scmp.ne.s32.totalorder %s115, %s116
    %p125 = scmp.eq.s32.totalorder %s16, 0
    %p126 = por %p124, %p125
    %p127 = scmp.ne.s32.totalorder %s115, %s116
    %p128 = scmp.eq.s32.totalorder %s17, 1
    %p129 = por %p127, %p128
    %p131 = scmp.ne.s32.totalorder %s116, %s130
    %p132 = scmp.eq.s32.totalorder %s17, 0
    %p133 = por %p131, %p132
    %p134 = scmp.le.s32.totalorder 1, %s11
    %p135 = scmp.lt.s32.totalorder %s11, 3
    %p136 = pnand %p134, %p135
    %p137 = pneg %p136
    // Predicated region
    $region9: #{residual_block_forward.7} parent=5 // pred_check
      _
    $region10: #{residual_block_forward.7} parent=5 // pred_check_branch
      %139 = sbr.rel (%p136) target = $region12
    $region11: #{residual_block_forward.7} parent=5 // pred_region
      %s140 = ssub.s32 %s11, 1
      // Predicated region
      $region13: #{residual_block_forward.7} parent=11 // pred_check
        %p141 = pneg %p58
      $region14: #{residual_block_forward.7} parent=11 // pred_check_branch
        %143 = sbr.rel (%p141) target = $region16
      $region15: #{residual_block_forward.7} parent=11 // pred_region
        _
      $region16: #{residual_block_forward.7} parent=11 // pred_fallthru
        _
    $region12: #{residual_block_forward.7} parent=5 // pred_fallthru
      _
    %p144 = scmp.lt.s32.totalorder %s11, 2
    // Predicated region
    $region17: #{residual_block_forward.7} parent=5 // pred_check
      %p145 = pneg %p144
    $region18: #{residual_block_forward.7} parent=5 // pred_check_branch
      %147 = sbr.rel (%p145) target = $region20
    $region19: #{residual_block_forward.7} parent=5 // pred_region
      // Predicated region
      $region21: #{residual_block_forward.7} parent=19 // pred_check
        %p148 = pneg %p31
      $region22: #{residual_block_forward.7} parent=19 // pred_check_branch
        %150 = sbr.rel (%p148) target = $region24
      $region23: #{residual_block_forward.7} parent=19 // pred_region
        %p151 = scmp.lt.s32.totalorder %s11, 1
        %s152 = scalar_select %p151, %s11, 1
        %s153 = smul.addr %s152, 20
        %s154 = smul.addr %s153, 8
        %s155 = scalar_lea.vmem %s0, %s154
      $region24: #{residual_block_forward.7} parent=19 // pred_fallthru
        _
    $region20: #{residual_block_forward.7} parent=5 // pred_fallthru
      _
    %p156 = scmp.le.s32.totalorder 1, %s11
    %p157 = scmp.lt.s32.totalorder %s11, 3
    %p158 = pnand %p156, %p157
    %p159 = pneg %p158
    // Predicated region
    $region25: #{residual_block_forward.7} parent=5 // pred_check
      _
    $region26: #{residual_block_forward.7} parent=5 // pred_check_branch
      %161 = sbr.rel (%p158) target = $region28
    $region27: #{residual_block_forward.7} parent=5 // pred_region
      %s162 = ssub.s32 %s11, 1
      %p163 = scmp.lt.s32.totalorder %s16, 1
      %s164 = scalar_select %p163, %s16, 1
      %s165 = smul.addr %s164, 20
      %s166 = smul.addr %s165, 8
      %s167 = scalar_lea.vmem %s0, %s166
      %p168 = pneg %p37
      %p169 = pneg %p34
      %p170 = pneg %p58
      %p171 = pneg %p55
      %p172 = pneg %p84
      %p173 = pneg %p81
      %p174 = scmp.lt.s32.totalorder %s16, 1
      %s175 = scalar_select %p174, %s16, 1
      %s176 = smul.addr %s175, 8
      %s177 = smul.addr %s176, 8
      %s178 = scalar_lea.vmem %s2, %s177
      %p179 = pneg %p105
      %p180 = pneg %p102
      %p181 = pneg %p126
      %p182 = pneg %p123
      %p183 = scmp.lt.s32.totalorder %s16, 1
      %s184 = scalar_select %p183, %s16, 1
      %s185 = smul.addr %s184, 20
      %s186 = smul.addr %s185, 8
      %s187 = scalar_lea.vmem %s0, %s186
      %p188 = scmp.lt.s32.totalorder %s16, 1
      %s189 = scalar_select %p188, %s16, 1
      %s190 = smul.addr %s189, 8
      %s191 = smul.addr %s190, 8
      %s192 = scalar_lea.vmem %s2, %s191
      %p193 = scmp.eq.s32.totalorder %s16, 0
      // Predicated region
      $region29: #{residual_block_forward.7} parent=27 // pred_check
        %p194 = pneg %p193
      $region30: #{residual_block_forward.7} parent=27 // pred_check_branch
        %196 = sbr.rel (%p194) target = $region32
      $region31: #{residual_block_forward.7} parent=27 // pred_region
        %197 = vst [vmem:[%s3] sm:$0x1] 0.0
        %198 = vst [vmem:[%s4] sm:$0x1] 0.0
      $region32: #{residual_block_forward.7} parent=27 // pred_fallthru
        _
      %v199 = vld [vmem:[%s187] sm:$0xff]
      %v200 = vld [vmem:[%s187 + $0x10] sm:$0xff]
      %v201 = vld [vmem:[%s187 + $0x20] sm:$0xff]
      %v202 = vld [vmem:[%s187 + $0x30] sm:$0xff]
      %v203 = vld [vmem:[%s187 + $0x40] sm:$0xff]
      %v204 = vld [vmem:[%s187 + $0x50] sm:$0xff]
      %v205 = vld [vmem:[%s187 + $0x60] sm:$0xff]
      %v206 = vld [vmem:[%s187 + $0x70] sm:$0xff]
      %v207 = vld [vmem:[%s1] sm:$0xff]
      %v208 = vld [vmem:[%s1 + $0x8] sm:$0xff]
      %v209 = vld [vmem:[%s1 + $0x10] sm:$0xff]
      %v210 = vld [vmem:[%s1 + $0x18] sm:$0xff]
      %v211 = vld [vmem:[%s1 + $0x20] sm:$0xff]
      %v212 = vld [vmem:[%s1 + $0x28] sm:$0xff]
      %v213 = vld [vmem:[%s1 + $0x30] sm:$0xff]
      %v214 = vld [vmem:[%s1 + $0x38] sm:$0xff]
      %v215 = vld [vmem:[%s1 + $0x40] sm:$0xff]
      %v216 = vld [vmem:[%s1 + $0x48] sm:$0xff]
      %v217 = vld [vmem:[%s1 + $0x50] sm:$0xff]
      %v218 = vld [vmem:[%s1 + $0x58] sm:$0xff]
      %v219 = vld [vmem:[%s1 + $0x60] sm:$0xff]
      %v220 = vld [vmem:[%s1 + $0x68] sm:$0xff]
      %v221 = vld [vmem:[%s1 + $0x70] sm:$0xff]
      %v222 = vld [vmem:[%s1 + $0x78] sm:$0xff]
      %v223 = vld [vmem:[%s187 + $0x1] sm:$0xff]
      %v224 = vld [vmem:[%s187 + $0x11] sm:$0xff]
      %v225 = vld [vmem:[%s187 + $0x21] sm:$0xff]
      %v226 = vld [vmem:[%s187 + $0x31] sm:$0xff]
      %v227 = vld [vmem:[%s187 + $0x41] sm:$0xff]
      %v228 = vld [vmem:[%s187 + $0x51] sm:$0xff]
      %v229 = vld [vmem:[%s187 + $0x61] sm:$0xff]
      %v230 = vld [vmem:[%s187 + $0x71] sm:$0xff]
      %s231 = scalar_lea.vmem %s1, 128
      %v232 = vld [vmem:[%s231] sm:$0xff]
      %v233 = vld [vmem:[%s231 + $0x8] sm:$0xff]
      %v234 = vld [vmem:[%s231 + $0x10] sm:$0xff]
      %v235 = vld [vmem:[%s231 + $0x18] sm:$0xff]
      %v236 = vld [vmem:[%s231 + $0x20] sm:$0xff]
      %v237 = vld [vmem:[%s231 + $0x28] sm:$0xff]
      %v238 = vld [vmem:[%s231 + $0x30] sm:$0xff]
      %v239 = vld [vmem:[%s231 + $0x38] sm:$0xff]
      %v240 = vld [vmem:[%s231 + $0x40] sm:$0xff]
      %v241 = vld [vmem:[%s231 + $0x48] sm:$0xff]
      %v242 = vld [vmem:[%s231 + $0x50] sm:$0xff]
      %v243 = vld [vmem:[%s231 + $0x58] sm:$0xff]
      %v244 = vld [vmem:[%s231 + $0x60] sm:$0xff]
      %v245 = vld [vmem:[%s231 + $0x68] sm:$0xff]
      %v246 = vld [vmem:[%s231 + $0x70] sm:$0xff]
      %v247 = vld [vmem:[%s231 + $0x78] sm:$0xff]
      %248 = vmatprep.subr.mxu0 0.0
      %249 = vmatpush1.msra.mxu0 %v247
      %250 = vmatprep.subr.mxu0 0.0
      %251 = vmatpush1.msra.mxu0 %v246
      %252 = vmatprep.subr.mxu0 0.0
      %253 = vmatpush1.msra.mxu0 %v245
      %254 = vmatprep.subr.mxu0 0.0
      %255 = vmatpush1.msra.mxu0 %v244
      %256 = vmatprep.subr.mxu0 0.0
      %257 = vmatpush1.msra.mxu0 %v243
      %258 = vmatprep.subr.mxu0 0.0
      %259 = vmatpush1.msra.mxu0 %v242
      %260 = vmatprep.subr.mxu0 0.0
      %261 = vmatpush1.msra.mxu0 %v241
      %262 = vmatprep.subr.mxu0 0.0
      %263 = vmatpush1.msra.mxu0 %v240
      %264 = vmatprep.subr.mxu0 0.0
      %265 = vmatpush1.msra.mxu0 %v239
      %266 = vmatprep.subr.mxu0 0.0
      %267 = vmatpush1.msra.mxu0 %v238
      %268 = vmatprep.subr.mxu0 0.0
      %269 = vmatpush1.msra.mxu0 %v237
      %270 = vmatprep.subr.mxu0 0.0
      %271 = vmatpush1.msra.mxu0 %v236
      %272 = vmatprep.subr.mxu0 0.0
      %273 = vmatpush1.msra.mxu0 %v235
      %274 = vmatprep.subr.mxu0 0.0
      %275 = vmatpush1.msra.mxu0 %v234
      %276 = vmatprep.subr.mxu0 0.0
      %277 = vmatpush1.msra.mxu0 %v233
      %278 = vmatprep.subr.mxu0 0.0
      %279 = vmatpush1.msra.mxu0 %v232
      %280 = vmatprep.subr.mxu0 0.0
      %281 = vmatpush2.msra.mxu0 0.0
      %282 = vmatprep.subr.mxu0 0.0
      %283 = vmatpush2.msra.mxu0 0.0
      %284 = vmatprep.subr.mxu0 0.0
      %285 = vmatpush2.msra.mxu0 0.0
      %286 = vmatprep.subr.mxu0 0.0
      %287 = vmatpush2.msra.mxu0 0.0
      %288 = vmatprep.subr.mxu0 0.0
      %289 = vmatpush2.msra.mxu0 0.0
      %290 = vmatprep.subr.mxu0 0.0
      %291 = vmatpush2.msra.mxu0 0.0
      %292 = vmatprep.subr.mxu0 0.0
      %293 = vmatpush2.msra.mxu0 0.0
      %294 = vmatprep.subr.mxu0 0.0
      %295 = vmatpush2.msra.mxu0 0.0
      %296 = vmatprep.subr.mxu0 0.0
      %297 = vmatpush2.msra.mxu0 0.0
      %298 = vmatprep.subr.mxu0 0.0
      %299 = vmatpush2.msra.mxu0 0.0
      %300 = vmatprep.subr.mxu0 0.0
      %301 = vmatpush2.msra.mxu0 0.0
      %302 = vmatprep.subr.mxu0 0.0
      %303 = vmatpush2.msra.mxu0 0.0
      %304 = vmatprep.subr.mxu0 0.0
      %305 = vmatpush2.msra.mxu0 0.0
      %306 = vmatprep.subr.mxu0 0.0
      %307 = vmatpush2.msra.mxu0 0.0
      %308 = vmatprep.subr.mxu0 0.0
      %309 = vmatpush2.msra.mxu0 0.0
      %310 = vmatprep.subr.mxu0 0.0
      %311 = vmatpush2.msra.mxu0 0.0
      %312 = vmatprep.mubr.f32.mxu0 0.0
      %313 = vmatmul.mubr.f32.gmra.mxu0 %v223
      %v314 = vpop.f32.mrf.mxu0
      %v315 = vadd.f32 0.0, %v314
      %v316 = vpop.f32.mrf.mxu0
      %317 = vmatprep.mubr.f32.mxu0 0.0
      %318 = vmatmul.mubr.f32.gmra.mxu0 %v224
      %v319 = vpop.f32.mrf.mxu0
      %v320 = vadd.f32 0.0, %v319
      %v321 = vpop.f32.mrf.mxu0
      %322 = vmatprep.mubr.f32.mxu0 0.0
      %323 = vmatmul.mubr.f32.gmra.mxu0 %v225
      %v324 = vpop.f32.mrf.mxu0
      %v325 = vadd.f32 0.0, %v324
      %v326 = vpop.f32.mrf.mxu0
      %327 = vmatprep.mubr.f32.mxu0 0.0
      %328 = vmatmul.mubr.f32.gmra.mxu0 %v226
      %v329 = vpop.f32.mrf.mxu0
      %v330 = vadd.f32 0.0, %v329
      %v331 = vpop.f32.mrf.mxu0
      %332 = vmatprep.mubr.f32.mxu0 0.0
      %333 = vmatmul.mubr.f32.gmra.mxu0 %v227
      %v334 = vpop.f32.mrf.mxu0
      %v335 = vadd.f32 0.0, %v334
      %v336 = vpop.f32.mrf.mxu0
      %337 = vmatprep.mubr.f32.mxu0 0.0
      %338 = vmatmul.mubr.f32.gmra.mxu0 %v228
      %v339 = vpop.f32.mrf.mxu0
      %v340 = vadd.f32 0.0, %v339
      %v341 = vpop.f32.mrf.mxu0
      %342 = vmatprep.mubr.f32.mxu0 0.0
      %343 = vmatmul.mubr.f32.gmra.mxu0 %v229
      %v344 = vpop.f32.mrf.mxu0
      %v345 = vadd.f32 0.0, %v344
      %v346 = vpop.f32.mrf.mxu0
      %347 = vmatprep.mubr.f32.mxu0 0.0
      %348 = vmatmul.mubr.f32.gmra.mxu0 %v230
      %v349 = vpop.f32.mrf.mxu0
      %v350 = vadd.f32 0.0, %v349
      %v351 = vpop.f32.mrf.mxu0
      %352 = vdwg.mxu0
      %353 = vmatprep.subr.mxu0 0.0
      %354 = vmatpush1.msra.mxu0 %v222
      %355 = vmatprep.subr.mxu0 0.0
      %356 = vmatpush1.msra.mxu0 %v221
      %357 = vmatprep.subr.mxu0 0.0
      %358 = vmatpush1.msra.mxu0 %v220
      %359 = vmatprep.subr.mxu0 0.0
      %360 = vmatpush1.msra.mxu0 %v219
      %361 = vmatprep.subr.mxu0 0.0
      %362 = vmatpush1.msra.mxu0 %v218
      %363 = vmatprep.subr.mxu0 0.0
      %364 = vmatpush1.msra.mxu0 %v217
      %365 = vmatprep.subr.mxu0 0.0
      %366 = vmatpush1.msra.mxu0 %v216
      %367 = vmatprep.subr.mxu0 0.0
      %368 = vmatpush1.msra.mxu0 %v215
      %369 = vmatprep.subr.mxu0 0.0
      %370 = vmatpush1.msra.mxu0 %v214
      %371 = vmatprep.subr.mxu0 0.0
      %372 = vmatpush1.msra.mxu0 %v213
      %373 = vmatprep.subr.mxu0 0.0
      %374 = vmatpush1.msra.mxu0 %v212
      %375 = vmatprep.subr.mxu0 0.0
      %376 = vmatpush1.msra.mxu0 %v211
      %377 = vmatprep.subr.mxu0 0.0
      %378 = vmatpush1.msra.mxu0 %v210
      %379 = vmatprep.subr.mxu0 0.0
      %380 = vmatpush1.msra.mxu0 %v209
      %381 = vmatprep.subr.mxu0 0.0
      %382 = vmatpush1.msra.mxu0 %v208
      %383 = vmatprep.subr.mxu0 0.0
      %384 = vmatpush1.msra.mxu0 %v207
      %385 = vmatprep.subr.mxu0 0.0
      %386 = vmatpush2.msra.mxu0 0.0
      %387 = vmatprep.subr.mxu0 0.0
      %388 = vmatpush2.msra.mxu0 0.0
      %389 = vmatprep.subr.mxu0 0.0
      %390 = vmatpush2.msra.mxu0 0.0
      %391 = vmatprep.subr.mxu0 0.0
      %392 = vmatpush2.msra.mxu0 0.0
      %393 = vmatprep.subr.mxu0 0.0
      %394 = vmatpush2.msra.mxu0 0.0
      %395 = vmatprep.subr.mxu0 0.0
      %396 = vmatpush2.msra.mxu0 0.0
      %397 = vmatprep.subr.mxu0 0.0
      %398 = vmatpush2.msra.mxu0 0.0
      %399 = vmatprep.subr.mxu0 0.0
      %400 = vmatpush2.msra.mxu0 0.0
      %401 = vmatprep.subr.mxu0 0.0
      %402 = vmatpush2.msra.mxu0 0.0
      %403 = vmatprep.subr.mxu0 0.0
      %404 = vmatpush2.msra.mxu0 0.0
      %405 = vmatprep.subr.mxu0 0.0
      %406 = vmatpush2.msra.mxu0 0.0
      %407 = vmatprep.subr.mxu0 0.0
      %408 = vmatpush2.msra.mxu0 0.0
      %409 = vmatprep.subr.mxu0 0.0
      %410 = vmatpush2.msra.mxu0 0.0
      %411 = vmatprep.subr.mxu0 0.0
      %412 = vmatpush2.msra.mxu0 0.0
      %413 = vmatprep.subr.mxu0 0.0
      %414 = vmatpush2.msra.mxu0 0.0
      %415 = vmatprep.subr.mxu0 0.0
      %416 = vmatpush2.msra.mxu0 0.0
      %417 = vmatprep.mubr.f32.mxu0 0.0
      %418 = vmatmul.mubr.f32.gmra.mxu0 %v199
      %v419 = vpop.f32.mrf.mxu0
      %v420 = vadd.f32 %v315, %v419
      %v421 = vpop.f32.mrf.mxu0
      %422 = vmatprep.mubr.f32.mxu0 0.0
      %423 = vmatmul.mubr.f32.gmra.mxu0 %v200
      %v424 = vpop.f32.mrf.mxu0
      %v425 = vadd.f32 %v320, %v424
      %v426 = vpop.f32.mrf.mxu0
      %427 = vmatprep.mubr.f32.mxu0 0.0
      %428 = vmatmul.mubr.f32.gmra.mxu0 %v201
      %v429 = vpop.f32.mrf.mxu0
      %v430 = vadd.f32 %v325, %v429
      %v431 = vpop.f32.mrf.mxu0
      %432 = vmatprep.mubr.f32.mxu0 0.0
      %433 = vmatmul.mubr.f32.gmra.mxu0 %v202
      %v434 = vpop.f32.mrf.mxu0
      %v435 = vadd.f32 %v330, %v434
      %v436 = vpop.f32.mrf.mxu0
      %437 = vmatprep.mubr.f32.mxu0 0.0
      %438 = vmatmul.mubr.f32.gmra.mxu0 %v203
      %v439 = vpop.f32.mrf.mxu0
      %v440 = vadd.f32 %v335, %v439
      %v441 = vpop.f32.mrf.mxu0
      %442 = vmatprep.mubr.f32.mxu0 0.0
      %443 = vmatmul.mubr.f32.gmra.mxu0 %v204
      %v444 = vpop.f32.mrf.mxu0
      %v445 = vadd.f32 %v340, %v444
      %v446 = vpop.f32.mrf.mxu0
      %447 = vmatprep.mubr.f32.mxu0 0.0
      %448 = vmatmul.mubr.f32.gmra.mxu0 %v205
      %v449 = vpop.f32.mrf.mxu0
      %v450 = vadd.f32 %v345, %v449
      %v451 = vpop.f32.mrf.mxu0
      %452 = vmatprep.mubr.f32.mxu0 0.0
      %453 = vmatmul.mubr.f32.gmra.mxu0 %v206
      %v454 = vpop.f32.mrf.mxu0
      %v455 = vadd.f32 %v350, %v454
      %v456 = vpop.f32.mrf.mxu0
      %457 = vdwg.mxu0
      %v458 = vld [vmem:[%s187 + $0x2] sm:$0xff]
      %v459 = vld [vmem:[%s187 + $0x12] sm:$0xff]
      %v460 = vld [vmem:[%s187 + $0x22] sm:$0xff]
      %v461 = vld [vmem:[%s187 + $0x32] sm:$0xff]
      %v462 = vld [vmem:[%s187 + $0x42] sm:$0xff]
      %v463 = vld [vmem:[%s187 + $0x52] sm:$0xff]
      %v464 = vld [vmem:[%s187 + $0x62] sm:$0xff]
      %v465 = vld [vmem:[%s187 + $0x72] sm:$0xff]
      %s466 = scalar_lea.vmem %s1, 256
      %v467 = vld [vmem:[%s466] sm:$0xff]
      %v468 = vld [vmem:[%s466 + $0x8] sm:$0xff]
      %v469 = vld [vmem:[%s466 + $0x10] sm:$0xff]
      %v470 = vld [vmem:[%s466 + $0x18] sm:$0xff]
      %v471 = vld [vmem:[%s466 + $0x20] sm:$0xff]
      %v472 = vld [vmem:[%s466 + $0x28] sm:$0xff]
      %v473 = vld [vmem:[%s466 + $0x30] sm:$0xff]
      %v474 = vld [vmem:[%s466 + $0x38] sm:$0xff]
      %v475 = vld [vmem:[%s466 + $0x40] sm:$0xff]
      %v476 = vld [vmem:[%s466 + $0x48] sm:$0xff]
      %v477 = vld [vmem:[%s466 + $0x50] sm:$0xff]
      %v478 = vld [vmem:[%s466 + $0x58] sm:$0xff]
      %v479 = vld [vmem:[%s466 + $0x60] sm:$0xff]
      %v480 = vld [vmem:[%s466 + $0x68] sm:$0xff]
      %v481 = vld [vmem:[%s466 + $0x70] sm:$0xff]
      %v482 = vld [vmem:[%s466 + $0x78] sm:$0xff]
      %483 = vmatprep.subr.mxu0 0.0
      %484 = vmatpush1.msra.mxu0 %v482
      %485 = vmatprep.subr.mxu0 0.0
      %486 = vmatpush1.msra.mxu0 %v481
      %487 = vmatprep.subr.mxu0 0.0
      %488 = vmatpush1.msra.mxu0 %v480
      %489 = vmatprep.subr.mxu0 0.0
      %490 = vmatpush1.msra.mxu0 %v479
      %491 = vmatprep.subr.mxu0 0.0
      %492 = vmatpush1.msra.mxu0 %v478
      %493 = vmatprep.subr.mxu0 0.0
      %494 = vmatpush1.msra.mxu0 %v477
      %495 = vmatprep.subr.mxu0 0.0
      %496 = vmatpush1.msra.mxu0 %v476
      %497 = vmatprep.subr.mxu0 0.0
      %498 = vmatpush1.msra.mxu0 %v475
      %499 = vmatprep.subr.mxu0 0.0
      %500 = vmatpush1.msra.mxu0 %v474
      %501 = vmatprep.subr.mxu0 0.0
      %502 = vmatpush1.msra.mxu0 %v473
      %503 = vmatprep.subr.mxu0 0.0
      %504 = vmatpush1.msra.mxu0 %v472
      %505 = vmatprep.subr.mxu0 0.0
      %506 = vmatpush1.msra.mxu0 %v471
      %507 = vmatprep.subr.mxu0 0.0
      %508 = vmatpush1.msra.mxu0 %v470
      %509 = vmatprep.subr.mxu0 0.0
      %510 = vmatpush1.msra.mxu0 %v469
      %511 = vmatprep.subr.mxu0 0.0
      %512 = vmatpush1.msra.mxu0 %v468
      %513 = vmatprep.subr.mxu0 0.0
      %514 = vmatpush1.msra.mxu0 %v467
      %515 = vmatprep.subr.mxu0 0.0
      %516 = vmatpush2.msra.mxu0 0.0
      %517 = vmatprep.subr.mxu0 0.0
      %518 = vmatpush2.msra.mxu0 0.0
      %519 = vmatprep.subr.mxu0 0.0
      %520 = vmatpush2.msra.mxu0 0.0
      %521 = vmatprep.subr.mxu0 0.0
      %522 = vmatpush2.msra.mxu0 0.0
      %523 = vmatprep.subr.mxu0 0.0
      %524 = vmatpush2.msra.mxu0 0.0
      %525 = vmatprep.subr.mxu0 0.0
      %526 = vmatpush2.msra.mxu0 0.0
      %527 = vmatprep.subr.mxu0 0.0
      %528 = vmatpush2.msra.mxu0 0.0
      %529 = vmatprep.subr.mxu0 0.0
      %530 = vmatpush2.msra.mxu0 0.0
      %531 = vmatprep.subr.mxu0 0.0
      %532 = vmatpush2.msra.mxu0 0.0
      %533 = vmatprep.subr.mxu0 0.0
      %534 = vmatpush2.msra.mxu0 0.0
      %535 = vmatprep.subr.mxu0 0.0
      %536 = vmatpush2.msra.mxu0 0.0
      %537 = vmatprep.subr.mxu0 0.0
      %538 = vmatpush2.msra.mxu0 0.0
      %539 = vmatprep.subr.mxu0 0.0
      %540 = vmatpush2.msra.mxu0 0.0
      %541 = vmatprep.subr.mxu0 0.0
      %542 = vmatpush2.msra.mxu0 0.0
      %543 = vmatprep.subr.mxu0 0.0
      %544 = vmatpush2.msra.mxu0 0.0
      %545 = vmatprep.subr.mxu0 0.0
      %546 = vmatpush2.msra.mxu0 0.0
      %547 = vmatprep.mubr.f32.mxu0 0.0
      %548 = vmatmul.mubr.f32.gmra.mxu0 %v458
      %v549 = vpop.f32.mrf.mxu0
      %v550 = vadd.f32 0.0, %v549
      %v551 = vpop.f32.mrf.mxu0
      %552 = vmatprep.mubr.f32.mxu0 0.0
      %553 = vmatmul.mubr.f32.gmra.mxu0 %v459
      %v554 = vpop.f32.mrf.mxu0
      %v555 = vadd.f32 0.0, %v554
      %v556 = vpop.f32.mrf.mxu0
      %557 = vmatprep.mubr.f32.mxu0 0.0
      %558 = vmatmul.mubr.f32.gmra.mxu0 %v460
      %v559 = vpop.f32.mrf.mxu0
      %v560 = vadd.f32 0.0, %v559
      %v561 = vpop.f32.mrf.mxu0
      %562 = vmatprep.mubr.f32.mxu0 0.0
      %563 = vmatmul.mubr.f32.gmra.mxu0 %v461
      %v564 = vpop.f32.mrf.mxu0
      %v565 = vadd.f32 0.0, %v564
      %v566 = vpop.f32.mrf.mxu0
      %567 = vmatprep.mubr.f32.mxu0 0.0
      %568 = vmatmul.mubr.f32.gmra.mxu0 %v462
      %v569 = vpop.f32.mrf.mxu0
      %v570 = vadd.f32 0.0, %v569
      %v571 = vpop.f32.mrf.mxu0
      %572 = vmatprep.mubr.f32.mxu0 0.0
      %573 = vmatmul.mubr.f32.gmra.mxu0 %v463
      %v574 = vpop.f32.mrf.mxu0
      %v575 = vadd.f32 0.0, %v574
      %v576 = vpop.f32.mrf.mxu0
      %577 = vmatprep.mubr.f32.mxu0 0.0
      %578 = vmatmul.mubr.f32.gmra.mxu0 %v464
      %v579 = vpop.f32.mrf.mxu0
      %v580 = vadd.f32 0.0, %v579
      %v581 = vpop.f32.mrf.mxu0
      %582 = vmatprep.mubr.f32.mxu0 0.0
      %583 = vmatmul.mubr.f32.gmra.mxu0 %v465
      %v584 = vpop.f32.mrf.mxu0
      %v585 = vadd.f32 0.0, %v584
      %v586 = vpop.f32.mrf.mxu0
      %587 = vdwg.mxu0
      %v588 = vadd.f32 %v420, %v550
      %v589 = vadd.f32 %v425, %v555
      %v590 = vadd.f32 %v430, %v560
      %v591 = vadd.f32 %v435, %v565
      %v592 = vadd.f32 %v440, %v570
      %v593 = vadd.f32 %v445, %v575
      %v594 = vadd.f32 %v450, %v580
      %v595 = vadd.f32 %v455, %v585
      %s596 = scalar_lea.vmem %s187, 16
      %v597 = vld [vmem:[%s596] sm:$0xff]
      %v598 = vld [vmem:[%s596 + $0x10] sm:$0xff]
      %v599 = vld [vmem:[%s596 + $0x20] sm:$0xff]
      %v600 = vld [vmem:[%s596 + $0x30] sm:$0xff]
      %v601 = vld [vmem:[%s596 + $0x40] sm:$0xff]
      %v602 = vld [vmem:[%s596 + $0x50] sm:$0xff]
      %v603 = vld [vmem:[%s596 + $0x60] sm:$0xff]
      %v604 = vld [vmem:[%s596 + $0x70] sm:$0xff]
      %s605 = scalar_lea.vmem %s1, 384
      %v606 = vld [vmem:[%s605] sm:$0xff]
      %v607 = vld [vmem:[%s605 + $0x8] sm:$0xff]
      %v608 = vld [vmem:[%s605 + $0x10] sm:$0xff]
      %v609 = vld [vmem:[%s605 + $0x18] sm:$0xff]
      %v610 = vld [vmem:[%s605 + $0x20] sm:$0xff]
      %v611 = vld [vmem:[%s605 + $0x28] sm:$0xff]
      %v612 = vld [vmem:[%s605 + $0x30] sm:$0xff]
      %v613 = vld [vmem:[%s605 + $0x38] sm:$0xff]
      %v614 = vld [vmem:[%s605 + $0x40] sm:$0xff]
      %v615 = vld [vmem:[%s605 + $0x48] sm:$0xff]
      %v616 = vld [vmem:[%s605 + $0x50] sm:$0xff]
      %v617 = vld [vmem:[%s605 + $0x58] sm:$0xff]
      %v618 = vld [vmem:[%s605 + $0x60] sm:$0xff]
      %v619 = vld [vmem:[%s605 + $0x68] sm:$0xff]
      %v620 = vld [vmem:[%s605 + $0x70] sm:$0xff]
      %v621 = vld [vmem:[%s605 + $0x78] sm:$0xff]
      %622 = vmatprep.subr.mxu0 0.0
      %623 = vmatpush1.msra.mxu0 %v621
      %624 = vmatprep.subr.mxu0 0.0
      %625 = vmatpush1.msra.mxu0 %v620
      %626 = vmatprep.subr.mxu0 0.0
      %627 = vmatpush1.msra.mxu0 %v619
      %628 = vmatprep.subr.mxu0 0.0
      %629 = vmatpush1.msra.mxu0 %v618
      %630 = vmatprep.subr.mxu0 0.0
      %631 = vmatpush1.msra.mxu0 %v617
      %632 = vmatprep.subr.mxu0 0.0
      %633 = vmatpush1.msra.mxu0 %v616
      %634 = vmatprep.subr.mxu0 0.0
      %635 = vmatpush1.msra.mxu0 %v615
      %636 = vmatprep.subr.mxu0 0.0
      %637 = vmatpush1.msra.mxu0 %v614
      %638 = vmatprep.subr.mxu0 0.0
      %639 = vmatpush1.msra.mxu0 %v613
      %640 = vmatprep.subr.mxu0 0.0
      %641 = vmatpush1.msra.mxu0 %v612
      %642 = vmatprep.subr.mxu0 0.0
      %643 = vmatpush1.msra.mxu0 %v611
      %644 = vmatprep.subr.mxu0 0.0
      %645 = vmatpush1.msra.mxu0 %v610
      %646 = vmatprep.subr.mxu0 0.0
      %647 = vmatpush1.msra.mxu0 %v609
      %648 = vmatprep.subr.mxu0 0.0
      %649 = vmatpush1.msra.mxu0 %v608
      %650 = vmatprep.subr.mxu0 0.0
      %651 = vmatpush1.msra.mxu0 %v607
      %652 = vmatprep.subr.mxu0 0.0
      %653 = vmatpush1.msra.mxu0 %v606
      %654 = vmatprep.subr.mxu0 0.0
      %655 = vmatpush2.msra.mxu0 0.0
      %656 = vmatprep.subr.mxu0 0.0
      %657 = vmatpush2.msra.mxu0 0.0
      %658 = vmatprep.subr.mxu0 0.0
      %659 = vmatpush2.msra.mxu0 0.0
      %660 = vmatprep.subr.mxu0 0.0
      %661 = vmatpush2.msra.mxu0 0.0
      %662 = vmatprep.subr.mxu0 0.0
      %663 = vmatpush2.msra.mxu0 0.0
      %664 = vmatprep.subr.mxu0 0.0
      %665 = vmatpush2.msra.mxu0 0.0
      %666 = vmatprep.subr.mxu0 0.0
      %667 = vmatpush2.msra.mxu0 0.0
      %668 = vmatprep.subr.mxu0 0.0
      %669 = vmatpush2.msra.mxu0 0.0
      %670 = vmatprep.subr.mxu0 0.0
      %671 = vmatpush2.msra.mxu0 0.0
      %672 = vmatprep.subr.mxu0 0.0
      %673 = vmatpush2.msra.mxu0 0.0
      %674 = vmatprep.subr.mxu0 0.0
      %675 = vmatpush2.msra.mxu0 0.0
      %676 = vmatprep.subr.mxu0 0.0
      %677 = vmatpush2.msra.mxu0 0.0
      %678 = vmatprep.subr.mxu0 0.0
      %679 = vmatpush2.msra.mxu0 0.0
      %680 = vmatprep.subr.mxu0 0.0
      %681 = vmatpush2.msra.mxu0 0.0
      %682 = vmatprep.subr.mxu0 0.0
      %683 = vmatpush2.msra.mxu0 0.0
      %684 = vmatprep.subr.mxu0 0.0
      %685 = vmatpush2.msra.mxu0 0.0
      %686 = vmatprep.mubr.f32.mxu0 0.0
      %687 = vmatmul.mubr.f32.gmra.mxu0 %v597
      %v688 = vpop.f32.mrf.mxu0
      %v689 = vadd.f32 0.0, %v688
      %v690 = vpop.f32.mrf.mxu0
      %691 = vmatprep.mubr.f32.mxu0 0.0
      %692 = vmatmul.mubr.f32.gmra.mxu0 %v598
      %v693 = vpop.f32.mrf.mxu0
      %v694 = vadd.f32 0.0, %v693
      %v695 = vpop.f32.mrf.mxu0
      %696 = vmatprep.mubr.f32.mxu0 0.0
      %697 = vmatmul.mubr.f32.gmra.mxu0 %v599
      %v698 = vpop.f32.mrf.mxu0
      %v699 = vadd.f32 0.0, %v698
      %v700 = vpop.f32.mrf.mxu0
      %701 = vmatprep.mubr.f32.mxu0 0.0
      %702 = vmatmul.mubr.f32.gmra.mxu0 %v600
      %v703 = vpop.f32.mrf.mxu0
      %v704 = vadd.f32 0.0, %v703
      %v705 = vpop.f32.mrf.mxu0
      %706 = vmatprep.mubr.f32.mxu0 0.0
      %707 = vmatmul.mubr.f32.gmra.mxu0 %v601
      %v708 = vpop.f32.mrf.mxu0
      %v709 = vadd.f32 0.0, %v708
      %v710 = vpop.f32.mrf.mxu0
      %711 = vmatprep.mubr.f32.mxu0 0.0
      %712 = vmatmul.mubr.f32.gmra.mxu0 %v602
      %v713 = vpop.f32.mrf.mxu0
      %v714 = vadd.f32 0.0, %v713
      %v715 = vpop.f32.mrf.mxu0
      %716 = vmatprep.mubr.f32.mxu0 0.0
      %717 = vmatmul.mubr.f32.gmra.mxu0 %v603
      %v718 = vpop.f32.mrf.mxu0
      %v719 = vadd.f32 0.0, %v718
      %v720 = vpop.f32.mrf.mxu0
      %721 = vmatprep.mubr.f32.mxu0 0.0
      %722 = vmatmul.mubr.f32.gmra.mxu0 %v604
      %v723 = vpop.f32.mrf.mxu0
      %v724 = vadd.f32 0.0, %v723
      %v725 = vpop.f32.mrf.mxu0
      %726 = vdwg.mxu0
      %v727 = vadd.f32 %v588, %v689
      %v728 = vadd.f32 %v589, %v694
      %v729 = vadd.f32 %v590, %v699
      %v730 = vadd.f32 %v591, %v704
      %v731 = vadd.f32 %v592, %v709
      %v732 = vadd.f32 %v593, %v714
      %v733 = vadd.f32 %v594, %v719
      %v734 = vadd.f32 %v595, %v724
      %v735 = vld [vmem:[%s596 + $0x1] sm:$0xff]
      %v736 = vld [vmem:[%s596 + $0x11] sm:$0xff]
      %v737 = vld [vmem:[%s596 + $0x21] sm:$0xff]
      %v738 = vld [vmem:[%s596 + $0x31] sm:$0xff]
      %v739 = vld [vmem:[%s596 + $0x41] sm:$0xff]
      %v740 = vld [vmem:[%s596 + $0x51] sm:$0xff]
      %v741 = vld [vmem:[%s596 + $0x61] sm:$0xff]
      %v742 = vld [vmem:[%s596 + $0x71] sm:$0xff]
      %s743 = scalar_lea.vmem %s1, 512
      %v744 = vld [vmem:[%s743] sm:$0xff]
      %v745 = vld [vmem:[%s743 + $0x8] sm:$0xff]
      %v746 = vld [vmem:[%s743 + $0x10] sm:$0xff]
      %v747 = vld [vmem:[%s743 + $0x18] sm:$0xff]
      %v748 = vld [vmem:[%s743 + $0x20] sm:$0xff]
      %v749 = vld [vmem:[%s743 + $0x28] sm:$0xff]
      %v750 = vld [vmem:[%s743 + $0x30] sm:$0xff]
      %v751 = vld [vmem:[%s743 + $0x38] sm:$0xff]
      %v752 = vld [vmem:[%s743 + $0x40] sm:$0xff]
      %v753 = vld [vmem:[%s743 + $0x48] sm:$0xff]
      %v754 = vld [vmem:[%s743 + $0x50] sm:$0xff]
      %v755 = vld [vmem:[%s743 + $0x58] sm:$0xff]
      %v756 = vld [vmem:[%s743 + $0x60] sm:$0xff]
      %v757 = vld [vmem:[%s743 + $0x68] sm:$0xff]
      %v758 = vld [vmem:[%s743 + $0x70] sm:$0xff]
      %v759 = vld [vmem:[%s743 + $0x78] sm:$0xff]
      %760 = vmatprep.subr.mxu0 0.0
      %761 = vmatpush1.msra.mxu0 %v759
      %762 = vmatprep.subr.mxu0 0.0
      %763 = vmatpush1.msra.mxu0 %v758
      %764 = vmatprep.subr.mxu0 0.0
      %765 = vmatpush1.msra.mxu0 %v757
      %766 = vmatprep.subr.mxu0 0.0
      %767 = vmatpush1.msra.mxu0 %v756
      %768 = vmatprep.subr.mxu0 0.0
      %769 = vmatpush1.msra.mxu0 %v755
      %770 = vmatprep.subr.mxu0 0.0
      %771 = vmatpush1.msra.mxu0 %v754
      %772 = vmatprep.subr.mxu0 0.0
      %773 = vmatpush1.msra.mxu0 %v753
      %774 = vmatprep.subr.mxu0 0.0
      %775 = vmatpush1.msra.mxu0 %v752
      %776 = vmatprep.subr.mxu0 0.0
      %777 = vmatpush1.msra.mxu0 %v751
      %778 = vmatprep.subr.mxu0 0.0
      %779 = vmatpush1.msra.mxu0 %v750
      %780 = vmatprep.subr.mxu0 0.0
      %781 = vmatpush1.msra.mxu0 %v749
      %782 = vmatprep.subr.mxu0 0.0
      %783 = vmatpush1.msra.mxu0 %v748
      %784 = vmatprep.subr.mxu0 0.0
      %785 = vmatpush1.msra.mxu0 %v747
      %786 = vmatprep.subr.mxu0 0.0
      %787 = vmatpush1.msra.mxu0 %v746
      %788 = vmatprep.subr.mxu0 0.0
      %789 = vmatpush1.msra.mxu0 %v745
      %790 = vmatprep.subr.mxu0 0.0
      %791 = vmatpush1.msra.mxu0 %v744
      %792 = vmatprep.subr.mxu0 0.0
      %793 = vmatpush2.msra.mxu0 0.0
      %794 = vmatprep.subr.mxu0 0.0
      %795 = vmatpush2.msra.mxu0 0.0
      %796 = vmatprep.subr.mxu0 0.0
      %797 = vmatpush2.msra.mxu0 0.0
      %798 = vmatprep.subr.mxu0 0.0
      %799 = vmatpush2.msra.mxu0 0.0
      %800 = vmatprep.subr.mxu0 0.0
      %801 = vmatpush2.msra.mxu0 0.0
      %802 = vmatprep.subr.mxu0 0.0
      %803 = vmatpush2.msra.mxu0 0.0
      %804 = vmatprep.subr.mxu0 0.0
      %805 = vmatpush2.msra.mxu0 0.0
      %806 = vmatprep.subr.mxu0 0.0
      %807 = vmatpush2.msra.mxu0 0.0
      %808 = vmatprep.subr.mxu0 0.0
      %809 = vmatpush2.msra.mxu0 0.0
      %810 = vmatprep.subr.mxu0 0.0
      %811 = vmatpush2.msra.mxu0 0.0
      %812 = vmatprep.subr.mxu0 0.0
      %813 = vmatpush2.msra.mxu0 0.0
      %814 = vmatprep.subr.mxu0 0.0
      %815 = vmatpush2.msra.mxu0 0.0
      %816 = vmatprep.subr.mxu0 0.0
      %817 = vmatpush2.msra.mxu0 0.0
      %818 = vmatprep.subr.mxu0 0.0
      %819 = vmatpush2.msra.mxu0 0.0
      %820 = vmatprep.subr.mxu0 0.0
      %821 = vmatpush2.msra.mxu0 0.0
      %822 = vmatprep.subr.mxu0 0.0
      %823 = vmatpush2.msra.mxu0 0.0
      %824 = vmatprep.mubr.f32.mxu0 0.0
      %825 = vmatmul.mubr.f32.gmra.mxu0 %v735
      %v826 = vpop.f32.mrf.mxu0
      %v827 = vadd.f32 0.0, %v826
      %v828 = vpop.f32.mrf.mxu0
      %829 = vmatprep.mubr.f32.mxu0 0.0
      %830 = vmatmul.mubr.f32.gmra.mxu0 %v736
      %v831 = vpop.f32.mrf.mxu0
      %v832 = vadd.f32 0.0, %v831
      %v833 = vpop.f32.mrf.mxu0
      %834 = vmatprep.mubr.f32.mxu0 0.0
      %835 = vmatmul.mubr.f32.gmra.mxu0 %v737
      %v836 = vpop.f32.mrf.mxu0
      %v837 = vadd.f32 0.0, %v836
      %v838 = vpop.f32.mrf.mxu0
      %839 = vmatprep.mubr.f32.mxu0 0.0
      %840 = vmatmul.mubr.f32.gmra.mxu0 %v738
      %v841 = vpop.f32.mrf.mxu0
      %v842 = vadd.f32 0.0, %v841
      %v843 = vpop.f32.mrf.mxu0
      %844 = vmatprep.mubr.f32.mxu0 0.0
      %845 = vmatmul.mubr.f32.gmra.mxu0 %v739
      %v846 = vpop.f32.mrf.mxu0
      %v847 = vadd.f32 0.0, %v846
      %v848 = vpop.f32.mrf.mxu0
      %849 = vmatprep.mubr.f32.mxu0 0.0
      %850 = vmatmul.mubr.f32.gmra.mxu0 %v740
      %v851 = vpop.f32.mrf.mxu0
      %v852 = vadd.f32 0.0, %v851
      %v853 = vpop.f32.mrf.mxu0
      %854 = vmatprep.mubr.f32.mxu0 0.0
      %855 = vmatmul.mubr.f32.gmra.mxu0 %v741
      %v856 = vpop.f32.mrf.mxu0
      %v857 = vadd.f32 0.0, %v856
      %v858 = vpop.f32.mrf.mxu0
      %859 = vmatprep.mubr.f32.mxu0 0.0
      %860 = vmatmul.mubr.f32.gmra.mxu0 %v742
      %v861 = vpop.f32.mrf.mxu0
      %v862 = vadd.f32 0.0, %v861
      %v863 = vpop.f32.mrf.mxu0
      %864 = vdwg.mxu0
      %v865 = vadd.f32 %v727, %v827
      %v866 = vadd.f32 %v728, %v832
      %v867 = vadd.f32 %v729, %v837
      %v868 = vadd.f32 %v730, %v842
      %v869 = vadd.f32 %v731, %v847
      %v870 = vadd.f32 %v732, %v852
      %v871 = vadd.f32 %v733, %v857
      %v872 = vadd.f32 %v734, %v862
      %v873 = vld [vmem:[%s596 + $0x2] sm:$0xff]
      %v874 = vld [vmem:[%s596 + $0x12] sm:$0xff]
      %v875 = vld [vmem:[%s596 + $0x22] sm:$0xff]
      %v876 = vld [vmem:[%s596 + $0x32] sm:$0xff]
      %v877 = vld [vmem:[%s596 + $0x42] sm:$0xff]
      %v878 = vld [vmem:[%s596 + $0x52] sm:$0xff]
      %v879 = vld [vmem:[%s596 + $0x62] sm:$0xff]
      %v880 = vld [vmem:[%s596 + $0x72] sm:$0xff]
      %s881 = scalar_lea.vmem %s1, 640
      %v882 = vld [vmem:[%s881] sm:$0xff]
      %v883 = vld [vmem:[%s881 + $0x8] sm:$0xff]
      %v884 = vld [vmem:[%s881 + $0x10] sm:$0xff]
      %v885 = vld [vmem:[%s881 + $0x18] sm:$0xff]
      %v886 = vld [vmem:[%s881 + $0x20] sm:$0xff]
      %v887 = vld [vmem:[%s881 + $0x28] sm:$0xff]
      %v888 = vld [vmem:[%s881 + $0x30] sm:$0xff]
      %v889 = vld [vmem:[%s881 + $0x38] sm:$0xff]
      %v890 = vld [vmem:[%s881 + $0x40] sm:$0xff]
      %v891 = vld [vmem:[%s881 + $0x48] sm:$0xff]
      %v892 = vld [vmem:[%s881 + $0x50] sm:$0xff]
      %v893 = vld [vmem:[%s881 + $0x58] sm:$0xff]
      %v894 = vld [vmem:[%s881 + $0x60] sm:$0xff]
      %v895 = vld [vmem:[%s881 + $0x68] sm:$0xff]
      %v896 = vld [vmem:[%s881 + $0x70] sm:$0xff]
      %v897 = vld [vmem:[%s881 + $0x78] sm:$0xff]
      %898 = vmatprep.subr.mxu0 0.0
      %899 = vmatpush1.msra.mxu0 %v897
      %900 = vmatprep.subr.mxu0 0.0
      %901 = vmatpush1.msra.mxu0 %v896
      %902 = vmatprep.subr.mxu0 0.0
      %903 = vmatpush1.msra.mxu0 %v895
      %904 = vmatprep.subr.mxu0 0.0
      %905 = vmatpush1.msra.mxu0 %v894
      %906 = vmatprep.subr.mxu0 0.0
      %907 = vmatpush1.msra.mxu0 %v893
      %908 = vmatprep.subr.mxu0 0.0
      %909 = vmatpush1.msra.mxu0 %v892
      %910 = vmatprep.subr.mxu0 0.0
      %911 = vmatpush1.msra.mxu0 %v891
      %912 = vmatprep.subr.mxu0 0.0
      %913 = vmatpush1.msra.mxu0 %v890
      %914 = vmatprep.subr.mxu0 0.0
      %915 = vmatpush1.msra.mxu0 %v889
      %916 = vmatprep.subr.mxu0 0.0
      %917 = vmatpush1.msra.mxu0 %v888
      %918 = vmatprep.subr.mxu0 0.0
      %919 = vmatpush1.msra.mxu0 %v887
      %920 = vmatprep.subr.mxu0 0.0
      %921 = vmatpush1.msra.mxu0 %v886
      %922 = vmatprep.subr.mxu0 0.0
      %923 = vmatpush1.msra.mxu0 %v885
      %924 = vmatprep.subr.mxu0 0.0
      %925 = vmatpush1.msra.mxu0 %v884
      %926 = vmatprep.subr.mxu0 0.0
      %927 = vmatpush1.msra.mxu0 %v883
      %928 = vmatprep.subr.mxu0 0.0
      %929 = vmatpush1.msra.mxu0 %v882
      %930 = vmatprep.subr.mxu0 0.0
      %931 = vmatpush2.msra.mxu0 0.0
      %932 = vmatprep.subr.mxu0 0.0
      %933 = vmatpush2.msra.mxu0 0.0
      %934 = vmatprep.subr.mxu0 0.0
      %935 = vmatpush2.msra.mxu0 0.0
      %936 = vmatprep.subr.mxu0 0.0
      %937 = vmatpush2.msra.mxu0 0.0
      %938 = vmatprep.subr.mxu0 0.0
      %939 = vmatpush2.msra.mxu0 0.0
      %940 = vmatprep.subr.mxu0 0.0
      %941 = vmatpush2.msra.mxu0 0.0
      %942 = vmatprep.subr.mxu0 0.0
      %943 = vmatpush2.msra.mxu0 0.0
      %944 = vmatprep.subr.mxu0 0.0
      %945 = vmatpush2.msra.mxu0 0.0
      %946 = vmatprep.subr.mxu0 0.0
      %947 = vmatpush2.msra.mxu0 0.0
      %948 = vmatprep.subr.mxu0 0.0
      %949 = vmatpush2.msra.mxu0 0.0
      %950 = vmatprep.subr.mxu0 0.0
      %951 = vmatpush2.msra.mxu0 0.0
      %952 = vmatprep.subr.mxu0 0.0
      %953 = vmatpush2.msra.mxu0 0.0
      %954 = vmatprep.subr.mxu0 0.0
      %955 = vmatpush2.msra.mxu0 0.0
      %956 = vmatprep.subr.mxu0 0.0
      %957 = vmatpush2.msra.mxu0 0.0
      %958 = vmatprep.subr.mxu0 0.0
      %959 = vmatpush2.msra.mxu0 0.0
      %960 = vmatprep.subr.mxu0 0.0
      %961 = vmatpush2.msra.mxu0 0.0
      %962 = vmatprep.mubr.f32.mxu0 0.0
      %963 = vmatmul.mubr.f32.gmra.mxu0 %v873
      %v964 = vpop.f32.mrf.mxu0
      %v965 = vadd.f32 0.0, %v964
      %v966 = vpop.f32.mrf.mxu0
      %967 = vmatprep.mubr.f32.mxu0 0.0
      %968 = vmatmul.mubr.f32.gmra.mxu0 %v874
      %v969 = vpop.f32.mrf.mxu0
      %v970 = vadd.f32 0.0, %v969
      %v971 = vpop.f32.mrf.mxu0
      %972 = vmatprep.mubr.f32.mxu0 0.0
      %973 = vmatmul.mubr.f32.gmra.mxu0 %v875
      %v974 = vpop.f32.mrf.mxu0
      %v975 = vadd.f32 0.0, %v974
      %v976 = vpop.f32.mrf.mxu0
      %977 = vmatprep.mubr.f32.mxu0 0.0
      %978 = vmatmul.mubr.f32.gmra.mxu0 %v876
      %v979 = vpop.f32.mrf.mxu0
      %v980 = vadd.f32 0.0, %v979
      %v981 = vpop.f32.mrf.mxu0
      %982 = vmatprep.mubr.f32.mxu0 0.0
      %983 = vmatmul.mubr.f32.gmra.mxu0 %v877
      %v984 = vpop.f32.mrf.mxu0
      %v985 = vadd.f32 0.0, %v984
      %v986 = vpop.f32.mrf.mxu0
      %987 = vmatprep.mubr.f32.mxu0 0.0
      %988 = vmatmul.mubr.f32.gmra.mxu0 %v878
      %v989 = vpop.f32.mrf.mxu0
      %v990 = vadd.f32 0.0, %v989
      %v991 = vpop.f32.mrf.mxu0
      %992 = vmatprep.mubr.f32.mxu0 0.0
      %993 = vmatmul.mubr.f32.gmra.mxu0 %v879
      %v994 = vpop.f32.mrf.mxu0
      %v995 = vadd.f32 0.0, %v994
      %v996 = vpop.f32.mrf.mxu0
      %997 = vmatprep.mubr.f32.mxu0 0.0
      %998 = vmatmul.mubr.f32.gmra.mxu0 %v880
      %v999 = vpop.f32.mrf.mxu0
      %v1000 = vadd.f32 0.0, %v999
      %v1001 = vpop.f32.mrf.mxu0
      %1002 = vdwg.mxu0
      %v1003 = vadd.f32 %v865, %v965
      %v1004 = vadd.f32 %v866, %v970
      %v1005 = vadd.f32 %v867, %v975
      %v1006 = vadd.f32 %v868, %v980
      %v1007 = vadd.f32 %v869, %v985
      %v1008 = vadd.f32 %v870, %v990
      %v1009 = vadd.f32 %v871, %v995
      %v1010 = vadd.f32 %v872, %v1000
      %s1011 = scalar_lea.vmem %s187, 32
      %v1012 = vld [vmem:[%s1011] sm:$0xff]
      %v1013 = vld [vmem:[%s1011 + $0x10] sm:$0xff]
      %v1014 = vld [vmem:[%s1011 + $0x20] sm:$0xff]
      %v1015 = vld [vmem:[%s1011 + $0x30] sm:$0xff]
      %v1016 = vld [vmem:[%s1011 + $0x40] sm:$0xff]
      %v1017 = vld [vmem:[%s1011 + $0x50] sm:$0xff]
      %v1018 = vld [vmem:[%s1011 + $0x60] sm:$0xff]
      %v1019 = vld [vmem:[%s1011 + $0x70] sm:$0xff]
      %s1020 = scalar_lea.vmem %s1, 768
      %v1021 = vld [vmem:[%s1020] sm:$0xff]
      %v1022 = vld [vmem:[%s1020 + $0x8] sm:$0xff]
      %v1023 = vld [vmem:[%s1020 + $0x10] sm:$0xff]
      %v1024 = vld [vmem:[%s1020 + $0x18] sm:$0xff]
      %v1025 = vld [vmem:[%s1020 + $0x20] sm:$0xff]
      %v1026 = vld [vmem:[%s1020 + $0x28] sm:$0xff]
      %v1027 = vld [vmem:[%s1020 + $0x30] sm:$0xff]
      %v1028 = vld [vmem:[%s1020 + $0x38] sm:$0xff]
      %v1029 = vld [vmem:[%s1020 + $0x40] sm:$0xff]
      %v1030 = vld [vmem:[%s1020 + $0x48] sm:$0xff]
      %v1031 = vld [vmem:[%s1020 + $0x50] sm:$0xff]
      %v1032 = vld [vmem:[%s1020 + $0x58] sm:$0xff]
      %v1033 = vld [vmem:[%s1020 + $0x60] sm:$0xff]
      %v1034 = vld [vmem:[%s1020 + $0x68] sm:$0xff]
      %v1035 = vld [vmem:[%s1020 + $0x70] sm:$0xff]
      %v1036 = vld [vmem:[%s1020 + $0x78] sm:$0xff]
      %1037 = vmatprep.subr.mxu0 0.0
      %1038 = vmatpush1.msra.mxu0 %v1036
      %1039 = vmatprep.subr.mxu0 0.0
      %1040 = vmatpush1.msra.mxu0 %v1035
      %1041 = vmatprep.subr.mxu0 0.0
      %1042 = vmatpush1.msra.mxu0 %v1034
      %1043 = vmatprep.subr.mxu0 0.0
      %1044 = vmatpush1.msra.mxu0 %v1033
      %1045 = vmatprep.subr.mxu0 0.0
      %1046 = vmatpush1.msra.mxu0 %v1032
      %1047 = vmatprep.subr.mxu0 0.0
      %1048 = vmatpush1.msra.mxu0 %v1031
      %1049 = vmatprep.subr.mxu0 0.0
      %1050 = vmatpush1.msra.mxu0 %v1030
      %1051 = vmatprep.subr.mxu0 0.0
      %1052 = vmatpush1.msra.mxu0 %v1029
      %1053 = vmatprep.subr.mxu0 0.0
      %1054 = vmatpush1.msra.mxu0 %v1028
      %1055 = vmatprep.subr.mxu0 0.0
      %1056 = vmatpush1.msra.mxu0 %v1027
      %1057 = vmatprep.subr.mxu0 0.0
      %1058 = vmatpush1.msra.mxu0 %v1026
      %1059 = vmatprep.subr.mxu0 0.0
      %1060 = vmatpush1.msra.mxu0 %v1025
      %1061 = vmatprep.subr.mxu0 0.0
      %1062 = vmatpush1.msra.mxu0 %v1024
      %1063 = vmatprep.subr.mxu0 0.0
      %1064 = vmatpush1.msra.mxu0 %v1023
      %1065 = vmatprep.subr.mxu0 0.0
      %1066 = vmatpush1.msra.mxu0 %v1022
      %1067 = vmatprep.subr.mxu0 0.0
      %1068 = vmatpush1.msra.mxu0 %v1021
      %1069 = vmatprep.subr.mxu0 0.0
      %1070 = vmatpush2.msra.mxu0 0.0
      %1071 = vmatprep.subr.mxu0 0.0
      %1072 = vmatpush2.msra.mxu0 0.0
      %1073 = vmatprep.subr.mxu0 0.0
      %1074 = vmatpush2.msra.mxu0 0.0
      %1075 = vmatprep.subr.mxu0 0.0
      %1076 = vmatpush2.msra.mxu0 0.0
      %1077 = vmatprep.subr.mxu0 0.0
      %1078 = vmatpush2.msra.mxu0 0.0
      %1079 = vmatprep.subr.mxu0 0.0
      %1080 = vmatpush2.msra.mxu0 0.0
      %1081 = vmatprep.subr.mxu0 0.0
      %1082 = vmatpush2.msra.mxu0 0.0
      %1083 = vmatprep.subr.mxu0 0.0
      %1084 = vmatpush2.msra.mxu0 0.0
      %1085 = vmatprep.subr.mxu0 0.0
      %1086 = vmatpush2.msra.mxu0 0.0
      %1087 = vmatprep.subr.mxu0 0.0
      %1088 = vmatpush2.msra.mxu0 0.0
      %1089 = vmatprep.subr.mxu0 0.0
      %1090 = vmatpush2.msra.mxu0 0.0
      %1091 = vmatprep.subr.mxu0 0.0
      %1092 = vmatpush2.msra.mxu0 0.0
      %1093 = vmatprep.subr.mxu0 0.0
      %1094 = vmatpush2.msra.mxu0 0.0
      %1095 = vmatprep.subr.mxu0 0.0
      %1096 = vmatpush2.msra.mxu0 0.0
      %1097 = vmatprep.subr.mxu0 0.0
      %1098 = vmatpush2.msra.mxu0 0.0
      %1099 = vmatprep.subr.mxu0 0.0
      %1100 = vmatpush2.msra.mxu0 0.0
      %1101 = vmatprep.mubr.f32.mxu0 0.0
      %1102 = vmatmul.mubr.f32.gmra.mxu0 %v1012
      %v1103 = vpop.f32.mrf.mxu0
      %v1104 = vadd.f32 0.0, %v1103
      %v1105 = vpop.f32.mrf.mxu0
      %1106 = vmatprep.mubr.f32.mxu0 0.0
      %1107 = vmatmul.mubr.f32.gmra.mxu0 %v1013
      %v1108 = vpop.f32.mrf.mxu0
      %v1109 = vadd.f32 0.0, %v1108
      %v1110 = vpop.f32.mrf.mxu0
      %1111 = vmatprep.mubr.f32.mxu0 0.0
      %1112 = vmatmul.mubr.f32.gmra.mxu0 %v1014
      %v1113 = vpop.f32.mrf.mxu0
      %v1114 = vadd.f32 0.0, %v1113
      %v1115 = vpop.f32.mrf.mxu0
      %1116 = vmatprep.mubr.f32.mxu0 0.0
      %1117 = vmatmul.mubr.f32.gmra.mxu0 %v1015
      %v1118 = vpop.f32.mrf.mxu0
      %v1119 = vadd.f32 0.0, %v1118
      %v1120 = vpop.f32.mrf.mxu0
      %1121 = vmatprep.mubr.f32.mxu0 0.0
      %1122 = vmatmul.mubr.f32.gmra.mxu0 %v1016
      %v1123 = vpop.f32.mrf.mxu0
      %v1124 = vadd.f32 0.0, %v1123
      %v1125 = vpop.f32.mrf.mxu0
      %1126 = vmatprep.mubr.f32.mxu0 0.0
      %1127 = vmatmul.mubr.f32.gmra.mxu0 %v1017
      %v1128 = vpop.f32.mrf.mxu0
      %v1129 = vadd.f32 0.0, %v1128
      %v1130 = vpop.f32.mrf.mxu0
      %1131 = vmatprep.mubr.f32.mxu0 0.0
      %1132 = vmatmul.mubr.f32.gmra.mxu0 %v1018
      %v1133 = vpop.f32.mrf.mxu0
      %v1134 = vadd.f32 0.0, %v1133
      %v1135 = vpop.f32.mrf.mxu0
      %1136 = vmatprep.mubr.f32.mxu0 0.0
      %1137 = vmatmul.mubr.f32.gmra.mxu0 %v1019
      %v1138 = vpop.f32.mrf.mxu0
      %v1139 = vadd.f32 0.0, %v1138
      %v1140 = vpop.f32.mrf.mxu0
      %1141 = vdwg.mxu0
      %v1142 = vadd.f32 %v1003, %v1104
      %v1143 = vadd.f32 %v1004, %v1109
      %v1144 = vadd.f32 %v1005, %v1114
      %v1145 = vadd.f32 %v1006, %v1119
      %v1146 = vadd.f32 %v1007, %v1124
      %v1147 = vadd.f32 %v1008, %v1129
      %v1148 = vadd.f32 %v1009, %v1134
      %v1149 = vadd.f32 %v1010, %v1139
      %v1150 = vld [vmem:[%s1011 + $0x1] sm:$0xff]
      %v1151 = vld [vmem:[%s1011 + $0x11] sm:$0xff]
      %v1152 = vld [vmem:[%s1011 + $0x21] sm:$0xff]
      %v1153 = vld [vmem:[%s1011 + $0x31] sm:$0xff]
      %v1154 = vld [vmem:[%s1011 + $0x41] sm:$0xff]
      %v1155 = vld [vmem:[%s1011 + $0x51] sm:$0xff]
      %v1156 = vld [vmem:[%s1011 + $0x61] sm:$0xff]
      %v1157 = vld [vmem:[%s1011 + $0x71] sm:$0xff]
      %s1158 = scalar_lea.vmem %s1, 896
      %v1159 = vld [vmem:[%s1158] sm:$0xff]
      %v1160 = vld [vmem:[%s1158 + $0x8] sm:$0xff]
      %v1161 = vld [vmem:[%s1158 + $0x10] sm:$0xff]
      %v1162 = vld [vmem:[%s1158 + $0x18] sm:$0xff]
      %v1163 = vld [vmem:[%s1158 + $0x20] sm:$0xff]
      %v1164 = vld [vmem:[%s1158 + $0x28] sm:$0xff]
      %v1165 = vld [vmem:[%s1158 + $0x30] sm:$0xff]
      %v1166 = vld [vmem:[%s1158 + $0x38] sm:$0xff]
      %v1167 = vld [vmem:[%s1158 + $0x40] sm:$0xff]
      %v1168 = vld [vmem:[%s1158 + $0x48] sm:$0xff]
      %v1169 = vld [vmem:[%s1158 + $0x50] sm:$0xff]
      %v1170 = vld [vmem:[%s1158 + $0x58] sm:$0xff]
      %v1171 = vld [vmem:[%s1158 + $0x60] sm:$0xff]
      %v1172 = vld [vmem:[%s1158 + $0x68] sm:$0xff]
      %v1173 = vld [vmem:[%s1158 + $0x70] sm:$0xff]
      %v1174 = vld [vmem:[%s1158 + $0x78] sm:$0xff]
      %1175 = vmatprep.subr.mxu0 0.0
      %1176 = vmatpush1.msra.mxu0 %v1174
      %1177 = vmatprep.subr.mxu0 0.0
      %1178 = vmatpush1.msra.mxu0 %v1173
      %1179 = vmatprep.subr.mxu0 0.0
      %1180 = vmatpush1.msra.mxu0 %v1172
      %1181 = vmatprep.subr.mxu0 0.0
      %1182 = vmatpush1.msra.mxu0 %v1171
      %1183 = vmatprep.subr.mxu0 0.0
      %1184 = vmatpush1.msra.mxu0 %v1170
      %1185 = vmatprep.subr.mxu0 0.0
      %1186 = vmatpush1.msra.mxu0 %v1169
      %1187 = vmatprep.subr.mxu0 0.0
      %1188 = vmatpush1.msra.mxu0 %v1168
      %1189 = vmatprep.subr.mxu0 0.0
      %1190 = vmatpush1.msra.mxu0 %v1167
      %1191 = vmatprep.subr.mxu0 0.0
      %1192 = vmatpush1.msra.mxu0 %v1166
      %1193 = vmatprep.subr.mxu0 0.0
      %1194 = vmatpush1.msra.mxu0 %v1165
      %1195 = vmatprep.subr.mxu0 0.0
      %1196 = vmatpush1.msra.mxu0 %v1164
      %1197 = vmatprep.subr.mxu0 0.0
      %1198 = vmatpush1.msra.mxu0 %v1163
      %1199 = vmatprep.subr.mxu0 0.0
      %1200 = vmatpush1.msra.mxu0 %v1162
      %1201 = vmatprep.subr.mxu0 0.0
      %1202 = vmatpush1.msra.mxu0 %v1161
      %1203 = vmatprep.subr.mxu0 0.0
      %1204 = vmatpush1.msra.mxu0 %v1160
      %1205 = vmatprep.subr.mxu0 0.0
      %1206 = vmatpush1.msra.mxu0 %v1159
      %1207 = vmatprep.subr.mxu0 0.0
      %1208 = vmatpush2.msra.mxu0 0.0
      %1209 = vmatprep.subr.mxu0 0.0
      %1210 = vmatpush2.msra.mxu0 0.0
      %1211 = vmatprep.subr.mxu0 0.0
      %1212 = vmatpush2.msra.mxu0 0.0
      %1213 = vmatprep.subr.mxu0 0.0
      %1214 = vmatpush2.msra.mxu0 0.0
      %1215 = vmatprep.subr.mxu0 0.0
      %1216 = vmatpush2.msra.mxu0 0.0
      %1217 = vmatprep.subr.mxu0 0.0
      %1218 = vmatpush2.msra.mxu0 0.0
      %1219 = vmatprep.subr.mxu0 0.0
      %1220 = vmatpush2.msra.mxu0 0.0
      %1221 = vmatprep.subr.mxu0 0.0
      %1222 = vmatpush2.msra.mxu0 0.0
      %1223 = vmatprep.subr.mxu0 0.0
      %1224 = vmatpush2.msra.mxu0 0.0
      %1225 = vmatprep.subr.mxu0 0.0
      %1226 = vmatpush2.msra.mxu0 0.0
      %1227 = vmatprep.subr.mxu0 0.0
      %1228 = vmatpush2.msra.mxu0 0.0
      %1229 = vmatprep.subr.mxu0 0.0
      %1230 = vmatpush2.msra.mxu0 0.0
      %1231 = vmatprep.subr.mxu0 0.0
      %1232 = vmatpush2.msra.mxu0 0.0
      %1233 = vmatprep.subr.mxu0 0.0
      %1234 = vmatpush2.msra.mxu0 0.0
      %1235 = vmatprep.subr.mxu0 0.0
      %1236 = vmatpush2.msra.mxu0 0.0
      %1237 = vmatprep.subr.mxu0 0.0
      %1238 = vmatpush2.msra.mxu0 0.0
      %1239 = vmatprep.mubr.f32.mxu0 0.0
      %1240 = vmatmul.mubr.f32.gmra.mxu0 %v1150
      %v1241 = vpop.f32.mrf.mxu0
      %v1242 = vadd.f32 0.0, %v1241
      %v1243 = vpop.f32.mrf.mxu0
      %1244 = vmatprep.mubr.f32.mxu0 0.0
      %1245 = vmatmul.mubr.f32.gmra.mxu0 %v1151
      %v1246 = vpop.f32.mrf.mxu0
      %v1247 = vadd.f32 0.0, %v1246
      %v1248 = vpop.f32.mrf.mxu0
      %1249 = vmatprep.mubr.f32.mxu0 0.0
      %1250 = vmatmul.mubr.f32.gmra.mxu0 %v1152
      %v1251 = vpop.f32.mrf.mxu0
      %v1252 = vadd.f32 0.0, %v1251
      %v1253 = vpop.f32.mrf.mxu0
      %1254 = vmatprep.mubr.f32.mxu0 0.0
      %1255 = vmatmul.mubr.f32.gmra.mxu0 %v1153
      %v1256 = vpop.f32.mrf.mxu0
      %v1257 = vadd.f32 0.0, %v1256
      %v1258 = vpop.f32.mrf.mxu0
      %1259 = vmatprep.mubr.f32.mxu0 0.0
      %1260 = vmatmul.mubr.f32.gmra.mxu0 %v1154
      %v1261 = vpop.f32.mrf.mxu0
      %v1262 = vadd.f32 0.0, %v1261
      %v1263 = vpop.f32.mrf.mxu0
      %1264 = vmatprep.mubr.f32.mxu0 0.0
      %1265 = vmatmul.mubr.f32.gmra.mxu0 %v1155
      %v1266 = vpop.f32.mrf.mxu0
      %v1267 = vadd.f32 0.0, %v1266
      %v1268 = vpop.f32.mrf.mxu0
      %1269 = vmatprep.mubr.f32.mxu0 0.0
      %1270 = vmatmul.mubr.f32.gmra.mxu0 %v1156
      %v1271 = vpop.f32.mrf.mxu0
      %v1272 = vadd.f32 0.0, %v1271
      %v1273 = vpop.f32.mrf.mxu0
      %1274 = vmatprep.mubr.f32.mxu0 0.0
      %1275 = vmatmul.mubr.f32.gmra.mxu0 %v1157
      %v1276 = vpop.f32.mrf.mxu0
      %v1277 = vadd.f32 0.0, %v1276
      %v1278 = vpop.f32.mrf.mxu0
      %1279 = vdwg.mxu0
      %v1280 = vadd.f32 %v1142, %v1242
      %v1281 = vadd.f32 %v1143, %v1247
      %v1282 = vadd.f32 %v1144, %v1252
      %v1283 = vadd.f32 %v1145, %v1257
      %v1284 = vadd.f32 %v1146, %v1262
      %v1285 = vadd.f32 %v1147, %v1267
      %v1286 = vadd.f32 %v1148, %v1272
      %v1287 = vadd.f32 %v1149, %v1277
      %v1288 = vld [vmem:[%s1011 + $0x2] sm:$0xff]
      %v1289 = vld [vmem:[%s1011 + $0x12] sm:$0xff]
      %v1290 = vld [vmem:[%s1011 + $0x22] sm:$0xff]
      %v1291 = vld [vmem:[%s1011 + $0x32] sm:$0xff]
      %v1292 = vld [vmem:[%s1011 + $0x42] sm:$0xff]
      %v1293 = vld [vmem:[%s1011 + $0x52] sm:$0xff]
      %v1294 = vld [vmem:[%s1011 + $0x62] sm:$0xff]
      %v1295 = vld [vmem:[%s1011 + $0x72] sm:$0xff]
      %s1296 = scalar_lea.vmem %s1, 1024
      %v1297 = vld [vmem:[%s1296] sm:$0xff]
      %v1298 = vld [vmem:[%s1296 + $0x8] sm:$0xff]
      %v1299 = vld [vmem:[%s1296 + $0x10] sm:$0xff]
      %v1300 = vld [vmem:[%s1296 + $0x18] sm:$0xff]
      %v1301 = vld [vmem:[%s1296 + $0x20] sm:$0xff]
      %v1302 = vld [vmem:[%s1296 + $0x28] sm:$0xff]
      %v1303 = vld [vmem:[%s1296 + $0x30] sm:$0xff]
      %v1304 = vld [vmem:[%s1296 + $0x38] sm:$0xff]
      %v1305 = vld [vmem:[%s1296 + $0x40] sm:$0xff]
      %v1306 = vld [vmem:[%s1296 + $0x48] sm:$0xff]
      %v1307 = vld [vmem:[%s1296 + $0x50] sm:$0xff]
      %v1308 = vld [vmem:[%s1296 + $0x58] sm:$0xff]
      %v1309 = vld [vmem:[%s1296 + $0x60] sm:$0xff]
      %v1310 = vld [vmem:[%s1296 + $0x68] sm:$0xff]
      %v1311 = vld [vmem:[%s1296 + $0x70] sm:$0xff]
      %v1312 = vld [vmem:[%s1296 + $0x78] sm:$0xff]
      %1313 = vmatprep.subr.mxu0 0.0
      %1314 = vmatpush1.msra.mxu0 %v1312
      %1315 = vmatprep.subr.mxu0 0.0
      %1316 = vmatpush1.msra.mxu0 %v1311
      %1317 = vmatprep.subr.mxu0 0.0
      %1318 = vmatpush1.msra.mxu0 %v1310
      %1319 = vmatprep.subr.mxu0 0.0
      %1320 = vmatpush1.msra.mxu0 %v1309
      %1321 = vmatprep.subr.mxu0 0.0
      %1322 = vmatpush1.msra.mxu0 %v1308
      %1323 = vmatprep.subr.mxu0 0.0
      %1324 = vmatpush1.msra.mxu0 %v1307
      %1325 = vmatprep.subr.mxu0 0.0
      %1326 = vmatpush1.msra.mxu0 %v1306
      %1327 = vmatprep.subr.mxu0 0.0
      %1328 = vmatpush1.msra.mxu0 %v1305
      %1329 = vmatprep.subr.mxu0 0.0
      %1330 = vmatpush1.msra.mxu0 %v1304
      %1331 = vmatprep.subr.mxu0 0.0
      %1332 = vmatpush1.msra.mxu0 %v1303
      %1333 = vmatprep.subr.mxu0 0.0
      %1334 = vmatpush1.msra.mxu0 %v1302
      %1335 = vmatprep.subr.mxu0 0.0
      %1336 = vmatpush1.msra.mxu0 %v1301
      %1337 = vmatprep.subr.mxu0 0.0
      %1338 = vmatpush1.msra.mxu0 %v1300
      %1339 = vmatprep.subr.mxu0 0.0
      %1340 = vmatpush1.msra.mxu0 %v1299
      %1341 = vmatprep.subr.mxu0 0.0
      %1342 = vmatpush1.msra.mxu0 %v1298
      %1343 = vmatprep.subr.mxu0 0.0
      %1344 = vmatpush1.msra.mxu0 %v1297
      %1345 = vmatprep.subr.mxu0 0.0
      %1346 = vmatpush2.msra.mxu0 0.0
      %1347 = vmatprep.subr.mxu0 0.0
      %1348 = vmatpush2.msra.mxu0 0.0
      %1349 = vmatprep.subr.mxu0 0.0
      %1350 = vmatpush2.msra.mxu0 0.0
      %1351 = vmatprep.subr.mxu0 0.0
      %1352 = vmatpush2.msra.mxu0 0.0
      %1353 = vmatprep.subr.mxu0 0.0
      %1354 = vmatpush2.msra.mxu0 0.0
      %1355 = vmatprep.subr.mxu0 0.0
      %1356 = vmatpush2.msra.mxu0 0.0
      %1357 = vmatprep.subr.mxu0 0.0
      %1358 = vmatpush2.msra.mxu0 0.0
      %1359 = vmatprep.subr.mxu0 0.0
      %1360 = vmatpush2.msra.mxu0 0.0
      %1361 = vmatprep.subr.mxu0 0.0
      %1362 = vmatpush2.msra.mxu0 0.0
      %1363 = vmatprep.subr.mxu0 0.0
      %1364 = vmatpush2.msra.mxu0 0.0
      %1365 = vmatprep.subr.mxu0 0.0
      %1366 = vmatpush2.msra.mxu0 0.0
      %1367 = vmatprep.subr.mxu0 0.0
      %1368 = vmatpush2.msra.mxu0 0.0
      %1369 = vmatprep.subr.mxu0 0.0
      %1370 = vmatpush2.msra.mxu0 0.0
      %1371 = vmatprep.subr.mxu0 0.0
      %1372 = vmatpush2.msra.mxu0 0.0
      %1373 = vmatprep.subr.mxu0 0.0
      %1374 = vmatpush2.msra.mxu0 0.0
      %1375 = vmatprep.subr.mxu0 0.0
      %1376 = vmatpush2.msra.mxu0 0.0
      %1377 = vmatprep.mubr.f32.mxu0 0.0
      %1378 = vmatmul.mubr.f32.gmra.mxu0 %v1288
      %v1379 = vpop.f32.mrf.mxu0
      %v1380 = vadd.f32 0.0, %v1379
      %v1381 = vpop.f32.mrf.mxu0
      %1382 = vmatprep.mubr.f32.mxu0 0.0
      %1383 = vmatmul.mubr.f32.gmra.mxu0 %v1289
      %v1384 = vpop.f32.mrf.mxu0
      %v1385 = vadd.f32 0.0, %v1384
      %v1386 = vpop.f32.mrf.mxu0
      %1387 = vmatprep.mubr.f32.mxu0 0.0
      %1388 = vmatmul.mubr.f32.gmra.mxu0 %v1290
      %v1389 = vpop.f32.mrf.mxu0
      %v1390 = vadd.f32 0.0, %v1389
      %v1391 = vpop.f32.mrf.mxu0
      %1392 = vmatprep.mubr.f32.mxu0 0.0
      %1393 = vmatmul.mubr.f32.gmra.mxu0 %v1291
      %v1394 = vpop.f32.mrf.mxu0
      %v1395 = vadd.f32 0.0, %v1394
      %v1396 = vpop.f32.mrf.mxu0
      %1397 = vmatprep.mubr.f32.mxu0 0.0
      %1398 = vmatmul.mubr.f32.gmra.mxu0 %v1292
      %v1399 = vpop.f32.mrf.mxu0
      %v1400 = vadd.f32 0.0, %v1399
      %v1401 = vpop.f32.mrf.mxu0
      %1402 = vmatprep.mubr.f32.mxu0 0.0
      %1403 = vmatmul.mubr.f32.gmra.mxu0 %v1293
      %v1404 = vpop.f32.mrf.mxu0
      %v1405 = vadd.f32 0.0, %v1404
      %v1406 = vpop.f32.mrf.mxu0
      %1407 = vmatprep.mubr.f32.mxu0 0.0
      %1408 = vmatmul.mubr.f32.gmra.mxu0 %v1294
      %v1409 = vpop.f32.mrf.mxu0
      %v1410 = vadd.f32 0.0, %v1409
      %v1411 = vpop.f32.mrf.mxu0
      %1412 = vmatprep.mubr.f32.mxu0 0.0
      %1413 = vmatmul.mubr.f32.gmra.mxu0 %v1295
      %v1414 = vpop.f32.mrf.mxu0
      %v1415 = vadd.f32 0.0, %v1414
      %v1416 = vpop.f32.mrf.mxu0
      %1417 = vdwg.mxu0
      %v1418 = vadd.f32 %v1280, %v1380
      %v1419 = vadd.f32 %v1281, %v1385
      %v1420 = vadd.f32 %v1282, %v1390
      %v1421 = vadd.f32 %v1283, %v1395
      %v1422 = vadd.f32 %v1284, %v1400
      %v1423 = vadd.f32 %v1285, %v1405
      %v1424 = vadd.f32 %v1286, %v1410
      %v1425 = vadd.f32 %v1287, %v1415
      %1426 = vst [vmem:[%s192] sm:$0xff] %v1418
      %1427 = vst [vmem:[%s192 + $0x8] sm:$0xff] %v1419
      %1428 = vst [vmem:[%s192 + $0x10] sm:$0xff] %v1420
      %1429 = vst [vmem:[%s192 + $0x18] sm:$0xff] %v1421
      %1430 = vst [vmem:[%s192 + $0x20] sm:$0xff] %v1422
      %1431 = vst [vmem:[%s192 + $0x28] sm:$0xff] %v1423
      %1432 = vst [vmem:[%s192 + $0x30] sm:$0xff] %v1424
      %1433 = vst [vmem:[%s192 + $0x38] sm:$0xff] %v1425
      %v1434 = vld [vmem:[%s3] sm:$0x1]
      %v1435 = vadd.f32 %v1418, %v1419
      %v1436 = vadd.f32 %v1435, %v1420
      %v1437 = vadd.f32 %v1436, %v1421
      %v1438 = vadd.f32 %v1437, %v1422
      %v1439 = vadd.f32 %v1438, %v1423
      %v1440 = vadd.f32 %v1439, %v1424
      %v1441 = vadd.f32 %v1440, %v1425
      %v1442 = vrot.slane %v1441, 4
      %v1443 = vadd.f32 %v1441, %v1442
      %v1444 = vrot.slane %v1443, 2
      %v1445 = vadd.f32 %v1443, %v1444
      %v1446 = vrot.slane %v1445, 1
      %v1447 = vadd.f32 %v1445, %v1446
      %v1448 = vadd.f32 %v1434, %v1447
      %1449 = vst [vmem:[%s3] sm:$0x1] %v1448
      %v1450 = vld [vmem:[%s4] sm:$0x1]
      %v1451 = vmul.f32 %v1418, %v1418
      %v1452 = vmul.f32 %v1419, %v1419
      %v1453 = vmul.f32 %v1420, %v1420
      %v1454 = vmul.f32 %v1421, %v1421
      %v1455 = vmul.f32 %v1422, %v1422
      %v1456 = vmul.f32 %v1423, %v1423
      %v1457 = vmul.f32 %v1424, %v1424
      %v1458 = vmul.f32 %v1425, %v1425
      %v1459 = vadd.f32 %v1451, %v1452
      %v1460 = vadd.f32 %v1459, %v1453
      %v1461 = vadd.f32 %v1460, %v1454
      %v1462 = vadd.f32 %v1461, %v1455
      %v1463 = vadd.f32 %v1462, %v1456
      %v1464 = vadd.f32 %v1463, %v1457
      %v1465 = vadd.f32 %v1464, %v1458
      %v1466 = vrot.slane %v1465, 4
      %v1467 = vadd.f32 %v1465, %v1466
      %v1468 = vrot.slane %v1467, 2
      %v1469 = vadd.f32 %v1467, %v1468
      %v1470 = vrot.slane %v1469, 1
      %v1471 = vadd.f32 %v1469, %v1470
      %v1472 = vadd.f32 %v1450, %v1471
      %1473 = vst [vmem:[%s4] sm:$0x1] %v1472
      %p1474 = scmp.lt.s32.totalorder %s16, 1
      %s1475 = scalar_select %p1474, %s16, 1
      %s1476 = smul.addr %s1475, 8
      %s1477 = smul.addr %s1476, 8
      %s1478 = scalar_lea.vmem %s2, %s1477
      // Predicated region
      $region33: #{residual_block_forward.7} parent=27 // pred_check
        %p1479 = pneg %p81
      $region34: #{residual_block_forward.7} parent=27 // pred_check_branch
        %1481 = sbr.rel (%p1479) target = $region36
      $region35: #{residual_block_forward.7} parent=27 // pred_region
        _
      $region36: #{residual_block_forward.7} parent=27 // pred_fallthru
        _
      // Predicated region
      $region37: #{residual_block_forward.7} parent=27 // pred_check
        %p1482 = pneg %p102
      $region38: #{residual_block_forward.7} parent=27 // pred_check_branch
        %1484 = sbr.rel (%p1482) target = $region40
      $region39: #{residual_block_forward.7} parent=27 // pred_region
        _
      $region40: #{residual_block_forward.7} parent=27 // pred_fallthru
        _
      // Predicated region
      $region41: #{residual_block_forward.7} parent=27 // pred_check
        %p1485 = pneg %p123
      $region42: #{residual_block_forward.7} parent=27 // pred_check_branch
        %1487 = sbr.rel (%p1485) target = $region44
      $region43: #{residual_block_forward.7} parent=27 // pred_region
        _
      $region44: #{residual_block_forward.7} parent=27 // pred_fallthru
        _
      // Predicated region
      $region45: #{residual_block_forward.7} parent=27 // pred_check
        %p1488 = pneg %p102
      $region46: #{residual_block_forward.7} parent=27 // pred_check_branch
        %1490 = sbr.rel (%p1488) target = $region48
      $region47: #{residual_block_forward.7} parent=27 // pred_region
        _
      $region48: #{residual_block_forward.7} parent=27 // pred_fallthru
        _
      // Predicated region
      $region49: #{residual_block_forward.7} parent=27 // pred_check
        %p1491 = pneg %p123
      $region50: #{residual_block_forward.7} parent=27 // pred_check_branch
        %1493 = sbr.rel (%p1491) target = $region52
      $region51: #{residual_block_forward.7} parent=27 // pred_region
        _
      $region52: #{residual_block_forward.7} parent=27 // pred_fallthru
        _
    $region28: #{residual_block_forward.7} parent=5 // pred_fallthru
      _
    %p1494 = scmp.le.s32.totalorder 2, %s11
    // Predicated region
    $region53: #{residual_block_forward.7} parent=5 // pred_check
      %p1495 = pneg %p1494
    $region54: #{residual_block_forward.7} parent=5 // pred_check_branch
      %1497 = sbr.rel (%p1495) target = $region56
    $region55: #{residual_block_forward.7} parent=5 // pred_region
      %s1498 = ssub.s32 %s11, 2
      // Predicated region
      $region57: #{residual_block_forward.7} parent=55 // pred_check
        %p1499 = pneg %p87
      $region58: #{residual_block_forward.7} parent=55 // pred_check_branch
        %1501 = sbr.rel (%p1499) target = $region60
      $region59: #{residual_block_forward.7} parent=55 // pred_region
        %p1502 = scmp.lt.s32.totalorder %s17, 1
        %s1503 = scalar_select %p1502, %s17, 1
        %s1504 = smul.addr %s1503, 8
        %s1505 = smul.addr %s1504, 8
        %s1506 = scalar_lea.vmem %s2, %s1505
      $region60: #{residual_block_forward.7} parent=55 // pred_fallthru
        _
    $region56: #{residual_block_forward.7} parent=5 // pred_fallthru
      _
  $region6: #{residual_block_forward.7} parent=0 // loop_footer
    %s15 = sadd.s32 1, %s11
  $region7: #{residual_block_forward.7} parent=0 // loop_footer_branch
    %10 = sbr.rel target = $region3
  $region8: #{residual_block_forward.7} parent=0 // loop_exit
    _

</llo_original>
